<compile_context>
chip_gen: v5e
topology: v5e:2x2
jax: 0.10.0
libtpu: 0.0.40
codegen_flags: <defaults>
</compile_context>

<pallas_src>
import jax
import jax.numpy as jnp
from jax.experimental import pallas as pl
from jax.experimental.pallas import tpu as pltpu


def _round_up(x, m):
    return ((x + m - 1) // m) * m


def _make_fused_mlp_kernel(layer_meta, compute_dtype):
    """layer_meta: tuple of (apply_relu, is_reduce_head) per layer."""

    def kernel(x_ref, *refs):
        o_ref = refs[-1]
        wb_refs = refs[:-1]
        # Running activation `h` lives in f32 (bias/ReLU epilogue in f32,
        # matches the reference and keeps v5e's f32-only VPU happy).  Layer 0
        # reads x_ref directly and casts ONCE to the MXU dtype (no f32 round
        # trip on the whole tile).
        h = None
        for li, (apply_relu, is_reduce) in enumerate(layer_meta):
            w_ref = wb_refs[2 * li]
            b_ref = wb_refs[2 * li + 1]
            if is_reduce:
                # Narrow regression head (out_dim == 1): VPU multiply + lane
                # reduction instead of a 1-lane, K-tiny MXU matmul.
                # w_ref holds the head weight pre-transposed to (1, in).
                src = x_ref[...].astype(jnp.float32) if h is None else h
                y = jnp.sum(src * w_ref[...].astype(jnp.float32),
                            axis=-1, keepdims=True)
            else:
                lhs = (x_ref[...].astype(compute_dtype) if h is None
                       else h.astype(compute_dtype))
                y = jnp.dot(lhs, w_ref[...].astype(compute_dtype),
                            preferred_element_type=jnp.float32)
            y = y + b_ref[...].astype(jnp.float32)
            if apply_relu:
                y = jnp.maximum(y, 0.0)
            h = y
        # Lane-dense store: fold several node rows into one >=128-lane output
        # row so the writeback uses full-width unmasked vst instead of
        # (tile, 1)/(tile, 16) masked partial stores.
        o_ref[...] = h.reshape(o_ref.shape).astype(o_ref.dtype)

    return kernel


def _pick_tile(n, tile_n, align):
    """Pick the node-tile size.

    Large tiles amortize the ~0.35 us per-step overhead.  For medium N we aim
    for ~4 grid steps (keeps both v7x TensorCores busy and leaves the x-stream
    a next block to prefetch); for small N this naturally collapses to a
    single step (best on single-TC v5e/v6e).  `align` guarantees bf16 sublane
    packing (16) and that tile//fold stays a multiple of 8 for the folded
    lane-dense output block.
    """
    tile_n = _round_up(tile_n, align)
    if n >= 4 * tile_n:
        return tile_n
    return min(tile_n, _round_up(max(1, -(-n // 4)), align))


def fused_mlp_forward(x, layers, *, compute_dtype=jnp.bfloat16, tile_n=4096,
                      out_dtype=jnp.float32):
    """Runs the full Linear(+ReLU) stack in one pallas_call.

    x: [N, IN] float32.  layers: list of (w [in, out] f32, b [out] f32, relu).
    """
    n, in_dim = x.shape
    out_dim = layers[-1][0].shape[1]
    n_layers = len(layers)

    # Per-layer operands / metadata.  Matmul weights are pre-cast (tiny,
    # KB-scale) to compute_dtype; biases and the reduce-head weight stay f32.
    layer_meta = []
    operands = []
    for li, (w, b, relu) in enumerate(layers):
        is_reduce = (li == n_layers - 1) and (w.shape[1] == 1)
        layer_meta.append((relu, is_reduce))
        if is_reduce:
            operands.append(w.reshape(1, w.shape[0]).astype(jnp.float32))
            operands.append(b.reshape(1, 1).astype(jnp.float32))
        else:
            operands.append(w.astype(compute_dtype))
            operands.append(b.reshape(1, b.shape[0]).astype(jnp.float32))

    # Output folding factor: pack `fold` node rows into one output row so the
    # final store is >=128 lanes wide (lane-dense writeback).
    if out_dim < 128 and 128 % out_dim == 0:
        fold = 128 // out_dim
    else:
        fold = 1                      # already lane-dense (or awkward width)
    align = max(16, 8 * fold)         # tile % fold == 0 and (tile//fold) % 8 == 0

    tile = _pick_tile(n, tile_n, align)
    steps = -(-n // tile)             # cdiv; Pallas handles the partial tail block
    n_total = steps * tile
    out_rows = n_total // fold

    in_specs = [pl.BlockSpec((tile, in_dim), lambda i: (i, 0))]
    for op in operands:
        in_specs.append(pl.BlockSpec(op.shape, lambda i: (0, 0)))
    out_specs = pl.BlockSpec((tile // fold, fold * out_dim), lambda i: (i, 0))

    # VMEM budget: double-buffered x / y streams + resident params + f32
    # intermediates (+ relayout scratch), 2x headroom, capped at 48 MiB so
    # v7x's 64 MiB VMEM keeps compiler headroom (v5e/v6e have 128 MiB).
    param_bytes = sum(int(op.size) * op.dtype.itemsize for op in operands)
    max_width = max([in_dim] + [w.shape[1] for (w, _, _) in layers])
    est = (2 * tile * in_dim * x.dtype.itemsize
           + 2 * tile * out_dim * jnp.dtype(out_dtype).itemsize
           + 2 * param_bytes
           + 6 * tile * max_width * 4)
    vmem_limit = int(min(48 * 1024 * 1024, max(32 * 1024 * 1024, 2 * est)))

    kernel = _make_fused_mlp_kernel(tuple(layer_meta), compute_dtype)
    y = pl.pallas_call(
        kernel,
        out_shape=jax.ShapeDtypeStruct((out_rows, fold * out_dim), out_dtype),
        grid_spec=pl.GridSpec(
            grid=(steps,),
            in_specs=in_specs,
            out_specs=out_specs,
        ),
        compiler_params=pltpu.CompilerParams(
            dimension_semantics=("parallel",),
            vmem_limit_bytes=vmem_limit,
        ),
    )(x, *operands)

    # Unfold the lane-dense slab back to (N, out_dim); padded tail rows
    # (computed from unspecified partial-block data) are sliced off here.
    y = y.reshape(n_total, out_dim)
    return y[:n] if n_total != n else y


class SimpleGrantGCNPallas:
    """JAX/Pallas re-implementation of SimpleGrantGCN's forward pass."""

    def __init__(self, n_layers, mlp_dims, last_linear_dims, task_type, key):
        assert task_type in ("node_regression", "node_classification")
        in_dim, out_dim = last_linear_dims
        # (weight [in, out], bias [out], apply_relu) per layer; ReLU is fused
        # into the preceding Linear, matching Linear->ReLU in the ModuleList.
        layer_dims = [(mlp_dims[i][0], mlp_dims[i][1], True)
                      for i in range(n_layers)]
        layer_dims.append((in_dim, out_dim, False))
        if task_type == "node_regression":
            layer_dims.append((out_dim, 1, False))

        self.layers = []
        for (din, dout, relu) in layer_dims:
            key, kw, kb = jax.random.split(key, 3)
            # Deterministic init mimicking nn.Linear uniform(-1/sqrt(in), 1/sqrt(in))
            bound = 1.0 / float(din) ** 0.5
            w = jax.random.uniform(kw, (din, dout), jnp.float32, -bound, bound)
            b = jax.random.uniform(kb, (dout,), jnp.float32, -bound, bound)
            self.layers.append((w, b, relu))

    def __call__(self, x, *, compute_dtype=jnp.bfloat16, tile_n=4096):
        return fused_mlp_forward(x, self.layers,
                                 compute_dtype=compute_dtype, tile_n=tile_n)

    def reference(self, x, *, compute_dtype=jnp.bfloat16):
        # Plain-JAX reference mirroring the kernel's numerics policy
        # (compute_dtype MXU inputs, f32 accumulate/epilogue, f32 reduce head).
        h = x.astype(jnp.float32)
        n_layers = len(self.layers)
        for li, (w, b, relu) in enumerate(self.layers):
            is_reduce = (li == n_layers - 1) and (w.shape[1] == 1)
            if is_reduce:
                h = jnp.sum(h * w.reshape(1, -1), axis=-1, keepdims=True) \
                    + b.reshape(1, 1)
            else:
                h = jnp.dot(h.astype(compute_dtype), w.astype(compute_dtype),
                            preferred_element_type=jnp.float32) + b
            if relu:
                h = jnp.maximum(h, 0.0)
        return h

    # TODO(synk): mse_loss / mae are training-loss helpers outside forward();
    # they are trivially jnp.mean((a-b)**2) / jnp.mean(|a-b|) and not kernelized.


if __name__ == "__main__":
    key = jax.random.PRNGKey(0)
    key, k_reg, k_cls, k_x = jax.random.split(key, 4)

    # Small configuration consistent with the module's constructor.
    n_layers = 2
    mlp_dims = [(32, 64), (64, 32)]
    last_linear_dims = (32, 16)

    reg = SimpleGrantGCNPallas(n_layers, mlp_dims, last_linear_dims,
                               "node_regression", k_reg)      # final Linear(16, 1)
    cls = SimpleGrantGCNPallas(n_layers, mlp_dims, last_linear_dims,
                               "node_classification", k_cls)  # final Linear(32, 16)

    n_nodes = 1000  # not a multiple of the tile -> exercises the ragged-tail path
    x = jax.random.normal(k_x, (n_nodes, mlp_dims[0][0]), jnp.float32)

    # Regression head, bf16-on-MXU / f32-accumulate path (v6e/v7x fast path).
    y = jax.block_until_ready(reg(x, compute_dtype=jnp.bfloat16))
    y_ref = jax.block_until_ready(reg.reference(x, compute_dtype=jnp.bfloat16))
    assert y.shape == (n_nodes, 1)
    assert jnp.allclose(y, y_ref, atol=1e-2, rtol=1e-2)

    # Regression head, full-f32 path (exact semantics of the PyTorch module).
    y32 = jax.block_until_ready(reg(x, compute_dtype=jnp.float32))
    y32_ref = jax.block_until_ready(reg.reference(x, compute_dtype=jnp.float32))
    assert y32.shape == (n_nodes, 1)
    assert jnp.allclose(y32, y32_ref, atol=2e-3, rtol=2e-3)

    # Classification head (out_dim = 16), bf16 path; exercises the 8-row fold.
    yc = jax.block_until_ready(cls(x, compute_dtype=jnp.bfloat16))
    yc_ref = jax.block_until_ready(cls.reference(x, compute_dtype=jnp.bfloat16))
    assert yc.shape == (n_nodes, last_linear_dims[1])
    assert jnp.allclose(yc, yc_ref, atol=1e-2, rtol=1e-2)

    print("KERNEL_OK")
</pallas_src>

<mosaic_0001>
module attributes {stable_mosaic.version = 11 : i64} {
  func.func @kernel(%arg0: i32, %arg1: memref<1024x32xf32, #tpu.memory_space<vmem>>, %arg2: memref<32x64xbf16, #tpu.memory_space<vmem>>, %arg3: memref<1x64xf32, #tpu.memory_space<vmem>>, %arg4: memref<64x32xbf16, #tpu.memory_space<vmem>>, %arg5: memref<1x32xf32, #tpu.memory_space<vmem>>, %arg6: memref<32x16xbf16, #tpu.memory_space<vmem>>, %arg7: memref<1x16xf32, #tpu.memory_space<vmem>>, %arg8: memref<1x16xf32, #tpu.memory_space<vmem>>, %arg9: memref<1x1xf32, #tpu.memory_space<vmem>>, %arg10: memref<8x128xf32, #tpu.memory_space<vmem>>) attributes {dimension_semantics = [#tpu.dimension_semantics<parallel>], iteration_bounds = array<i64: 1>, scalar_prefetch = 0 : i64, scratch_operands = 0 : i64, tpu.core_type = #tpu.core_type<tc>, window_params = [{transform_indices = @transform_0, window_bounds = array<i64: 1024, 32>}, {pipeline_mode = #tpu.pipeline_mode<synchronous>, transform_indices = @transform_1, window_bounds = array<i64: 32, 64>}, {pipeline_mode = #tpu.pipeline_mode<synchronous>, transform_indices = @transform_2, window_bounds = array<i64: 1, 64>}, {pipeline_mode = #tpu.pipeline_mode<synchronous>, transform_indices = @transform_3, window_bounds = array<i64: 64, 32>}, {pipeline_mode = #tpu.pipeline_mode<synchronous>, transform_indices = @transform_4, window_bounds = array<i64: 1, 32>}, {pipeline_mode = #tpu.pipeline_mode<synchronous>, transform_indices = @transform_5, window_bounds = array<i64: 32, 16>}, {pipeline_mode = #tpu.pipeline_mode<synchronous>, transform_indices = @transform_6, window_bounds = array<i64: 1, 16>}, {pipeline_mode = #tpu.pipeline_mode<synchronous>, transform_indices = @transform_7, window_bounds = array<i64: 1, 16>}, {pipeline_mode = #tpu.pipeline_mode<synchronous>, transform_indices = @transform_8, window_bounds = array<i64: 1, 1>}, {transform_indices = @transform_9, window_bounds = array<i64: 8, 128>}]} {
    %c0 = arith.constant 0 : index
    %c0_0 = arith.constant 0 : index
    %0 = vector.load %arg1[%c0, %c0_0] : memref<1024x32xf32, #tpu.memory_space<vmem>>, vector<1024x32xf32>
    %1 = arith.truncf %0 : vector<1024x32xf32> to vector<1024x32xbf16>
    %c0_1 = arith.constant 0 : index
    %c0_2 = arith.constant 0 : index
    %2 = vector.load %arg2[%c0_1, %c0_2] : memref<32x64xbf16, #tpu.memory_space<vmem>>, vector<32x64xbf16>
    %cst = arith.constant dense<0.000000e+00> : vector<1024x64xf32>
    %3 = tpu.matmul %1, %2, %cst {dimension_numbers = #tpu.dot_dimension_numbers<[1], [0], [0], [1], [0, 0, 1, 1], [], []>} : vector<1024x32xbf16>, vector<32x64xbf16>, vector<1024x64xf32> -> vector<1024x64xf32>
    %c0_3 = arith.constant 0 : index
    %c0_4 = arith.constant 0 : index
    %4 = vector.load %arg3[%c0_3, %c0_4] : memref<1x64xf32, #tpu.memory_space<vmem>>, vector<1x64xf32>
    %5 = vector.broadcast %4 : vector<1x64xf32> to vector<1024x64xf32>
    %6 = arith.addf %3, %5 : vector<1024x64xf32>
    %cst_5 = arith.constant 0.000000e+00 : f32
    %7 = vector.broadcast %cst_5 : f32 to vector<1024x64xf32>
    %8 = arith.maximumf %6, %7 : vector<1024x64xf32>
    %9 = arith.truncf %8 : vector<1024x64xf32> to vector<1024x64xbf16>
    %c0_6 = arith.constant 0 : index
    %c0_7 = arith.constant 0 : index
    %10 = vector.load %arg4[%c0_6, %c0_7] : memref<64x32xbf16, #tpu.memory_space<vmem>>, vector<64x32xbf16>
    %cst_8 = arith.constant dense<0.000000e+00> : vector<1024x32xf32>
    %11 = tpu.matmul %9, %10, %cst_8 {dimension_numbers = #tpu.dot_dimension_numbers<[1], [0], [0], [1], [0, 0, 1, 1], [], []>} : vector<1024x64xbf16>, vector<64x32xbf16>, vector<1024x32xf32> -> vector<1024x32xf32>
    %c0_9 = arith.constant 0 : index
    %c0_10 = arith.constant 0 : index
    %12 = vector.load %arg5[%c0_9, %c0_10] : memref<1x32xf32, #tpu.memory_space<vmem>>, vector<1x32xf32>
    %13 = vector.broadcast %12 : vector<1x32xf32> to vector<1024x32xf32>
    %14 = arith.addf %11, %13 : vector<1024x32xf32>
    %cst_11 = arith.constant 0.000000e+00 : f32
    %15 = vector.broadcast %cst_11 : f32 to vector<1024x32xf32>
    %16 = arith.maximumf %14, %15 : vector<1024x32xf32>
    %17 = arith.truncf %16 : vector<1024x32xf32> to vector<1024x32xbf16>
    %c0_12 = arith.constant 0 : index
    %c0_13 = arith.constant 0 : index
    %18 = vector.load %arg6[%c0_12, %c0_13] : memref<32x16xbf16, #tpu.memory_space<vmem>>, vector<32x16xbf16>
    %cst_14 = arith.constant dense<0.000000e+00> : vector<1024x16xf32>
    %19 = tpu.matmul %17, %18, %cst_14 {dimension_numbers = #tpu.dot_dimension_numbers<[1], [0], [0], [1], [0, 0, 1, 1], [], []>} : vector<1024x32xbf16>, vector<32x16xbf16>, vector<1024x16xf32> -> vector<1024x16xf32>
    %c0_15 = arith.constant 0 : index
    %c0_16 = arith.constant 0 : index
    %20 = vector.load %arg7[%c0_15, %c0_16] : memref<1x16xf32, #tpu.memory_space<vmem>>, vector<1x16xf32>
    %21 = vector.broadcast %20 : vector<1x16xf32> to vector<1024x16xf32>
    %22 = arith.addf %19, %21 : vector<1024x16xf32>
    %c0_17 = arith.constant 0 : index
    %c0_18 = arith.constant 0 : index
    %23 = vector.load %arg8[%c0_17, %c0_18] : memref<1x16xf32, #tpu.memory_space<vmem>>, vector<1x16xf32>
    %24 = vector.broadcast %23 : vector<1x16xf32> to vector<1024x16xf32>
    %25 = arith.mulf %22, %24 : vector<1024x16xf32>
    %cst_19 = arith.constant dense<0.000000e+00> : vector<1024xf32>
    %26 = vector.multi_reduction <add>, %25, %cst_19 [1] : vector<1024x16xf32> to vector<1024xf32>
    %27 = vector.shape_cast %26 : vector<1024xf32> to vector<1024x1xf32>
    %c0_20 = arith.constant 0 : index
    %c0_21 = arith.constant 0 : index
    %28 = vector.load %arg9[%c0_20, %c0_21] : memref<1x1xf32, #tpu.memory_space<vmem>>, vector<1x1xf32>
    %29 = vector.broadcast %28 : vector<1x1xf32> to vector<1024x1xf32>
    %30 = arith.addf %27, %29 : vector<1024x1xf32>
    %31 = vector.shape_cast %30 : vector<1024x1xf32> to vector<8x128xf32>
    %c0_22 = arith.constant 0 : index
    %c0_23 = arith.constant 0 : index
    %32 = vector.load %arg10[%c0_22, %c0_23] : memref<8x128xf32, #tpu.memory_space<vmem>>, vector<8x128xf32>
    tpu.vector_store %arg10[%c0_22, %c0_23], %31 {strides = array<i32>} : memref<8x128xf32, #tpu.memory_space<vmem>>, vector<8x128xf32>,
    return
  }
  func.func @transform_0(%arg0: i32) -> (i32, i32) {
    %c0_i32 = arith.constant 0 : i32
    %c0_i32_0 = arith.constant 0 : i32
    return %arg0, %c0_i32 : i32, i32
  }
  func.func @transform_1(%arg0: i32) -> (i32, i32) {
    %c0_i32 = arith.constant 0 : i32
    %c0_i32_0 = arith.constant 0 : i32
    %c0_i32_1 = arith.constant 0 : i32
    return %c0_i32, %c0_i32_0 : i32, i32
  }
  func.func @transform_2(%arg0: i32) -> (i32, i32) {
    %c0_i32 = arith.constant 0 : i32
    %c0_i32_0 = arith.constant 0 : i32
    %c0_i32_1 = arith.constant 0 : i32
    return %c0_i32, %c0_i32_0 : i32, i32
  }
  func.func @transform_3(%arg0: i32) -> (i32, i32) {
    %c0_i32 = arith.constant 0 : i32
    %c0_i32_0 = arith.constant 0 : i32
    %c0_i32_1 = arith.constant 0 : i32
    return %c0_i32, %c0_i32_0 : i32, i32
  }
  func.func @transform_4(%arg0: i32) -> (i32, i32) {
    %c0_i32 = arith.constant 0 : i32
    %c0_i32_0 = arith.constant 0 : i32
    %c0_i32_1 = arith.constant 0 : i32
    return %c0_i32, %c0_i32_0 : i32, i32
  }
  func.func @transform_5(%arg0: i32) -> (i32, i32) {
    %c0_i32 = arith.constant 0 : i32
    %c0_i32_0 = arith.constant 0 : i32
    %c0_i32_1 = arith.constant 0 : i32
    return %c0_i32, %c0_i32_0 : i32, i32
  }
  func.func @transform_6(%arg0: i32) -> (i32, i32) {
    %c0_i32 = arith.constant 0 : i32
    %c0_i32_0 = arith.constant 0 : i32
    %c0_i32_1 = arith.constant 0 : i32
    return %c0_i32, %c0_i32_0 : i32, i32
  }
  func.func @transform_7(%arg0: i32) -> (i32, i32) {
    %c0_i32 = arith.constant 0 : i32
    %c0_i32_0 = arith.constant 0 : i32
    %c0_i32_1 = arith.constant 0 : i32
    return %c0_i32, %c0_i32_0 : i32, i32
  }
  func.func @transform_8(%arg0: i32) -> (i32, i32) {
    %c0_i32 = arith.constant 0 : i32
    %c0_i32_0 = arith.constant 0 : i32
    %c0_i32_1 = arith.constant 0 : i32
    return %c0_i32, %c0_i32_0 : i32, i32
  }
  func.func @transform_9(%arg0: i32) -> (i32, i32) {
    %c0_i32 = arith.constant 0 : i32
    %c0_i32_0 = arith.constant 0 : i32
    return %arg0, %c0_i32 : i32, i32
  }
}

</mosaic_0001>

<llo_original>
// kernel: tpu_custom_call.1
$region0: #{tpu_custom_call.1}
  #allocation0 [shape = 'u32[]', space=smem, size = 0x4, offset = 0x4, fixed_abs, tag = 'smem constant byte address 0x4 - core index']
  #allocation1 [shape = 'u32[72,128]{1,0:T(1,128)}', space=vmem, size = 0x9000, scoped, tag = 'internal scratch']
  #allocation2 [shape = 'f32[1,1]{1,0:T(1,128)S(1)}', space=vmem, size = 0x200, scoped, tag = 'scoped memory for tpu_custom_call.1']
  %s0 = inlined_call_operand.vmem [shape: f32[1000,32], index: 0, kind: input, shape index: {}]
  %s1 = inlined_call_operand.vmem [shape: bf16[32,64], index: 1, kind: input, shape index: {}]
  %s2 = inlined_call_operand.vmem [shape: f32[1,64], index: 2, kind: input, shape index: {}]
  %s3 = inlined_call_operand.vmem [shape: bf16[64,32], index: 3, kind: input, shape index: {}]
  %s4 = inlined_call_operand.vmem [shape: f32[1,32], index: 4, kind: input, shape index: {}]
  %s5 = inlined_call_operand.vmem [shape: bf16[32,16], index: 5, kind: input, shape index: {}]
  %s6 = inlined_call_operand.vmem [shape: f32[1,16], index: 6, kind: input, shape index: {}]
  %s7 = inlined_call_operand.vmem [shape: f32[1,16], index: 7, kind: input, shape index: {}]
  %s8 = inlined_call_operand.<no memory space> [shape: f32[1,1], index: 8, kind: input, shape index: {}]
  %s9 = inlined_call_operand.hbm [shape: f32[8,128], index: 9, kind: output, shape index: {}]
  %s10 = sld [smem:[#allocation0]]
  $region46: #{tpu_custom_call.1} parent=0
    _
  %s12 = ssub.s32 1, %s10
  %s13 = scalar_select 0, %s12, %s10
  %v14 = vstv %s8
  %15 = vst [vmem:[#allocation2] sm:$0x1] %v14
  $region1: #{tpu_custom_call.1} parent=0
    #allocation3 [shape = 'u8[4096]{0}', space=vmem, size = 0x1000, scoped, tag = 'output window, operand 0, single buffered']
    #allocation4 [shape = 's32[1]{0}', space=sflag, size = 0x4, scoped, tag = 'scoped memory for tpu_custom_call.1']
    %16 = vsyncpa [#allocation4], 0
    // Predicated region
    $region2: #{tpu_custom_call.1} parent=1 // pred_check
      _
    $region3: #{tpu_custom_call.1} parent=1 // pred_check_branch
      %18 = sbr.rel (0) target = $region5
    $region4: #{tpu_custom_call.1} parent=1 // pred_region
      _
    $region5: #{tpu_custom_call.1} parent=1 // pred_fallthru
      _
    // Predicated region
    $region6: #{tpu_custom_call.1} parent=1 // pred_check
      _
    $region7: #{tpu_custom_call.1} parent=1 // pred_check_branch
      %20 = sbr.rel (0) target = $region9
    $region8: #{tpu_custom_call.1} parent=1 // pred_region
      _
    $region9: #{tpu_custom_call.1} parent=1 // pred_fallthru
      _
    // Predicated region
    $region10: #{tpu_custom_call.1} parent=1 // pred_check
      _
    $region11: #{tpu_custom_call.1} parent=1 // pred_check_branch
      %22 = sbr.rel (0) target = $region13
    $region12: #{tpu_custom_call.1} parent=1 // pred_region
      _
    $region13: #{tpu_custom_call.1} parent=1 // pred_fallthru
      _
    // Predicated region
    $region14: #{tpu_custom_call.1} parent=1 // pred_check
      _
    $region15: #{tpu_custom_call.1} parent=1 // pred_check_branch
      %24 = sbr.rel (0) target = $region17
    $region16: #{tpu_custom_call.1} parent=1 // pred_region
      _
    $region17: #{tpu_custom_call.1} parent=1 // pred_fallthru
      _
    // Predicated region
    $region18: #{tpu_custom_call.1} parent=1 // pred_check
      _
    $region19: #{tpu_custom_call.1} parent=1 // pred_check_branch
      %26 = sbr.rel (0) target = $region21
    $region20: #{tpu_custom_call.1} parent=1 // pred_region
      _
    $region21: #{tpu_custom_call.1} parent=1 // pred_fallthru
      _
    // Predicated region
    $region22: #{tpu_custom_call.1} parent=1 // pred_check
      _
    $region23: #{tpu_custom_call.1} parent=1 // pred_check_branch
      %28 = sbr.rel (0) target = $region25
    $region24: #{tpu_custom_call.1} parent=1 // pred_region
      _
    $region25: #{tpu_custom_call.1} parent=1 // pred_fallthru
      _
    // Predicated region
    $region26: #{tpu_custom_call.1} parent=1 // pred_check
      _
    $region27: #{tpu_custom_call.1} parent=1 // pred_check_branch
      %30 = sbr.rel (0) target = $region29
    $region28: #{tpu_custom_call.1} parent=1 // pred_region
      _
    $region29: #{tpu_custom_call.1} parent=1 // pred_fallthru
      _
    // Predicated region
    $region30: #{tpu_custom_call.1} parent=1 // pred_check
      _
    $region31: #{tpu_custom_call.1} parent=1 // pred_check_branch
      %32 = sbr.rel (0) target = $region33
    $region32: #{tpu_custom_call.1} parent=1 // pred_region
      _
    $region33: #{tpu_custom_call.1} parent=1 // pred_fallthru
      _
    // Predicated region
    $region34: #{tpu_custom_call.1} parent=1 // pred_check
      _
    $region35: #{tpu_custom_call.1} parent=1 // pred_check_branch
      %34 = sbr.rel (0) target = $region37
    $region36: #{tpu_custom_call.1} parent=1 // pred_region
      _
    $region37: #{tpu_custom_call.1} parent=1 // pred_fallthru
      _
    %v36 = vld [vmem:[%s0] sm:$0xff]
    %v37 = vld [vmem:[%s0 + $0x8] sm:$0xff]
    %v38 = vld [vmem:[%s0 + $0x10] sm:$0xff]
    %v39 = vld [vmem:[%s0 + $0x18] sm:$0xff]
    %v40 = vld [vmem:[%s0 + $0x20] sm:$0xff]
    %v41 = vld [vmem:[%s0 + $0x28] sm:$0xff]
    %v42 = vld [vmem:[%s0 + $0x30] sm:$0xff]
    %v43 = vld [vmem:[%s0 + $0x38] sm:$0xff]
    %v44 = vld [vmem:[%s0 + $0x40] sm:$0xff]
    %v45 = vld [vmem:[%s0 + $0x48] sm:$0xff]
    %v46 = vld [vmem:[%s0 + $0x50] sm:$0xff]
    %v47 = vld [vmem:[%s0 + $0x58] sm:$0xff]
    %v48 = vld [vmem:[%s0 + $0x60] sm:$0xff]
    %v49 = vld [vmem:[%s0 + $0x68] sm:$0xff]
    %v50 = vld [vmem:[%s0 + $0x70] sm:$0xff]
    %v51 = vld [vmem:[%s0 + $0x78] sm:$0xff]
    %v52 = vld [vmem:[%s0 + $0x80] sm:$0xff]
    %v53 = vld [vmem:[%s0 + $0x88] sm:$0xff]
    %v54 = vld [vmem:[%s0 + $0x90] sm:$0xff]
    %v55 = vld [vmem:[%s0 + $0x98] sm:$0xff]
    %v56 = vld [vmem:[%s0 + $0xa0] sm:$0xff]
    %v57 = vld [vmem:[%s0 + $0xa8] sm:$0xff]
    %v58 = vld [vmem:[%s0 + $0xb0] sm:$0xff]
    %v59 = vld [vmem:[%s0 + $0xb8] sm:$0xff]
    %v60 = vld [vmem:[%s0 + $0xc0] sm:$0xff]
    %v61 = vld [vmem:[%s0 + $0xc8] sm:$0xff]
    %v62 = vld [vmem:[%s0 + $0xd0] sm:$0xff]
    %v63 = vld [vmem:[%s0 + $0xd8] sm:$0xff]
    %v64 = vld [vmem:[%s0 + $0xe0] sm:$0xff]
    %v65 = vld [vmem:[%s0 + $0xe8] sm:$0xff]
    %v66 = vld [vmem:[%s0 + $0xf0] sm:$0xff]
    %v67 = vld [vmem:[%s0 + $0xf8] sm:$0xff]
    %v68 = vld [vmem:[%s0 + $0x100] sm:$0xff]
    %v69 = vld [vmem:[%s0 + $0x108] sm:$0xff]
    %v70 = vld [vmem:[%s0 + $0x110] sm:$0xff]
    %v71 = vld [vmem:[%s0 + $0x118] sm:$0xff]
    %v72 = vld [vmem:[%s0 + $0x120] sm:$0xff]
    %v73 = vld [vmem:[%s0 + $0x128] sm:$0xff]
    %v74 = vld [vmem:[%s0 + $0x130] sm:$0xff]
    %v75 = vld [vmem:[%s0 + $0x138] sm:$0xff]
    %v76 = vld [vmem:[%s0 + $0x140] sm:$0xff]
    %v77 = vld [vmem:[%s0 + $0x148] sm:$0xff]
    %v78 = vld [vmem:[%s0 + $0x150] sm:$0xff]
    %v79 = vld [vmem:[%s0 + $0x158] sm:$0xff]
    %v80 = vld [vmem:[%s0 + $0x160] sm:$0xff]
    %v81 = vld [vmem:[%s0 + $0x168] sm:$0xff]
    %v82 = vld [vmem:[%s0 + $0x170] sm:$0xff]
    %v83 = vld [vmem:[%s0 + $0x178] sm:$0xff]
    %v84 = vld [vmem:[%s0 + $0x180] sm:$0xff]
    %v85 = vld [vmem:[%s0 + $0x188] sm:$0xff]
    %v86 = vld [vmem:[%s0 + $0x190] sm:$0xff]
    %v87 = vld [vmem:[%s0 + $0x198] sm:$0xff]
    %v88 = vld [vmem:[%s0 + $0x1a0] sm:$0xff]
    %v89 = vld [vmem:[%s0 + $0x1a8] sm:$0xff]
    %v90 = vld [vmem:[%s0 + $0x1b0] sm:$0xff]
    %v91 = vld [vmem:[%s0 + $0x1b8] sm:$0xff]
    %v92 = vld [vmem:[%s0 + $0x1c0] sm:$0xff]
    %v93 = vld [vmem:[%s0 + $0x1c8] sm:$0xff]
    %v94 = vld [vmem:[%s0 + $0x1d0] sm:$0xff]
    %v95 = vld [vmem:[%s0 + $0x1d8] sm:$0xff]
    %v96 = vld [vmem:[%s0 + $0x1e0] sm:$0xff]
    %v97 = vld [vmem:[%s0 + $0x1e8] sm:$0xff]
    %v98 = vld [vmem:[%s0 + $0x1f0] sm:$0xff]
    %v99 = vld [vmem:[%s0 + $0x1f8] sm:$0xff]
    %v100 = vld [vmem:[%s0 + $0x200] sm:$0xff]
    %v101 = vld [vmem:[%s0 + $0x208] sm:$0xff]
    %v102 = vld [vmem:[%s0 + $0x210] sm:$0xff]
    %v103 = vld [vmem:[%s0 + $0x218] sm:$0xff]
    %v104 = vld [vmem:[%s0 + $0x220] sm:$0xff]
    %v105 = vld [vmem:[%s0 + $0x228] sm:$0xff]
    %v106 = vld [vmem:[%s0 + $0x230] sm:$0xff]
    %v107 = vld [vmem:[%s0 + $0x238] sm:$0xff]
    %v108 = vld [vmem:[%s0 + $0x240] sm:$0xff]
    %v109 = vld [vmem:[%s0 + $0x248] sm:$0xff]
    %v110 = vld [vmem:[%s0 + $0x250] sm:$0xff]
    %v111 = vld [vmem:[%s0 + $0x258] sm:$0xff]
    %v112 = vld [vmem:[%s0 + $0x260] sm:$0xff]
    %v113 = vld [vmem:[%s0 + $0x268] sm:$0xff]
    %v114 = vld [vmem:[%s0 + $0x270] sm:$0xff]
    %v115 = vld [vmem:[%s0 + $0x278] sm:$0xff]
    %v116 = vld [vmem:[%s0 + $0x280] sm:$0xff]
    %v117 = vld [vmem:[%s0 + $0x288] sm:$0xff]
    %v118 = vld [vmem:[%s0 + $0x290] sm:$0xff]
    %v119 = vld [vmem:[%s0 + $0x298] sm:$0xff]
    %v120 = vld [vmem:[%s0 + $0x2a0] sm:$0xff]
    %v121 = vld [vmem:[%s0 + $0x2a8] sm:$0xff]
    %v122 = vld [vmem:[%s0 + $0x2b0] sm:$0xff]
    %v123 = vld [vmem:[%s0 + $0x2b8] sm:$0xff]
    %v124 = vld [vmem:[%s0 + $0x2c0] sm:$0xff]
    %v125 = vld [vmem:[%s0 + $0x2c8] sm:$0xff]
    %v126 = vld [vmem:[%s0 + $0x2d0] sm:$0xff]
    %v127 = vld [vmem:[%s0 + $0x2d8] sm:$0xff]
    %v128 = vld [vmem:[%s0 + $0x2e0] sm:$0xff]
    %v129 = vld [vmem:[%s0 + $0x2e8] sm:$0xff]
    %v130 = vld [vmem:[%s0 + $0x2f0] sm:$0xff]
    %v131 = vld [vmem:[%s0 + $0x2f8] sm:$0xff]
    %v132 = vld [vmem:[%s0 + $0x300] sm:$0xff]
    %v133 = vld [vmem:[%s0 + $0x308] sm:$0xff]
    %v134 = vld [vmem:[%s0 + $0x310] sm:$0xff]
    %v135 = vld [vmem:[%s0 + $0x318] sm:$0xff]
    %v136 = vld [vmem:[%s0 + $0x320] sm:$0xff]
    %v137 = vld [vmem:[%s0 + $0x328] sm:$0xff]
    %v138 = vld [vmem:[%s0 + $0x330] sm:$0xff]
    %v139 = vld [vmem:[%s0 + $0x338] sm:$0xff]
    %v140 = vld [vmem:[%s0 + $0x340] sm:$0xff]
    %v141 = vld [vmem:[%s0 + $0x348] sm:$0xff]
    %v142 = vld [vmem:[%s0 + $0x350] sm:$0xff]
    %v143 = vld [vmem:[%s0 + $0x358] sm:$0xff]
    %v144 = vld [vmem:[%s0 + $0x360] sm:$0xff]
    %v145 = vld [vmem:[%s0 + $0x368] sm:$0xff]
    %v146 = vld [vmem:[%s0 + $0x370] sm:$0xff]
    %v147 = vld [vmem:[%s0 + $0x378] sm:$0xff]
    %v148 = vld [vmem:[%s0 + $0x380] sm:$0xff]
    %v149 = vld [vmem:[%s0 + $0x388] sm:$0xff]
    %v150 = vld [vmem:[%s0 + $0x390] sm:$0xff]
    %v151 = vld [vmem:[%s0 + $0x398] sm:$0xff]
    %v152 = vld [vmem:[%s0 + $0x3a0] sm:$0xff]
    %v153 = vld [vmem:[%s0 + $0x3a8] sm:$0xff]
    %v154 = vld [vmem:[%s0 + $0x3b0] sm:$0xff]
    %v155 = vld [vmem:[%s0 + $0x3b8] sm:$0xff]
    %v156 = vld [vmem:[%s0 + $0x3c0] sm:$0xff]
    %v157 = vld [vmem:[%s0 + $0x3c8] sm:$0xff]
    %v158 = vld [vmem:[%s0 + $0x3d0] sm:$0xff]
    %v159 = vld [vmem:[%s0 + $0x3d8] sm:$0xff]
    %v160 = vld [vmem:[%s0 + $0x3e0] sm:$0xff]
    %v161 = vld [vmem:[%s0 + $0x3e8] sm:$0xff]
    %v162 = vld [vmem:[%s0 + $0x3f0] sm:$0xff]
    %v163 = vld [vmem:[%s0 + $0x3f8] sm:$0xff]
    %v164 = vpack.c.bf16 %v37, %v36
    %v165 = vpack.c.bf16 %v39, %v38
    %v166 = vpack.c.bf16 %v41, %v40
    %v167 = vpack.c.bf16 %v43, %v42
    %v168 = vpack.c.bf16 %v45, %v44
    %v169 = vpack.c.bf16 %v47, %v46
    %v170 = vpack.c.bf16 %v49, %v48
    %v171 = vpack.c.bf16 %v51, %v50
    %v172 = vpack.c.bf16 %v53, %v52
    %v173 = vpack.c.bf16 %v55, %v54
    %v174 = vpack.c.bf16 %v57, %v56
    %v175 = vpack.c.bf16 %v59, %v58
    %v176 = vpack.c.bf16 %v61, %v60
    %v177 = vpack.c.bf16 %v63, %v62
    %v178 = vpack.c.bf16 %v65, %v64
    %v179 = vpack.c.bf16 %v67, %v66
    %v180 = vpack.c.bf16 %v69, %v68
    %v181 = vpack.c.bf16 %v71, %v70
    %v182 = vpack.c.bf16 %v73, %v72
    %v183 = vpack.c.bf16 %v75, %v74
    %v184 = vpack.c.bf16 %v77, %v76
    %v185 = vpack.c.bf16 %v79, %v78
    %v186 = vpack.c.bf16 %v81, %v80
    %v187 = vpack.c.bf16 %v83, %v82
    %v188 = vpack.c.bf16 %v85, %v84
    %v189 = vpack.c.bf16 %v87, %v86
    %v190 = vpack.c.bf16 %v89, %v88
    %v191 = vpack.c.bf16 %v91, %v90
    %v192 = vpack.c.bf16 %v93, %v92
    %v193 = vpack.c.bf16 %v95, %v94
    %v194 = vpack.c.bf16 %v97, %v96
    %v195 = vpack.c.bf16 %v99, %v98
    %v196 = vpack.c.bf16 %v101, %v100
    %v197 = vpack.c.bf16 %v103, %v102
    %v198 = vpack.c.bf16 %v105, %v104
    %v199 = vpack.c.bf16 %v107, %v106
    %v200 = vpack.c.bf16 %v109, %v108
    %v201 = vpack.c.bf16 %v111, %v110
    %v202 = vpack.c.bf16 %v113, %v112
    %v203 = vpack.c.bf16 %v115, %v114
    %v204 = vpack.c.bf16 %v117, %v116
    %v205 = vpack.c.bf16 %v119, %v118
    %v206 = vpack.c.bf16 %v121, %v120
    %v207 = vpack.c.bf16 %v123, %v122
    %v208 = vpack.c.bf16 %v125, %v124
    %v209 = vpack.c.bf16 %v127, %v126
    %v210 = vpack.c.bf16 %v129, %v128
    %v211 = vpack.c.bf16 %v131, %v130
    %v212 = vpack.c.bf16 %v133, %v132
    %v213 = vpack.c.bf16 %v135, %v134
    %v214 = vpack.c.bf16 %v137, %v136
    %v215 = vpack.c.bf16 %v139, %v138
    %v216 = vpack.c.bf16 %v141, %v140
    %v217 = vpack.c.bf16 %v143, %v142
    %v218 = vpack.c.bf16 %v145, %v144
    %v219 = vpack.c.bf16 %v147, %v146
    %v220 = vpack.c.bf16 %v149, %v148
    %v221 = vpack.c.bf16 %v151, %v150
    %v222 = vpack.c.bf16 %v153, %v152
    %v223 = vpack.c.bf16 %v155, %v154
    %v224 = vpack.c.bf16 %v157, %v156
    %v225 = vpack.c.bf16 %v159, %v158
    %v226 = vpack.c.bf16 %v161, %v160
    %v227 = vpack.c.bf16 %v163, %v162
    %v228 = vld [vmem:[%s1] sm:$0xf]
    %v229 = vld [vmem:[%s1 + $0x4] sm:$0xf]
    %v230 = vld [vmem:[%s1 + $0x8] sm:$0xf]
    %v231 = vld [vmem:[%s1 + $0xc] sm:$0xf]
    %v232 = vld [vmem:[%s2] sm:$0x1]
    %v234 = vperm.slane %v232, 0
    %v240 = vunpack.c.l.b16 %v228
    %v241 = vunpack.c.l.b16 %v229
    %v242 = vunpack.c.l.b16 %v230
    %v243 = vunpack.c.l.b16 %v231
    %v244 = vpack.c.b16 %v241, %v240
    %v245 = vpack.c.b16 %v243, %v242
    %vm248 = vcmask 261120
    %v250 = vsel %vm248, %v164, 0
    %v253 = vsel %vm248, %v165, 0
    %v256 = vsel %vm248, %v166, 0
    %v259 = vsel %vm248, %v167, 0
    %v262 = vsel %vm248, %v168, 0
    %v265 = vsel %vm248, %v169, 0
    %v268 = vsel %vm248, %v170, 0
    %v271 = vsel %vm248, %v171, 0
    %v274 = vsel %vm248, %v172, 0
    %v277 = vsel %vm248, %v173, 0
    %v280 = vsel %vm248, %v174, 0
    %v283 = vsel %vm248, %v175, 0
    %v286 = vsel %vm248, %v176, 0
    %v289 = vsel %vm248, %v177, 0
    %v292 = vsel %vm248, %v178, 0
    %v295 = vsel %vm248, %v179, 0
    %v298 = vsel %vm248, %v180, 0
    %v301 = vsel %vm248, %v181, 0
    %v304 = vsel %vm248, %v182, 0
    %v307 = vsel %vm248, %v183, 0
    %v310 = vsel %vm248, %v184, 0
    %v313 = vsel %vm248, %v185, 0
    %v316 = vsel %vm248, %v186, 0
    %v319 = vsel %vm248, %v187, 0
    %v322 = vsel %vm248, %v188, 0
    %v325 = vsel %vm248, %v189, 0
    %v328 = vsel %vm248, %v190, 0
    %v331 = vsel %vm248, %v191, 0
    %v334 = vsel %vm248, %v192, 0
    %v337 = vsel %vm248, %v193, 0
    %v340 = vsel %vm248, %v194, 0
    %v343 = vsel %vm248, %v195, 0
    %v346 = vsel %vm248, %v196, 0
    %v349 = vsel %vm248, %v197, 0
    %v352 = vsel %vm248, %v198, 0
    %v355 = vsel %vm248, %v199, 0
    %v358 = vsel %vm248, %v200, 0
    %v361 = vsel %vm248, %v201, 0
    %v364 = vsel %vm248, %v202, 0
    %v367 = vsel %vm248, %v203, 0
    %v370 = vsel %vm248, %v204, 0
    %v373 = vsel %vm248, %v205, 0
    %v376 = vsel %vm248, %v206, 0
    %v379 = vsel %vm248, %v207, 0
    %v382 = vsel %vm248, %v208, 0
    %v385 = vsel %vm248, %v209, 0
    %v388 = vsel %vm248, %v210, 0
    %v391 = vsel %vm248, %v211, 0
    %v394 = vsel %vm248, %v212, 0
    %v397 = vsel %vm248, %v213, 0
    %v400 = vsel %vm248, %v214, 0
    %v403 = vsel %vm248, %v215, 0
    %v406 = vsel %vm248, %v216, 0
    %v409 = vsel %vm248, %v217, 0
    %v412 = vsel %vm248, %v218, 0
    %v415 = vsel %vm248, %v219, 0
    %v418 = vsel %vm248, %v220, 0
    %v421 = vsel %vm248, %v221, 0
    %v424 = vsel %vm248, %v222, 0
    %v427 = vsel %vm248, %v223, 0
    %v430 = vsel %vm248, %v224, 0
    %v433 = vsel %vm248, %v225, 0
    %v436 = vsel %vm248, %v226, 0
    %v439 = vsel %vm248, %v227, 0
    %441 = vmatpush.bf16.msra.mxu0 0
    %442 = vmatpush.bf16.msra.mxu0 0
    %443 = vmatpush.bf16.msra.mxu0 0
    %444 = vmatpush.bf16.msra.mxu0 0
    %445 = vmatpush.bf16.msra.mxu0 0
    %446 = vmatpush.bf16.msra.mxu0 0
    %447 = vmatpush.bf16.msra.mxu0 %v245
    %448 = vmatpush.bf16.msra.mxu0 %v244
    %449 = vmatmul.bf16.gmra.mxu0 %v250
    %v450 = vpop.f32.mrf.mxu0
    %v451 = vadd.f32 %v234, %v450
    %v452 = vpop.f32.mrf.mxu0
    %v453 = vadd.f32 %v234, %v452
    %454 = vmatmul.bf16.gmra.mxu0 %v253
    %v455 = vpop.f32.mrf.mxu0
    %v456 = vadd.f32 %v234, %v455
    %v457 = vpop.f32.mrf.mxu0
    %v458 = vadd.f32 %v234, %v457
    %459 = vmatmul.bf16.gmra.mxu0 %v256
    %v460 = vpop.f32.mrf.mxu0
    %v461 = vadd.f32 %v234, %v460
    %v462 = vpop.f32.mrf.mxu0
    %v463 = vadd.f32 %v234, %v462
    %464 = vmatmul.bf16.gmra.mxu0 %v259
    %v465 = vpop.f32.mrf.mxu0
    %v466 = vadd.f32 %v234, %v465
    %v467 = vpop.f32.mrf.mxu0
    %v468 = vadd.f32 %v234, %v467
    %469 = vmatmul.bf16.gmra.mxu0 %v262
    %v470 = vpop.f32.mrf.mxu0
    %v471 = vadd.f32 %v234, %v470
    %v472 = vpop.f32.mrf.mxu0
    %v473 = vadd.f32 %v234, %v472
    %474 = vmatmul.bf16.gmra.mxu0 %v265
    %v475 = vpop.f32.mrf.mxu0
    %v476 = vadd.f32 %v234, %v475
    %v477 = vpop.f32.mrf.mxu0
    %v478 = vadd.f32 %v234, %v477
    %479 = vmatmul.bf16.gmra.mxu0 %v268
    %v480 = vpop.f32.mrf.mxu0
    %v481 = vadd.f32 %v234, %v480
    %v482 = vpop.f32.mrf.mxu0
    %v483 = vadd.f32 %v234, %v482
    %484 = vmatmul.bf16.gmra.mxu0 %v271
    %v485 = vpop.f32.mrf.mxu0
    %v486 = vadd.f32 %v234, %v485
    %v487 = vpop.f32.mrf.mxu0
    %v488 = vadd.f32 %v234, %v487
    %489 = vmatmul.bf16.gmra.mxu0 %v274
    %v490 = vpop.f32.mrf.mxu0
    %v491 = vadd.f32 %v234, %v490
    %v492 = vpop.f32.mrf.mxu0
    %v493 = vadd.f32 %v234, %v492
    %494 = vmatmul.bf16.gmra.mxu0 %v277
    %v495 = vpop.f32.mrf.mxu0
    %v496 = vadd.f32 %v234, %v495
    %v497 = vpop.f32.mrf.mxu0
    %v498 = vadd.f32 %v234, %v497
    %499 = vmatmul.bf16.gmra.mxu0 %v280
    %v500 = vpop.f32.mrf.mxu0
    %v501 = vadd.f32 %v234, %v500
    %v502 = vpop.f32.mrf.mxu0
    %v503 = vadd.f32 %v234, %v502
    %504 = vmatmul.bf16.gmra.mxu0 %v283
    %v505 = vpop.f32.mrf.mxu0
    %v506 = vadd.f32 %v234, %v505
    %v507 = vpop.f32.mrf.mxu0
    %v508 = vadd.f32 %v234, %v507
    %509 = vmatmul.bf16.gmra.mxu0 %v286
    %v510 = vpop.f32.mrf.mxu0
    %v511 = vadd.f32 %v234, %v510
    %v512 = vpop.f32.mrf.mxu0
    %v513 = vadd.f32 %v234, %v512
    %514 = vmatmul.bf16.gmra.mxu0 %v289
    %v515 = vpop.f32.mrf.mxu0
    %v516 = vadd.f32 %v234, %v515
    %v517 = vpop.f32.mrf.mxu0
    %v518 = vadd.f32 %v234, %v517
    %519 = vmatmul.bf16.gmra.mxu0 %v292
    %v520 = vpop.f32.mrf.mxu0
    %v521 = vadd.f32 %v234, %v520
    %v522 = vpop.f32.mrf.mxu0
    %v523 = vadd.f32 %v234, %v522
    %524 = vmatmul.bf16.gmra.mxu0 %v295
    %v525 = vpop.f32.mrf.mxu0
    %v526 = vadd.f32 %v234, %v525
    %v527 = vpop.f32.mrf.mxu0
    %v528 = vadd.f32 %v234, %v527
    %529 = vmatmul.bf16.gmra.mxu0 %v298
    %v530 = vpop.f32.mrf.mxu0
    %v531 = vadd.f32 %v234, %v530
    %v532 = vpop.f32.mrf.mxu0
    %v533 = vadd.f32 %v234, %v532
    %534 = vmatmul.bf16.gmra.mxu0 %v301
    %v535 = vpop.f32.mrf.mxu0
    %v536 = vadd.f32 %v234, %v535
    %v537 = vpop.f32.mrf.mxu0
    %v538 = vadd.f32 %v234, %v537
    %539 = vmatmul.bf16.gmra.mxu0 %v304
    %v540 = vpop.f32.mrf.mxu0
    %v541 = vadd.f32 %v234, %v540
    %v542 = vpop.f32.mrf.mxu0
    %v543 = vadd.f32 %v234, %v542
    %544 = vmatmul.bf16.gmra.mxu0 %v307
    %v545 = vpop.f32.mrf.mxu0
    %v546 = vadd.f32 %v234, %v545
    %v547 = vpop.f32.mrf.mxu0
    %v548 = vadd.f32 %v234, %v547
    %549 = vmatmul.bf16.gmra.mxu0 %v310
    %v550 = vpop.f32.mrf.mxu0
    %v551 = vadd.f32 %v234, %v550
    %v552 = vpop.f32.mrf.mxu0
    %v553 = vadd.f32 %v234, %v552
    %554 = vmatmul.bf16.gmra.mxu0 %v313
    %v555 = vpop.f32.mrf.mxu0
    %v556 = vadd.f32 %v234, %v555
    %v557 = vpop.f32.mrf.mxu0
    %v558 = vadd.f32 %v234, %v557
    %559 = vmatmul.bf16.gmra.mxu0 %v316
    %v560 = vpop.f32.mrf.mxu0
    %v561 = vadd.f32 %v234, %v560
    %v562 = vpop.f32.mrf.mxu0
    %v563 = vadd.f32 %v234, %v562
    %564 = vmatmul.bf16.gmra.mxu0 %v319
    %v565 = vpop.f32.mrf.mxu0
    %v566 = vadd.f32 %v234, %v565
    %v567 = vpop.f32.mrf.mxu0
    %v568 = vadd.f32 %v234, %v567
    %569 = vmatmul.bf16.gmra.mxu0 %v322
    %v570 = vpop.f32.mrf.mxu0
    %v571 = vadd.f32 %v234, %v570
    %v572 = vpop.f32.mrf.mxu0
    %v573 = vadd.f32 %v234, %v572
    %574 = vmatmul.bf16.gmra.mxu0 %v325
    %v575 = vpop.f32.mrf.mxu0
    %v576 = vadd.f32 %v234, %v575
    %v577 = vpop.f32.mrf.mxu0
    %v578 = vadd.f32 %v234, %v577
    %579 = vmatmul.bf16.gmra.mxu0 %v328
    %v580 = vpop.f32.mrf.mxu0
    %v581 = vadd.f32 %v234, %v580
    %v582 = vpop.f32.mrf.mxu0
    %v583 = vadd.f32 %v234, %v582
    %584 = vmatmul.bf16.gmra.mxu0 %v331
    %v585 = vpop.f32.mrf.mxu0
    %v586 = vadd.f32 %v234, %v585
    %v587 = vpop.f32.mrf.mxu0
    %v588 = vadd.f32 %v234, %v587
    %589 = vmatmul.bf16.gmra.mxu0 %v334
    %v590 = vpop.f32.mrf.mxu0
    %v591 = vadd.f32 %v234, %v590
    %v592 = vpop.f32.mrf.mxu0
    %v593 = vadd.f32 %v234, %v592
    %594 = vmatmul.bf16.gmra.mxu0 %v337
    %v595 = vpop.f32.mrf.mxu0
    %v596 = vadd.f32 %v234, %v595
    %v597 = vpop.f32.mrf.mxu0
    %v598 = vadd.f32 %v234, %v597
    %599 = vmatmul.bf16.gmra.mxu0 %v340
    %v600 = vpop.f32.mrf.mxu0
    %v601 = vadd.f32 %v234, %v600
    %v602 = vpop.f32.mrf.mxu0
    %v603 = vadd.f32 %v234, %v602
    %604 = vmatmul.bf16.gmra.mxu0 %v343
    %v605 = vpop.f32.mrf.mxu0
    %v606 = vadd.f32 %v234, %v605
    %v607 = vpop.f32.mrf.mxu0
    %v608 = vadd.f32 %v234, %v607
    %609 = vmatmul.bf16.gmra.mxu0 %v346
    %v610 = vpop.f32.mrf.mxu0
    %v611 = vadd.f32 %v234, %v610
    %v612 = vpop.f32.mrf.mxu0
    %v613 = vadd.f32 %v234, %v612
    %614 = vmatmul.bf16.gmra.mxu0 %v349
    %v615 = vpop.f32.mrf.mxu0
    %v616 = vadd.f32 %v234, %v615
    %v617 = vpop.f32.mrf.mxu0
    %v618 = vadd.f32 %v234, %v617
    %619 = vmatmul.bf16.gmra.mxu0 %v352
    %v620 = vpop.f32.mrf.mxu0
    %v621 = vadd.f32 %v234, %v620
    %v622 = vpop.f32.mrf.mxu0
    %v623 = vadd.f32 %v234, %v622
    %624 = vmatmul.bf16.gmra.mxu0 %v355
    %v625 = vpop.f32.mrf.mxu0
    %v626 = vadd.f32 %v234, %v625
    %v627 = vpop.f32.mrf.mxu0
    %v628 = vadd.f32 %v234, %v627
    %629 = vmatmul.bf16.gmra.mxu0 %v358
    %v630 = vpop.f32.mrf.mxu0
    %v631 = vadd.f32 %v234, %v630
    %v632 = vpop.f32.mrf.mxu0
    %v633 = vadd.f32 %v234, %v632
    %634 = vmatmul.bf16.gmra.mxu0 %v361
    %v635 = vpop.f32.mrf.mxu0
    %v636 = vadd.f32 %v234, %v635
    %v637 = vpop.f32.mrf.mxu0
    %v638 = vadd.f32 %v234, %v637
    %639 = vmatmul.bf16.gmra.mxu0 %v364
    %v640 = vpop.f32.mrf.mxu0
    %v641 = vadd.f32 %v234, %v640
    %v642 = vpop.f32.mrf.mxu0
    %v643 = vadd.f32 %v234, %v642
    %644 = vmatmul.bf16.gmra.mxu0 %v367
    %v645 = vpop.f32.mrf.mxu0
    %v646 = vadd.f32 %v234, %v645
    %v647 = vpop.f32.mrf.mxu0
    %v648 = vadd.f32 %v234, %v647
    %649 = vmatmul.bf16.gmra.mxu0 %v370
    %v650 = vpop.f32.mrf.mxu0
    %v651 = vadd.f32 %v234, %v650
    %v652 = vpop.f32.mrf.mxu0
    %v653 = vadd.f32 %v234, %v652
    %654 = vmatmul.bf16.gmra.mxu0 %v373
    %v655 = vpop.f32.mrf.mxu0
    %v656 = vadd.f32 %v234, %v655
    %v657 = vpop.f32.mrf.mxu0
    %v658 = vadd.f32 %v234, %v657
    %659 = vmatmul.bf16.gmra.mxu0 %v376
    %v660 = vpop.f32.mrf.mxu0
    %v661 = vadd.f32 %v234, %v660
    %v662 = vpop.f32.mrf.mxu0
    %v663 = vadd.f32 %v234, %v662
    %664 = vmatmul.bf16.gmra.mxu0 %v379
    %v665 = vpop.f32.mrf.mxu0
    %v666 = vadd.f32 %v234, %v665
    %v667 = vpop.f32.mrf.mxu0
    %v668 = vadd.f32 %v234, %v667
    %669 = vmatmul.bf16.gmra.mxu0 %v382
    %v670 = vpop.f32.mrf.mxu0
    %v671 = vadd.f32 %v234, %v670
    %v672 = vpop.f32.mrf.mxu0
    %v673 = vadd.f32 %v234, %v672
    %674 = vmatmul.bf16.gmra.mxu0 %v385
    %v675 = vpop.f32.mrf.mxu0
    %v676 = vadd.f32 %v234, %v675
    %v677 = vpop.f32.mrf.mxu0
    %v678 = vadd.f32 %v234, %v677
    %679 = vmatmul.bf16.gmra.mxu0 %v388
    %v680 = vpop.f32.mrf.mxu0
    %v681 = vadd.f32 %v234, %v680
    %v682 = vpop.f32.mrf.mxu0
    %v683 = vadd.f32 %v234, %v682
    %684 = vmatmul.bf16.gmra.mxu0 %v391
    %v685 = vpop.f32.mrf.mxu0
    %v686 = vadd.f32 %v234, %v685
    %v687 = vpop.f32.mrf.mxu0
    %v688 = vadd.f32 %v234, %v687
    %689 = vmatmul.bf16.gmra.mxu0 %v394
    %v690 = vpop.f32.mrf.mxu0
    %v691 = vadd.f32 %v234, %v690
    %v692 = vpop.f32.mrf.mxu0
    %v693 = vadd.f32 %v234, %v692
    %694 = vmatmul.bf16.gmra.mxu0 %v397
    %v695 = vpop.f32.mrf.mxu0
    %v696 = vadd.f32 %v234, %v695
    %v697 = vpop.f32.mrf.mxu0
    %v698 = vadd.f32 %v234, %v697
    %699 = vmatmul.bf16.gmra.mxu0 %v400
    %v700 = vpop.f32.mrf.mxu0
    %v701 = vadd.f32 %v234, %v700
    %v702 = vpop.f32.mrf.mxu0
    %v703 = vadd.f32 %v234, %v702
    %704 = vmatmul.bf16.gmra.mxu0 %v403
    %v705 = vpop.f32.mrf.mxu0
    %v706 = vadd.f32 %v234, %v705
    %v707 = vpop.f32.mrf.mxu0
    %v708 = vadd.f32 %v234, %v707
    %709 = vmatmul.bf16.gmra.mxu0 %v406
    %v710 = vpop.f32.mrf.mxu0
    %v711 = vadd.f32 %v234, %v710
    %v712 = vpop.f32.mrf.mxu0
    %v713 = vadd.f32 %v234, %v712
    %714 = vmatmul.bf16.gmra.mxu0 %v409
    %v715 = vpop.f32.mrf.mxu0
    %v716 = vadd.f32 %v234, %v715
    %v717 = vpop.f32.mrf.mxu0
    %v718 = vadd.f32 %v234, %v717
    %719 = vmatmul.bf16.gmra.mxu0 %v412
    %v720 = vpop.f32.mrf.mxu0
    %v721 = vadd.f32 %v234, %v720
    %v722 = vpop.f32.mrf.mxu0
    %v723 = vadd.f32 %v234, %v722
    %724 = vmatmul.bf16.gmra.mxu0 %v415
    %v725 = vpop.f32.mrf.mxu0
    %v726 = vadd.f32 %v234, %v725
    %v727 = vpop.f32.mrf.mxu0
    %v728 = vadd.f32 %v234, %v727
    %729 = vmatmul.bf16.gmra.mxu0 %v418
    %v730 = vpop.f32.mrf.mxu0
    %v731 = vadd.f32 %v234, %v730
    %v732 = vpop.f32.mrf.mxu0
    %v733 = vadd.f32 %v234, %v732
    %734 = vmatmul.bf16.gmra.mxu0 %v421
    %v735 = vpop.f32.mrf.mxu0
    %v736 = vadd.f32 %v234, %v735
    %v737 = vpop.f32.mrf.mxu0
    %v738 = vadd.f32 %v234, %v737
    %739 = vmatmul.bf16.gmra.mxu0 %v424
    %v740 = vpop.f32.mrf.mxu0
    %v741 = vadd.f32 %v234, %v740
    %v742 = vpop.f32.mrf.mxu0
    %v743 = vadd.f32 %v234, %v742
    %744 = vmatmul.bf16.gmra.mxu0 %v427
    %v745 = vpop.f32.mrf.mxu0
    %v746 = vadd.f32 %v234, %v745
    %v747 = vpop.f32.mrf.mxu0
    %v748 = vadd.f32 %v234, %v747
    %749 = vmatmul.bf16.gmra.mxu0 %v430
    %v750 = vpop.f32.mrf.mxu0
    %v751 = vadd.f32 %v234, %v750
    %v752 = vpop.f32.mrf.mxu0
    %v753 = vadd.f32 %v234, %v752
    %754 = vmatmul.bf16.gmra.mxu0 %v433
    %v755 = vpop.f32.mrf.mxu0
    %v756 = vadd.f32 %v234, %v755
    %v757 = vpop.f32.mrf.mxu0
    %v758 = vadd.f32 %v234, %v757
    %759 = vmatmul.bf16.gmra.mxu0 %v436
    %v760 = vpop.f32.mrf.mxu0
    %v761 = vadd.f32 %v234, %v760
    %v762 = vpop.f32.mrf.mxu0
    %v763 = vadd.f32 %v234, %v762
    %764 = vmatmul.bf16.gmra.mxu0 %v439
    %v765 = vpop.f32.mrf.mxu0
    %v766 = vadd.f32 %v234, %v765
    %v767 = vpop.f32.mrf.mxu0
    %v768 = vadd.f32 %v234, %v767
    %769 = vdwg.mxu0
    %v770 = vmax.f32 %v451, 0.0
    %v771 = vmax.f32 %v453, 0.0
    %v772 = vmax.f32 %v456, 0.0
    %v773 = vmax.f32 %v458, 0.0
    %v774 = vmax.f32 %v461, 0.0
    %v775 = vmax.f32 %v463, 0.0
    %v776 = vmax.f32 %v466, 0.0
    %v777 = vmax.f32 %v468, 0.0
    %v778 = vmax.f32 %v471, 0.0
    %v779 = vmax.f32 %v473, 0.0
    %v780 = vmax.f32 %v476, 0.0
    %v781 = vmax.f32 %v478, 0.0
    %v782 = vmax.f32 %v481, 0.0
    %v783 = vmax.f32 %v483, 0.0
    %v784 = vmax.f32 %v486, 0.0
    %v785 = vmax.f32 %v488, 0.0
    %v786 = vmax.f32 %v491, 0.0
    %v787 = vmax.f32 %v493, 0.0
    %v788 = vmax.f32 %v496, 0.0
    %v789 = vmax.f32 %v498, 0.0
    %v790 = vmax.f32 %v501, 0.0
    %v791 = vmax.f32 %v503, 0.0
    %v792 = vmax.f32 %v506, 0.0
    %v793 = vmax.f32 %v508, 0.0
    %v794 = vmax.f32 %v511, 0.0
    %v795 = vmax.f32 %v513, 0.0
    %v796 = vmax.f32 %v516, 0.0
    %v797 = vmax.f32 %v518, 0.0
    %v798 = vmax.f32 %v521, 0.0
    %v799 = vmax.f32 %v523, 0.0
    %v800 = vmax.f32 %v526, 0.0
    %v801 = vmax.f32 %v528, 0.0
    %v802 = vmax.f32 %v531, 0.0
    %v803 = vmax.f32 %v533, 0.0
    %v804 = vmax.f32 %v536, 0.0
    %v805 = vmax.f32 %v538, 0.0
    %v806 = vmax.f32 %v541, 0.0
    %v807 = vmax.f32 %v543, 0.0
    %v808 = vmax.f32 %v546, 0.0
    %v809 = vmax.f32 %v548, 0.0
    %v810 = vmax.f32 %v551, 0.0
    %v811 = vmax.f32 %v553, 0.0
    %v812 = vmax.f32 %v556, 0.0
    %v813 = vmax.f32 %v558, 0.0
    %v814 = vmax.f32 %v561, 0.0
    %v815 = vmax.f32 %v563, 0.0
    %v816 = vmax.f32 %v566, 0.0
    %v817 = vmax.f32 %v568, 0.0
    %v818 = vmax.f32 %v571, 0.0
    %v819 = vmax.f32 %v573, 0.0
    %v820 = vmax.f32 %v576, 0.0
    %v821 = vmax.f32 %v578, 0.0
    %v822 = vmax.f32 %v581, 0.0
    %v823 = vmax.f32 %v583, 0.0
    %v824 = vmax.f32 %v586, 0.0
    %v825 = vmax.f32 %v588, 0.0
    %v826 = vmax.f32 %v591, 0.0
    %v827 = vmax.f32 %v593, 0.0
    %v828 = vmax.f32 %v596, 0.0
    %v829 = vmax.f32 %v598, 0.0
    %v830 = vmax.f32 %v601, 0.0
    %v831 = vmax.f32 %v603, 0.0
    %v832 = vmax.f32 %v606, 0.0
    %v833 = vmax.f32 %v608, 0.0
    %v834 = vmax.f32 %v611, 0.0
    %v835 = vmax.f32 %v613, 0.0
    %v836 = vmax.f32 %v616, 0.0
    %v837 = vmax.f32 %v618, 0.0
    %v838 = vmax.f32 %v621, 0.0
    %v839 = vmax.f32 %v623, 0.0
    %v840 = vmax.f32 %v626, 0.0
    %v841 = vmax.f32 %v628, 0.0
    %v842 = vmax.f32 %v631, 0.0
    %v843 = vmax.f32 %v633, 0.0
    %v844 = vmax.f32 %v636, 0.0
    %v845 = vmax.f32 %v638, 0.0
    %v846 = vmax.f32 %v641, 0.0
    %v847 = vmax.f32 %v643, 0.0
    %v848 = vmax.f32 %v646, 0.0
    %v849 = vmax.f32 %v648, 0.0
    %v850 = vmax.f32 %v651, 0.0
    %v851 = vmax.f32 %v653, 0.0
    %v852 = vmax.f32 %v656, 0.0
    %v853 = vmax.f32 %v658, 0.0
    %v854 = vmax.f32 %v661, 0.0
    %v855 = vmax.f32 %v663, 0.0
    %v856 = vmax.f32 %v666, 0.0
    %v857 = vmax.f32 %v668, 0.0
    %v858 = vmax.f32 %v671, 0.0
    %v859 = vmax.f32 %v673, 0.0
    %v860 = vmax.f32 %v676, 0.0
    %v861 = vmax.f32 %v678, 0.0
    %v862 = vmax.f32 %v681, 0.0
    %v863 = vmax.f32 %v683, 0.0
    %v864 = vmax.f32 %v686, 0.0
    %v865 = vmax.f32 %v688, 0.0
    %v866 = vmax.f32 %v691, 0.0
    %v867 = vmax.f32 %v693, 0.0
    %v868 = vmax.f32 %v696, 0.0
    %v869 = vmax.f32 %v698, 0.0
    %v870 = vmax.f32 %v701, 0.0
    %v871 = vmax.f32 %v703, 0.0
    %v872 = vmax.f32 %v706, 0.0
    %v873 = vmax.f32 %v708, 0.0
    %v874 = vmax.f32 %v711, 0.0
    %v875 = vmax.f32 %v713, 0.0
    %v876 = vmax.f32 %v716, 0.0
    %v877 = vmax.f32 %v718, 0.0
    %v878 = vmax.f32 %v721, 0.0
    %v879 = vmax.f32 %v723, 0.0
    %v880 = vmax.f32 %v726, 0.0
    %v881 = vmax.f32 %v728, 0.0
    %v882 = vmax.f32 %v731, 0.0
    %v883 = vmax.f32 %v733, 0.0
    %v884 = vmax.f32 %v736, 0.0
    %v885 = vmax.f32 %v738, 0.0
    %v886 = vmax.f32 %v741, 0.0
    %v887 = vmax.f32 %v743, 0.0
    %v888 = vmax.f32 %v746, 0.0
    %v889 = vmax.f32 %v748, 0.0
    %v890 = vmax.f32 %v751, 0.0
    %v891 = vmax.f32 %v753, 0.0
    %v892 = vmax.f32 %v756, 0.0
    %v893 = vmax.f32 %v758, 0.0
    %v894 = vmax.f32 %v761, 0.0
    %v895 = vmax.f32 %v763, 0.0
    %v896 = vmax.f32 %v766, 0.0
    %v897 = vmax.f32 %v768, 0.0
    %v898 = vpack.c.bf16 %v771, %v770
    %v899 = vpack.c.bf16 %v773, %v772
    %v900 = vpack.c.bf16 %v775, %v774
    %v901 = vpack.c.bf16 %v777, %v776
    %v902 = vpack.c.bf16 %v779, %v778
    %v903 = vpack.c.bf16 %v781, %v780
    %v904 = vpack.c.bf16 %v783, %v782
    %v905 = vpack.c.bf16 %v785, %v784
    %v906 = vpack.c.bf16 %v787, %v786
    %v907 = vpack.c.bf16 %v789, %v788
    %v908 = vpack.c.bf16 %v791, %v790
    %v909 = vpack.c.bf16 %v793, %v792
    %v910 = vpack.c.bf16 %v795, %v794
    %v911 = vpack.c.bf16 %v797, %v796
    %v912 = vpack.c.bf16 %v799, %v798
    %v913 = vpack.c.bf16 %v801, %v800
    %v914 = vpack.c.bf16 %v803, %v802
    %v915 = vpack.c.bf16 %v805, %v804
    %v916 = vpack.c.bf16 %v807, %v806
    %v917 = vpack.c.bf16 %v809, %v808
    %v918 = vpack.c.bf16 %v811, %v810
    %v919 = vpack.c.bf16 %v813, %v812
    %v920 = vpack.c.bf16 %v815, %v814
    %v921 = vpack.c.bf16 %v817, %v816
    %v922 = vpack.c.bf16 %v819, %v818
    %v923 = vpack.c.bf16 %v821, %v820
    %v924 = vpack.c.bf16 %v823, %v822
    %v925 = vpack.c.bf16 %v825, %v824
    %v926 = vpack.c.bf16 %v827, %v826
    %v927 = vpack.c.bf16 %v829, %v828
    %v928 = vpack.c.bf16 %v831, %v830
    %v929 = vpack.c.bf16 %v833, %v832
    %v930 = vpack.c.bf16 %v835, %v834
    %v931 = vpack.c.bf16 %v837, %v836
    %v932 = vpack.c.bf16 %v839, %v838
    %v933 = vpack.c.bf16 %v841, %v840
    %v934 = vpack.c.bf16 %v843, %v842
    %v935 = vpack.c.bf16 %v845, %v844
    %v936 = vpack.c.bf16 %v847, %v846
    %v937 = vpack.c.bf16 %v849, %v848
    %v938 = vpack.c.bf16 %v851, %v850
    %v939 = vpack.c.bf16 %v853, %v852
    %v940 = vpack.c.bf16 %v855, %v854
    %v941 = vpack.c.bf16 %v857, %v856
    %v942 = vpack.c.bf16 %v859, %v858
    %v943 = vpack.c.bf16 %v861, %v860
    %v944 = vpack.c.bf16 %v863, %v862
    %v945 = vpack.c.bf16 %v865, %v864
    %v946 = vpack.c.bf16 %v867, %v866
    %v947 = vpack.c.bf16 %v869, %v868
    %v948 = vpack.c.bf16 %v871, %v870
    %v949 = vpack.c.bf16 %v873, %v872
    %v950 = vpack.c.bf16 %v875, %v874
    %v951 = vpack.c.bf16 %v877, %v876
    %v952 = vpack.c.bf16 %v879, %v878
    %v953 = vpack.c.bf16 %v881, %v880
    %v954 = vpack.c.bf16 %v883, %v882
    %v955 = vpack.c.bf16 %v885, %v884
    %v956 = vpack.c.bf16 %v887, %v886
    %v957 = vpack.c.bf16 %v889, %v888
    %v958 = vpack.c.bf16 %v891, %v890
    %v959 = vpack.c.bf16 %v893, %v892
    %v960 = vpack.c.bf16 %v895, %v894
    %v961 = vpack.c.bf16 %v897, %v896
    %v962 = vld [vmem:[%s3] sm:$0xf]
    %v963 = vld [vmem:[%s3 + $0x4] sm:$0xf]
    %v964 = vld [vmem:[%s3 + $0x8] sm:$0xf]
    %v965 = vld [vmem:[%s3 + $0xc] sm:$0xf]
    %v966 = vld [vmem:[%s3 + $0x10] sm:$0xf]
    %v967 = vld [vmem:[%s3 + $0x14] sm:$0xf]
    %v968 = vld [vmem:[%s3 + $0x18] sm:$0xf]
    %v969 = vld [vmem:[%s3 + $0x1c] sm:$0xf]
    %v970 = vld [vmem:[%s4] sm:$0x1]
    %v972 = vperm.slane %v970, 0
    %v982 = vunpack.c.l.b16 %v962
    %v983 = vunpack.c.l.b16 %v963
    %v984 = vunpack.c.l.b16 %v964
    %v985 = vunpack.c.l.b16 %v965
    %v986 = vunpack.c.l.b16 %v966
    %v987 = vunpack.c.l.b16 %v967
    %v988 = vunpack.c.l.b16 %v968
    %v989 = vunpack.c.l.b16 %v969
    %v990 = vpack.c.b16 %v983, %v982
    %v991 = vpack.c.b16 %v985, %v984
    %v992 = vpack.c.b16 %v987, %v986
    %v993 = vpack.c.b16 %v989, %v988
    %vm998 = vcmask 523264
    %v1000 = vsel %vm998, %v898, 0
    %v1003 = vsel %vm998, %v899, 0
    %v1006 = vsel %vm998, %v900, 0
    %v1009 = vsel %vm998, %v901, 0
    %v1012 = vsel %vm998, %v902, 0
    %v1015 = vsel %vm998, %v903, 0
    %v1018 = vsel %vm998, %v904, 0
    %v1021 = vsel %vm998, %v905, 0
    %v1024 = vsel %vm998, %v906, 0
    %v1027 = vsel %vm998, %v907, 0
    %v1030 = vsel %vm998, %v908, 0
    %v1033 = vsel %vm998, %v909, 0
    %v1036 = vsel %vm998, %v910, 0
    %v1039 = vsel %vm998, %v911, 0
    %v1042 = vsel %vm998, %v912, 0
    %v1045 = vsel %vm998, %v913, 0
    %v1048 = vsel %vm998, %v914, 0
    %v1051 = vsel %vm998, %v915, 0
    %v1054 = vsel %vm998, %v916, 0
    %v1057 = vsel %vm998, %v917, 0
    %v1060 = vsel %vm998, %v918, 0
    %v1063 = vsel %vm998, %v919, 0
    %v1066 = vsel %vm998, %v920, 0
    %v1069 = vsel %vm998, %v921, 0
    %v1072 = vsel %vm998, %v922, 0
    %v1075 = vsel %vm998, %v923, 0
    %v1078 = vsel %vm998, %v924, 0
    %v1081 = vsel %vm998, %v925, 0
    %v1084 = vsel %vm998, %v926, 0
    %v1087 = vsel %vm998, %v927, 0
    %v1090 = vsel %vm998, %v928, 0
    %v1093 = vsel %vm998, %v929, 0
    %v1096 = vsel %vm998, %v930, 0
    %v1099 = vsel %vm998, %v931, 0
    %v1102 = vsel %vm998, %v932, 0
    %v1105 = vsel %vm998, %v933, 0
    %v1108 = vsel %vm998, %v934, 0
    %v1111 = vsel %vm998, %v935, 0
    %v1114 = vsel %vm998, %v936, 0
    %v1117 = vsel %vm998, %v937, 0
    %v1120 = vsel %vm998, %v938, 0
    %v1123 = vsel %vm998, %v939, 0
    %v1126 = vsel %vm998, %v940, 0
    %v1129 = vsel %vm998, %v941, 0
    %v1132 = vsel %vm998, %v942, 0
    %v1135 = vsel %vm998, %v943, 0
    %v1138 = vsel %vm998, %v944, 0
    %v1141 = vsel %vm998, %v945, 0
    %v1144 = vsel %vm998, %v946, 0
    %v1147 = vsel %vm998, %v947, 0
    %v1150 = vsel %vm998, %v948, 0
    %v1153 = vsel %vm998, %v949, 0
    %v1156 = vsel %vm998, %v950, 0
    %v1159 = vsel %vm998, %v951, 0
    %v1162 = vsel %vm998, %v952, 0
    %v1165 = vsel %vm998, %v953, 0
    %v1168 = vsel %vm998, %v954, 0
    %v1171 = vsel %vm998, %v955, 0
    %v1174 = vsel %vm998, %v956, 0
    %v1177 = vsel %vm998, %v957, 0
    %v1180 = vsel %vm998, %v958, 0
    %v1183 = vsel %vm998, %v959, 0
    %v1186 = vsel %vm998, %v960, 0
    %v1189 = vsel %vm998, %v961, 0
    %1191 = vmatpush.bf16.msra.mxu0 0
    %1192 = vmatpush.bf16.msra.mxu0 0
    %1193 = vmatpush.bf16.msra.mxu0 0
    %1194 = vmatpush.bf16.msra.mxu0 0
    %1195 = vmatpush.bf16.msra.mxu0 %v993
    %1196 = vmatpush.bf16.msra.mxu0 %v992
    %1197 = vmatpush.bf16.msra.mxu0 %v991
    %1198 = vmatpush.bf16.msra.mxu0 %v990
    %1199 = vmatmul.bf16.gmra.mxu0 %v1000
    %v1200 = vpop.f32.mrf.mxu0
    %v1201 = vadd.f32 %v972, %v1200
    %v1202 = vpop.f32.mrf.mxu0
    %v1203 = vadd.f32 %v972, %v1202
    %1204 = vmatmul.bf16.gmra.mxu0 %v1003
    %v1205 = vpop.f32.mrf.mxu0
    %v1206 = vadd.f32 %v972, %v1205
    %v1207 = vpop.f32.mrf.mxu0
    %v1208 = vadd.f32 %v972, %v1207
    %1209 = vmatmul.bf16.gmra.mxu0 %v1006
    %v1210 = vpop.f32.mrf.mxu0
    %v1211 = vadd.f32 %v972, %v1210
    %v1212 = vpop.f32.mrf.mxu0
    %v1213 = vadd.f32 %v972, %v1212
    %1214 = vmatmul.bf16.gmra.mxu0 %v1009
    %v1215 = vpop.f32.mrf.mxu0
    %v1216 = vadd.f32 %v972, %v1215
    %v1217 = vpop.f32.mrf.mxu0
    %v1218 = vadd.f32 %v972, %v1217
    %1219 = vmatmul.bf16.gmra.mxu0 %v1012
    %v1220 = vpop.f32.mrf.mxu0
    %v1221 = vadd.f32 %v972, %v1220
    %v1222 = vpop.f32.mrf.mxu0
    %v1223 = vadd.f32 %v972, %v1222
    %1224 = vmatmul.bf16.gmra.mxu0 %v1015
    %v1225 = vpop.f32.mrf.mxu0
    %v1226 = vadd.f32 %v972, %v1225
    %v1227 = vpop.f32.mrf.mxu0
    %v1228 = vadd.f32 %v972, %v1227
    %1229 = vmatmul.bf16.gmra.mxu0 %v1018
    %v1230 = vpop.f32.mrf.mxu0
    %v1231 = vadd.f32 %v972, %v1230
    %v1232 = vpop.f32.mrf.mxu0
    %v1233 = vadd.f32 %v972, %v1232
    %1234 = vmatmul.bf16.gmra.mxu0 %v1021
    %v1235 = vpop.f32.mrf.mxu0
    %v1236 = vadd.f32 %v972, %v1235
    %v1237 = vpop.f32.mrf.mxu0
    %v1238 = vadd.f32 %v972, %v1237
    %1239 = vmatmul.bf16.gmra.mxu0 %v1024
    %v1240 = vpop.f32.mrf.mxu0
    %v1241 = vadd.f32 %v972, %v1240
    %v1242 = vpop.f32.mrf.mxu0
    %v1243 = vadd.f32 %v972, %v1242
    %1244 = vmatmul.bf16.gmra.mxu0 %v1027
    %v1245 = vpop.f32.mrf.mxu0
    %v1246 = vadd.f32 %v972, %v1245
    %v1247 = vpop.f32.mrf.mxu0
    %v1248 = vadd.f32 %v972, %v1247
    %1249 = vmatmul.bf16.gmra.mxu0 %v1030
    %v1250 = vpop.f32.mrf.mxu0
    %v1251 = vadd.f32 %v972, %v1250
    %v1252 = vpop.f32.mrf.mxu0
    %v1253 = vadd.f32 %v972, %v1252
    %1254 = vmatmul.bf16.gmra.mxu0 %v1033
    %v1255 = vpop.f32.mrf.mxu0
    %v1256 = vadd.f32 %v972, %v1255
    %v1257 = vpop.f32.mrf.mxu0
    %v1258 = vadd.f32 %v972, %v1257
    %1259 = vmatmul.bf16.gmra.mxu0 %v1036
    %v1260 = vpop.f32.mrf.mxu0
    %v1261 = vadd.f32 %v972, %v1260
    %v1262 = vpop.f32.mrf.mxu0
    %v1263 = vadd.f32 %v972, %v1262
    %1264 = vmatmul.bf16.gmra.mxu0 %v1039
    %v1265 = vpop.f32.mrf.mxu0
    %v1266 = vadd.f32 %v972, %v1265
    %v1267 = vpop.f32.mrf.mxu0
    %v1268 = vadd.f32 %v972, %v1267
    %1269 = vmatmul.bf16.gmra.mxu0 %v1042
    %v1270 = vpop.f32.mrf.mxu0
    %v1271 = vadd.f32 %v972, %v1270
    %v1272 = vpop.f32.mrf.mxu0
    %v1273 = vadd.f32 %v972, %v1272
    %1274 = vmatmul.bf16.gmra.mxu0 %v1045
    %v1275 = vpop.f32.mrf.mxu0
    %v1276 = vadd.f32 %v972, %v1275
    %v1277 = vpop.f32.mrf.mxu0
    %v1278 = vadd.f32 %v972, %v1277
    %1279 = vmatmul.bf16.gmra.mxu0 %v1048
    %v1280 = vpop.f32.mrf.mxu0
    %v1281 = vadd.f32 %v972, %v1280
    %v1282 = vpop.f32.mrf.mxu0
    %v1283 = vadd.f32 %v972, %v1282
    %1284 = vmatmul.bf16.gmra.mxu0 %v1051
    %v1285 = vpop.f32.mrf.mxu0
    %v1286 = vadd.f32 %v972, %v1285
    %v1287 = vpop.f32.mrf.mxu0
    %v1288 = vadd.f32 %v972, %v1287
    %1289 = vmatmul.bf16.gmra.mxu0 %v1054
    %v1290 = vpop.f32.mrf.mxu0
    %v1291 = vadd.f32 %v972, %v1290
    %v1292 = vpop.f32.mrf.mxu0
    %v1293 = vadd.f32 %v972, %v1292
    %1294 = vmatmul.bf16.gmra.mxu0 %v1057
    %v1295 = vpop.f32.mrf.mxu0
    %v1296 = vadd.f32 %v972, %v1295
    %v1297 = vpop.f32.mrf.mxu0
    %v1298 = vadd.f32 %v972, %v1297
    %1299 = vmatmul.bf16.gmra.mxu0 %v1060
    %v1300 = vpop.f32.mrf.mxu0
    %v1301 = vadd.f32 %v972, %v1300
    %v1302 = vpop.f32.mrf.mxu0
    %v1303 = vadd.f32 %v972, %v1302
    %1304 = vmatmul.bf16.gmra.mxu0 %v1063
    %v1305 = vpop.f32.mrf.mxu0
    %v1306 = vadd.f32 %v972, %v1305
    %v1307 = vpop.f32.mrf.mxu0
    %v1308 = vadd.f32 %v972, %v1307
    %1309 = vmatmul.bf16.gmra.mxu0 %v1066
    %v1310 = vpop.f32.mrf.mxu0
    %v1311 = vadd.f32 %v972, %v1310
    %v1312 = vpop.f32.mrf.mxu0
    %v1313 = vadd.f32 %v972, %v1312
    %1314 = vmatmul.bf16.gmra.mxu0 %v1069
    %v1315 = vpop.f32.mrf.mxu0
    %v1316 = vadd.f32 %v972, %v1315
    %v1317 = vpop.f32.mrf.mxu0
    %v1318 = vadd.f32 %v972, %v1317
    %1319 = vmatmul.bf16.gmra.mxu0 %v1072
    %v1320 = vpop.f32.mrf.mxu0
    %v1321 = vadd.f32 %v972, %v1320
    %v1322 = vpop.f32.mrf.mxu0
    %v1323 = vadd.f32 %v972, %v1322
    %1324 = vmatmul.bf16.gmra.mxu0 %v1075
    %v1325 = vpop.f32.mrf.mxu0
    %v1326 = vadd.f32 %v972, %v1325
    %v1327 = vpop.f32.mrf.mxu0
    %v1328 = vadd.f32 %v972, %v1327
    %1329 = vmatmul.bf16.gmra.mxu0 %v1078
    %v1330 = vpop.f32.mrf.mxu0
    %v1331 = vadd.f32 %v972, %v1330
    %v1332 = vpop.f32.mrf.mxu0
    %v1333 = vadd.f32 %v972, %v1332
    %1334 = vmatmul.bf16.gmra.mxu0 %v1081
    %v1335 = vpop.f32.mrf.mxu0
    %v1336 = vadd.f32 %v972, %v1335
    %v1337 = vpop.f32.mrf.mxu0
    %v1338 = vadd.f32 %v972, %v1337
    %1339 = vmatmul.bf16.gmra.mxu0 %v1084
    %v1340 = vpop.f32.mrf.mxu0
    %v1341 = vadd.f32 %v972, %v1340
    %v1342 = vpop.f32.mrf.mxu0
    %v1343 = vadd.f32 %v972, %v1342
    %1344 = vmatmul.bf16.gmra.mxu0 %v1087
    %v1345 = vpop.f32.mrf.mxu0
    %v1346 = vadd.f32 %v972, %v1345
    %v1347 = vpop.f32.mrf.mxu0
    %v1348 = vadd.f32 %v972, %v1347
    %1349 = vmatmul.bf16.gmra.mxu0 %v1090
    %v1350 = vpop.f32.mrf.mxu0
    %v1351 = vadd.f32 %v972, %v1350
    %v1352 = vpop.f32.mrf.mxu0
    %v1353 = vadd.f32 %v972, %v1352
    %1354 = vmatmul.bf16.gmra.mxu0 %v1093
    %v1355 = vpop.f32.mrf.mxu0
    %v1356 = vadd.f32 %v972, %v1355
    %v1357 = vpop.f32.mrf.mxu0
    %v1358 = vadd.f32 %v972, %v1357
    %1359 = vmatmul.bf16.gmra.mxu0 %v1096
    %v1360 = vpop.f32.mrf.mxu0
    %v1361 = vadd.f32 %v972, %v1360
    %v1362 = vpop.f32.mrf.mxu0
    %v1363 = vadd.f32 %v972, %v1362
    %1364 = vmatmul.bf16.gmra.mxu0 %v1099
    %v1365 = vpop.f32.mrf.mxu0
    %v1366 = vadd.f32 %v972, %v1365
    %v1367 = vpop.f32.mrf.mxu0
    %v1368 = vadd.f32 %v972, %v1367
    %1369 = vmatmul.bf16.gmra.mxu0 %v1102
    %v1370 = vpop.f32.mrf.mxu0
    %v1371 = vadd.f32 %v972, %v1370
    %v1372 = vpop.f32.mrf.mxu0
    %v1373 = vadd.f32 %v972, %v1372
    %1374 = vmatmul.bf16.gmra.mxu0 %v1105
    %v1375 = vpop.f32.mrf.mxu0
    %v1376 = vadd.f32 %v972, %v1375
    %v1377 = vpop.f32.mrf.mxu0
    %v1378 = vadd.f32 %v972, %v1377
    %1379 = vmatmul.bf16.gmra.mxu0 %v1108
    %v1380 = vpop.f32.mrf.mxu0
    %v1381 = vadd.f32 %v972, %v1380
    %v1382 = vpop.f32.mrf.mxu0
    %v1383 = vadd.f32 %v972, %v1382
    %1384 = vmatmul.bf16.gmra.mxu0 %v1111
    %v1385 = vpop.f32.mrf.mxu0
    %v1386 = vadd.f32 %v972, %v1385
    %v1387 = vpop.f32.mrf.mxu0
    %v1388 = vadd.f32 %v972, %v1387
    %1389 = vmatmul.bf16.gmra.mxu0 %v1114
    %v1390 = vpop.f32.mrf.mxu0
    %v1391 = vadd.f32 %v972, %v1390
    %v1392 = vpop.f32.mrf.mxu0
    %v1393 = vadd.f32 %v972, %v1392
    %1394 = vmatmul.bf16.gmra.mxu0 %v1117
    %v1395 = vpop.f32.mrf.mxu0
    %v1396 = vadd.f32 %v972, %v1395
    %v1397 = vpop.f32.mrf.mxu0
    %v1398 = vadd.f32 %v972, %v1397
    %1399 = vmatmul.bf16.gmra.mxu0 %v1120
    %v1400 = vpop.f32.mrf.mxu0
    %v1401 = vadd.f32 %v972, %v1400
    %v1402 = vpop.f32.mrf.mxu0
    %v1403 = vadd.f32 %v972, %v1402
    %1404 = vmatmul.bf16.gmra.mxu0 %v1123
    %v1405 = vpop.f32.mrf.mxu0
    %v1406 = vadd.f32 %v972, %v1405
    %v1407 = vpop.f32.mrf.mxu0
    %v1408 = vadd.f32 %v972, %v1407
    %1409 = vmatmul.bf16.gmra.mxu0 %v1126
    %v1410 = vpop.f32.mrf.mxu0
    %v1411 = vadd.f32 %v972, %v1410
    %v1412 = vpop.f32.mrf.mxu0
    %v1413 = vadd.f32 %v972, %v1412
    %1414 = vmatmul.bf16.gmra.mxu0 %v1129
    %v1415 = vpop.f32.mrf.mxu0
    %v1416 = vadd.f32 %v972, %v1415
    %v1417 = vpop.f32.mrf.mxu0
    %v1418 = vadd.f32 %v972, %v1417
    %1419 = vmatmul.bf16.gmra.mxu0 %v1132
    %v1420 = vpop.f32.mrf.mxu0
    %v1421 = vadd.f32 %v972, %v1420
    %v1422 = vpop.f32.mrf.mxu0
    %v1423 = vadd.f32 %v972, %v1422
    %1424 = vmatmul.bf16.gmra.mxu0 %v1135
    %v1425 = vpop.f32.mrf.mxu0
    %v1426 = vadd.f32 %v972, %v1425
    %v1427 = vpop.f32.mrf.mxu0
    %v1428 = vadd.f32 %v972, %v1427
    %1429 = vmatmul.bf16.gmra.mxu0 %v1138
    %v1430 = vpop.f32.mrf.mxu0
    %v1431 = vadd.f32 %v972, %v1430
    %v1432 = vpop.f32.mrf.mxu0
    %v1433 = vadd.f32 %v972, %v1432
    %1434 = vmatmul.bf16.gmra.mxu0 %v1141
    %v1435 = vpop.f32.mrf.mxu0
    %v1436 = vadd.f32 %v972, %v1435
    %v1437 = vpop.f32.mrf.mxu0
    %v1438 = vadd.f32 %v972, %v1437
    %1439 = vmatmul.bf16.gmra.mxu0 %v1144
    %v1440 = vpop.f32.mrf.mxu0
    %v1441 = vadd.f32 %v972, %v1440
    %v1442 = vpop.f32.mrf.mxu0
    %v1443 = vadd.f32 %v972, %v1442
    %1444 = vmatmul.bf16.gmra.mxu0 %v1147
    %v1445 = vpop.f32.mrf.mxu0
    %v1446 = vadd.f32 %v972, %v1445
    %v1447 = vpop.f32.mrf.mxu0
    %v1448 = vadd.f32 %v972, %v1447
    %1449 = vmatmul.bf16.gmra.mxu0 %v1150
    %v1450 = vpop.f32.mrf.mxu0
    %v1451 = vadd.f32 %v972, %v1450
    %v1452 = vpop.f32.mrf.mxu0
    %v1453 = vadd.f32 %v972, %v1452
    %1454 = vmatmul.bf16.gmra.mxu0 %v1153
    %v1455 = vpop.f32.mrf.mxu0
    %v1456 = vadd.f32 %v972, %v1455
    %v1457 = vpop.f32.mrf.mxu0
    %v1458 = vadd.f32 %v972, %v1457
    %1459 = vmatmul.bf16.gmra.mxu0 %v1156
    %v1460 = vpop.f32.mrf.mxu0
    %v1461 = vadd.f32 %v972, %v1460
    %v1462 = vpop.f32.mrf.mxu0
    %v1463 = vadd.f32 %v972, %v1462
    %1464 = vmatmul.bf16.gmra.mxu0 %v1159
    %v1465 = vpop.f32.mrf.mxu0
    %v1466 = vadd.f32 %v972, %v1465
    %v1467 = vpop.f32.mrf.mxu0
    %v1468 = vadd.f32 %v972, %v1467
    %1469 = vmatmul.bf16.gmra.mxu0 %v1162
    %v1470 = vpop.f32.mrf.mxu0
    %v1471 = vadd.f32 %v972, %v1470
    %v1472 = vpop.f32.mrf.mxu0
    %v1473 = vadd.f32 %v972, %v1472
    %1474 = vmatmul.bf16.gmra.mxu0 %v1165
    %v1475 = vpop.f32.mrf.mxu0
    %v1476 = vadd.f32 %v972, %v1475
    %v1477 = vpop.f32.mrf.mxu0
    %v1478 = vadd.f32 %v972, %v1477
    %1479 = vmatmul.bf16.gmra.mxu0 %v1168
    %v1480 = vpop.f32.mrf.mxu0
    %v1481 = vadd.f32 %v972, %v1480
    %v1482 = vpop.f32.mrf.mxu0
    %v1483 = vadd.f32 %v972, %v1482
    %1484 = vmatmul.bf16.gmra.mxu0 %v1171
    %v1485 = vpop.f32.mrf.mxu0
    %v1486 = vadd.f32 %v972, %v1485
    %v1487 = vpop.f32.mrf.mxu0
    %v1488 = vadd.f32 %v972, %v1487
    %1489 = vmatmul.bf16.gmra.mxu0 %v1174
    %v1490 = vpop.f32.mrf.mxu0
    %v1491 = vadd.f32 %v972, %v1490
    %v1492 = vpop.f32.mrf.mxu0
    %v1493 = vadd.f32 %v972, %v1492
    %1494 = vmatmul.bf16.gmra.mxu0 %v1177
    %v1495 = vpop.f32.mrf.mxu0
    %v1496 = vadd.f32 %v972, %v1495
    %v1497 = vpop.f32.mrf.mxu0
    %v1498 = vadd.f32 %v972, %v1497
    %1499 = vmatmul.bf16.gmra.mxu0 %v1180
    %v1500 = vpop.f32.mrf.mxu0
    %v1501 = vadd.f32 %v972, %v1500
    %v1502 = vpop.f32.mrf.mxu0
    %v1503 = vadd.f32 %v972, %v1502
    %1504 = vmatmul.bf16.gmra.mxu0 %v1183
    %v1505 = vpop.f32.mrf.mxu0
    %v1506 = vadd.f32 %v972, %v1505
    %v1507 = vpop.f32.mrf.mxu0
    %v1508 = vadd.f32 %v972, %v1507
    %1509 = vmatmul.bf16.gmra.mxu0 %v1186
    %v1510 = vpop.f32.mrf.mxu0
    %v1511 = vadd.f32 %v972, %v1510
    %v1512 = vpop.f32.mrf.mxu0
    %v1513 = vadd.f32 %v972, %v1512
    %1514 = vmatmul.bf16.gmra.mxu0 %v1189
    %v1515 = vpop.f32.mrf.mxu0
    %v1516 = vadd.f32 %v972, %v1515
    %v1517 = vpop.f32.mrf.mxu0
    %v1518 = vadd.f32 %v972, %v1517
    %1519 = vdwg.mxu0
    %v1520 = vmax.f32 %v1201, 0.0
    %v1521 = vmax.f32 %v1203, 0.0
    %v1522 = vmax.f32 %v1206, 0.0
    %v1523 = vmax.f32 %v1208, 0.0
    %v1524 = vmax.f32 %v1211, 0.0
    %v1525 = vmax.f32 %v1213, 0.0
    %v1526 = vmax.f32 %v1216, 0.0
    %v1527 = vmax.f32 %v1218, 0.0
    %v1528 = vmax.f32 %v1221, 0.0
    %v1529 = vmax.f32 %v1223, 0.0
    %v1530 = vmax.f32 %v1226, 0.0
    %v1531 = vmax.f32 %v1228, 0.0
    %v1532 = vmax.f32 %v1231, 0.0
    %v1533 = vmax.f32 %v1233, 0.0
    %v1534 = vmax.f32 %v1236, 0.0
    %v1535 = vmax.f32 %v1238, 0.0
    %v1536 = vmax.f32 %v1241, 0.0
    %v1537 = vmax.f32 %v1243, 0.0
    %v1538 = vmax.f32 %v1246, 0.0
    %v1539 = vmax.f32 %v1248, 0.0
    %v1540 = vmax.f32 %v1251, 0.0
    %v1541 = vmax.f32 %v1253, 0.0
    %v1542 = vmax.f32 %v1256, 0.0
    %v1543 = vmax.f32 %v1258, 0.0
    %v1544 = vmax.f32 %v1261, 0.0
    %v1545 = vmax.f32 %v1263, 0.0
    %v1546 = vmax.f32 %v1266, 0.0
    %v1547 = vmax.f32 %v1268, 0.0
    %v1548 = vmax.f32 %v1271, 0.0
    %v1549 = vmax.f32 %v1273, 0.0
    %v1550 = vmax.f32 %v1276, 0.0
    %v1551 = vmax.f32 %v1278, 0.0
    %v1552 = vmax.f32 %v1281, 0.0
    %v1553 = vmax.f32 %v1283, 0.0
    %v1554 = vmax.f32 %v1286, 0.0
    %v1555 = vmax.f32 %v1288, 0.0
    %v1556 = vmax.f32 %v1291, 0.0
    %v1557 = vmax.f32 %v1293, 0.0
    %v1558 = vmax.f32 %v1296, 0.0
    %v1559 = vmax.f32 %v1298, 0.0
    %v1560 = vmax.f32 %v1301, 0.0
    %v1561 = vmax.f32 %v1303, 0.0
    %v1562 = vmax.f32 %v1306, 0.0
    %v1563 = vmax.f32 %v1308, 0.0
    %v1564 = vmax.f32 %v1311, 0.0
    %v1565 = vmax.f32 %v1313, 0.0
    %v1566 = vmax.f32 %v1316, 0.0
    %v1567 = vmax.f32 %v1318, 0.0
    %v1568 = vmax.f32 %v1321, 0.0
    %v1569 = vmax.f32 %v1323, 0.0
    %v1570 = vmax.f32 %v1326, 0.0
    %v1571 = vmax.f32 %v1328, 0.0
    %v1572 = vmax.f32 %v1331, 0.0
    %v1573 = vmax.f32 %v1333, 0.0
    %v1574 = vmax.f32 %v1336, 0.0
    %v1575 = vmax.f32 %v1338, 0.0
    %v1576 = vmax.f32 %v1341, 0.0
    %v1577 = vmax.f32 %v1343, 0.0
    %v1578 = vmax.f32 %v1346, 0.0
    %v1579 = vmax.f32 %v1348, 0.0
    %v1580 = vmax.f32 %v1351, 0.0
    %v1581 = vmax.f32 %v1353, 0.0
    %v1582 = vmax.f32 %v1356, 0.0
    %v1583 = vmax.f32 %v1358, 0.0
    %v1584 = vmax.f32 %v1361, 0.0
    %v1585 = vmax.f32 %v1363, 0.0
    %v1586 = vmax.f32 %v1366, 0.0
    %v1587 = vmax.f32 %v1368, 0.0
    %v1588 = vmax.f32 %v1371, 0.0
    %v1589 = vmax.f32 %v1373, 0.0
    %v1590 = vmax.f32 %v1376, 0.0
    %v1591 = vmax.f32 %v1378, 0.0
    %v1592 = vmax.f32 %v1381, 0.0
    %v1593 = vmax.f32 %v1383, 0.0
    %v1594 = vmax.f32 %v1386, 0.0
    %v1595 = vmax.f32 %v1388, 0.0
    %v1596 = vmax.f32 %v1391, 0.0
    %v1597 = vmax.f32 %v1393, 0.0
    %v1598 = vmax.f32 %v1396, 0.0
    %v1599 = vmax.f32 %v1398, 0.0
    %v1600 = vmax.f32 %v1401, 0.0
    %v1601 = vmax.f32 %v1403, 0.0
    %v1602 = vmax.f32 %v1406, 0.0
    %v1603 = vmax.f32 %v1408, 0.0
    %v1604 = vmax.f32 %v1411, 0.0
    %v1605 = vmax.f32 %v1413, 0.0
    %v1606 = vmax.f32 %v1416, 0.0
    %v1607 = vmax.f32 %v1418, 0.0
    %v1608 = vmax.f32 %v1421, 0.0
    %v1609 = vmax.f32 %v1423, 0.0
    %v1610 = vmax.f32 %v1426, 0.0
    %v1611 = vmax.f32 %v1428, 0.0
    %v1612 = vmax.f32 %v1431, 0.0
    %v1613 = vmax.f32 %v1433, 0.0
    %v1614 = vmax.f32 %v1436, 0.0
    %v1615 = vmax.f32 %v1438, 0.0
    %v1616 = vmax.f32 %v1441, 0.0
    %v1617 = vmax.f32 %v1443, 0.0
    %v1618 = vmax.f32 %v1446, 0.0
    %v1619 = vmax.f32 %v1448, 0.0
    %v1620 = vmax.f32 %v1451, 0.0
    %v1621 = vmax.f32 %v1453, 0.0
    %v1622 = vmax.f32 %v1456, 0.0
    %v1623 = vmax.f32 %v1458, 0.0
    %v1624 = vmax.f32 %v1461, 0.0
    %v1625 = vmax.f32 %v1463, 0.0
    %v1626 = vmax.f32 %v1466, 0.0
    %v1627 = vmax.f32 %v1468, 0.0
    %v1628 = vmax.f32 %v1471, 0.0
    %v1629 = vmax.f32 %v1473, 0.0
    %v1630 = vmax.f32 %v1476, 0.0
    %v1631 = vmax.f32 %v1478, 0.0
    %v1632 = vmax.f32 %v1481, 0.0
    %v1633 = vmax.f32 %v1483, 0.0
    %v1634 = vmax.f32 %v1486, 0.0
    %v1635 = vmax.f32 %v1488, 0.0
    %v1636 = vmax.f32 %v1491, 0.0
    %v1637 = vmax.f32 %v1493, 0.0
    %v1638 = vmax.f32 %v1496, 0.0
    %v1639 = vmax.f32 %v1498, 0.0
    %v1640 = vmax.f32 %v1501, 0.0
    %v1641 = vmax.f32 %v1503, 0.0
    %v1642 = vmax.f32 %v1506, 0.0
    %v1643 = vmax.f32 %v1508, 0.0
    %v1644 = vmax.f32 %v1511, 0.0
    %v1645 = vmax.f32 %v1513, 0.0
    %v1646 = vmax.f32 %v1516, 0.0
    %v1647 = vmax.f32 %v1518, 0.0
    %v1648 = vpack.c.bf16 %v1521, %v1520
    %v1649 = vpack.c.bf16 %v1523, %v1522
    %v1650 = vpack.c.bf16 %v1525, %v1524
    %v1651 = vpack.c.bf16 %v1527, %v1526
    %v1652 = vpack.c.bf16 %v1529, %v1528
    %v1653 = vpack.c.bf16 %v1531, %v1530
    %v1654 = vpack.c.bf16 %v1533, %v1532
    %v1655 = vpack.c.bf16 %v1535, %v1534
    %v1656 = vpack.c.bf16 %v1537, %v1536
    %v1657 = vpack.c.bf16 %v1539, %v1538
    %v1658 = vpack.c.bf16 %v1541, %v1540
    %v1659 = vpack.c.bf16 %v1543, %v1542
    %v1660 = vpack.c.bf16 %v1545, %v1544
    %v1661 = vpack.c.bf16 %v1547, %v1546
    %v1662 = vpack.c.bf16 %v1549, %v1548
    %v1663 = vpack.c.bf16 %v1551, %v1550
    %v1664 = vpack.c.bf16 %v1553, %v1552
    %v1665 = vpack.c.bf16 %v1555, %v1554
    %v1666 = vpack.c.bf16 %v1557, %v1556
    %v1667 = vpack.c.bf16 %v1559, %v1558
    %v1668 = vpack.c.bf16 %v1561, %v1560
    %v1669 = vpack.c.bf16 %v1563, %v1562
    %v1670 = vpack.c.bf16 %v1565, %v1564
    %v1671 = vpack.c.bf16 %v1567, %v1566
    %v1672 = vpack.c.bf16 %v1569, %v1568
    %v1673 = vpack.c.bf16 %v1571, %v1570
    %v1674 = vpack.c.bf16 %v1573, %v1572
    %v1675 = vpack.c.bf16 %v1575, %v1574
    %v1676 = vpack.c.bf16 %v1577, %v1576
    %v1677 = vpack.c.bf16 %v1579, %v1578
    %v1678 = vpack.c.bf16 %v1581, %v1580
    %v1679 = vpack.c.bf16 %v1583, %v1582
    %v1680 = vpack.c.bf16 %v1585, %v1584
    %v1681 = vpack.c.bf16 %v1587, %v1586
    %v1682 = vpack.c.bf16 %v1589, %v1588
    %v1683 = vpack.c.bf16 %v1591, %v1590
    %v1684 = vpack.c.bf16 %v1593, %v1592
    %v1685 = vpack.c.bf16 %v1595, %v1594
    %v1686 = vpack.c.bf16 %v1597, %v1596
    %v1687 = vpack.c.bf16 %v1599, %v1598
    %v1688 = vpack.c.bf16 %v1601, %v1600
    %v1689 = vpack.c.bf16 %v1603, %v1602
    %v1690 = vpack.c.bf16 %v1605, %v1604
    %v1691 = vpack.c.bf16 %v1607, %v1606
    %v1692 = vpack.c.bf16 %v1609, %v1608
    %v1693 = vpack.c.bf16 %v1611, %v1610
    %v1694 = vpack.c.bf16 %v1613, %v1612
    %v1695 = vpack.c.bf16 %v1615, %v1614
    %v1696 = vpack.c.bf16 %v1617, %v1616
    %v1697 = vpack.c.bf16 %v1619, %v1618
    %v1698 = vpack.c.bf16 %v1621, %v1620
    %v1699 = vpack.c.bf16 %v1623, %v1622
    %v1700 = vpack.c.bf16 %v1625, %v1624
    %v1701 = vpack.c.bf16 %v1627, %v1626
    %v1702 = vpack.c.bf16 %v1629, %v1628
    %v1703 = vpack.c.bf16 %v1631, %v1630
    %v1704 = vpack.c.bf16 %v1633, %v1632
    %v1705 = vpack.c.bf16 %v1635, %v1634
    %v1706 = vpack.c.bf16 %v1637, %v1636
    %v1707 = vpack.c.bf16 %v1639, %v1638
    %v1708 = vpack.c.bf16 %v1641, %v1640
    %v1709 = vpack.c.bf16 %v1643, %v1642
    %v1710 = vpack.c.bf16 %v1645, %v1644
    %v1711 = vpack.c.bf16 %v1647, %v1646
    %v1712 = vld [vmem:[%s5] sm:$0xf]
    %v1713 = vld [vmem:[%s5 + $0x4] sm:$0xf]
    %v1714 = vld [vmem:[%s5 + $0x8] sm:$0xf]
    %v1715 = vld [vmem:[%s5 + $0xc] sm:$0xf]
    %v1716 = vld [vmem:[%s6] sm:$0x1]
    %v1718 = vperm.slane %v1716, 0
    %v1724 = vunpack.c.l.b16 %v1712
    %v1725 = vunpack.c.l.b16 %v1713
    %v1726 = vunpack.c.l.b16 %v1714
    %v1727 = vunpack.c.l.b16 %v1715
    %v1728 = vpack.c.b16 %v1725, %v1724
    %v1729 = vpack.c.b16 %v1727, %v1726
    %v1733 = vsel %vm248, %v1648, 0
    %v1736 = vsel %vm248, %v1649, 0
    %v1739 = vsel %vm248, %v1650, 0
    %v1742 = vsel %vm248, %v1651, 0
    %v1745 = vsel %vm248, %v1652, 0
    %v1748 = vsel %vm248, %v1653, 0
    %v1751 = vsel %vm248, %v1654, 0
    %v1754 = vsel %vm248, %v1655, 0
    %v1757 = vsel %vm248, %v1656, 0
    %v1760 = vsel %vm248, %v1657, 0
    %v1763 = vsel %vm248, %v1658, 0
    %v1766 = vsel %vm248, %v1659, 0
    %v1769 = vsel %vm248, %v1660, 0
    %v1772 = vsel %vm248, %v1661, 0
    %v1775 = vsel %vm248, %v1662, 0
    %v1778 = vsel %vm248, %v1663, 0
    %v1781 = vsel %vm248, %v1664, 0
    %v1784 = vsel %vm248, %v1665, 0
    %v1787 = vsel %vm248, %v1666, 0
    %v1790 = vsel %vm248, %v1667, 0
    %v1793 = vsel %vm248, %v1668, 0
    %v1796 = vsel %vm248, %v1669, 0
    %v1799 = vsel %vm248, %v1670, 0
    %v1802 = vsel %vm248, %v1671, 0
    %v1805 = vsel %vm248, %v1672, 0
    %v1808 = vsel %vm248, %v1673, 0
    %v1811 = vsel %vm248, %v1674, 0
    %v1814 = vsel %vm248, %v1675, 0
    %v1817 = vsel %vm248, %v1676, 0
    %v1820 = vsel %vm248, %v1677, 0
    %v1823 = vsel %vm248, %v1678, 0
    %v1826 = vsel %vm248, %v1679, 0
    %v1829 = vsel %vm248, %v1680, 0
    %v1832 = vsel %vm248, %v1681, 0
    %v1835 = vsel %vm248, %v1682, 0
    %v1838 = vsel %vm248, %v1683, 0
    %v1841 = vsel %vm248, %v1684, 0
    %v1844 = vsel %vm248, %v1685, 0
    %v1847 = vsel %vm248, %v1686, 0
    %v1850 = vsel %vm248, %v1687, 0
    %v1853 = vsel %vm248, %v1688, 0
    %v1856 = vsel %vm248, %v1689, 0
    %v1859 = vsel %vm248, %v1690, 0
    %v1862 = vsel %vm248, %v1691, 0
    %v1865 = vsel %vm248, %v1692, 0
    %v1868 = vsel %vm248, %v1693, 0
    %v1871 = vsel %vm248, %v1694, 0
    %v1874 = vsel %vm248, %v1695, 0
    %v1877 = vsel %vm248, %v1696, 0
    %v1880 = vsel %vm248, %v1697, 0
    %v1883 = vsel %vm248, %v1698, 0
    %v1886 = vsel %vm248, %v1699, 0
    %v1889 = vsel %vm248, %v1700, 0
    %v1892 = vsel %vm248, %v1701, 0
    %v1895 = vsel %vm248, %v1702, 0
    %v1898 = vsel %vm248, %v1703, 0
    %v1901 = vsel %vm248, %v1704, 0
    %v1904 = vsel %vm248, %v1705, 0
    %v1907 = vsel %vm248, %v1706, 0
    %v1910 = vsel %vm248, %v1707, 0
    %v1913 = vsel %vm248, %v1708, 0
    %v1916 = vsel %vm248, %v1709, 0
    %v1919 = vsel %vm248, %v1710, 0
    %v1922 = vsel %vm248, %v1711, 0
    %1924 = vmatpush.bf16.msra.mxu0 0
    %1925 = vmatpush.bf16.msra.mxu0 0
    %1926 = vmatpush.bf16.msra.mxu0 0
    %1927 = vmatpush.bf16.msra.mxu0 0
    %1928 = vmatpush.bf16.msra.mxu0 0
    %1929 = vmatpush.bf16.msra.mxu0 0
    %1930 = vmatpush.bf16.msra.mxu0 %v1729
    %1931 = vmatpush.bf16.msra.mxu0 %v1728
    %1932 = vmatmul.bf16.gmra.mxu0 %v1733
    %v1933 = vpop.f32.mrf.mxu0
    %v1934 = vadd.f32 %v1718, %v1933
    %v1935 = vpop.f32.mrf.mxu0
    %v1936 = vadd.f32 %v1718, %v1935
    %1937 = vmatmul.bf16.gmra.mxu0 %v1736
    %v1938 = vpop.f32.mrf.mxu0
    %v1939 = vadd.f32 %v1718, %v1938
    %v1940 = vpop.f32.mrf.mxu0
    %v1941 = vadd.f32 %v1718, %v1940
    %1942 = vmatmul.bf16.gmra.mxu0 %v1739
    %v1943 = vpop.f32.mrf.mxu0
    %v1944 = vadd.f32 %v1718, %v1943
    %v1945 = vpop.f32.mrf.mxu0
    %v1946 = vadd.f32 %v1718, %v1945
    %1947 = vmatmul.bf16.gmra.mxu0 %v1742
    %v1948 = vpop.f32.mrf.mxu0
    %v1949 = vadd.f32 %v1718, %v1948
    %v1950 = vpop.f32.mrf.mxu0
    %v1951 = vadd.f32 %v1718, %v1950
    %1952 = vmatmul.bf16.gmra.mxu0 %v1745
    %v1953 = vpop.f32.mrf.mxu0
    %v1954 = vadd.f32 %v1718, %v1953
    %v1955 = vpop.f32.mrf.mxu0
    %v1956 = vadd.f32 %v1718, %v1955
    %1957 = vmatmul.bf16.gmra.mxu0 %v1748
    %v1958 = vpop.f32.mrf.mxu0
    %v1959 = vadd.f32 %v1718, %v1958
    %v1960 = vpop.f32.mrf.mxu0
    %v1961 = vadd.f32 %v1718, %v1960
    %1962 = vmatmul.bf16.gmra.mxu0 %v1751
    %v1963 = vpop.f32.mrf.mxu0
    %v1964 = vadd.f32 %v1718, %v1963
    %v1965 = vpop.f32.mrf.mxu0
    %v1966 = vadd.f32 %v1718, %v1965
    %1967 = vmatmul.bf16.gmra.mxu0 %v1754
    %v1968 = vpop.f32.mrf.mxu0
    %v1969 = vadd.f32 %v1718, %v1968
    %v1970 = vpop.f32.mrf.mxu0
    %v1971 = vadd.f32 %v1718, %v1970
    %1972 = vmatmul.bf16.gmra.mxu0 %v1757
    %v1973 = vpop.f32.mrf.mxu0
    %v1974 = vadd.f32 %v1718, %v1973
    %v1975 = vpop.f32.mrf.mxu0
    %v1976 = vadd.f32 %v1718, %v1975
    %1977 = vmatmul.bf16.gmra.mxu0 %v1760
    %v1978 = vpop.f32.mrf.mxu0
    %v1979 = vadd.f32 %v1718, %v1978
    %v1980 = vpop.f32.mrf.mxu0
    %v1981 = vadd.f32 %v1718, %v1980
    %1982 = vmatmul.bf16.gmra.mxu0 %v1763
    %v1983 = vpop.f32.mrf.mxu0
    %v1984 = vadd.f32 %v1718, %v1983
    %v1985 = vpop.f32.mrf.mxu0
    %v1986 = vadd.f32 %v1718, %v1985
    %1987 = vmatmul.bf16.gmra.mxu0 %v1766
    %v1988 = vpop.f32.mrf.mxu0
    %v1989 = vadd.f32 %v1718, %v1988
    %v1990 = vpop.f32.mrf.mxu0
    %v1991 = vadd.f32 %v1718, %v1990
    %1992 = vmatmul.bf16.gmra.mxu0 %v1769
    %v1993 = vpop.f32.mrf.mxu0
    %v1994 = vadd.f32 %v1718, %v1993
    %v1995 = vpop.f32.mrf.mxu0
    %v1996 = vadd.f32 %v1718, %v1995
    %1997 = vmatmul.bf16.gmra.mxu0 %v1772
    %v1998 = vpop.f32.mrf.mxu0
    %v1999 = vadd.f32 %v1718, %v1998
    %v2000 = vpop.f32.mrf.mxu0
    %v2001 = vadd.f32 %v1718, %v2000
    %2002 = vmatmul.bf16.gmra.mxu0 %v1775
    %v2003 = vpop.f32.mrf.mxu0
    %v2004 = vadd.f32 %v1718, %v2003
    %v2005 = vpop.f32.mrf.mxu0
    %v2006 = vadd.f32 %v1718, %v2005
    %2007 = vmatmul.bf16.gmra.mxu0 %v1778
    %v2008 = vpop.f32.mrf.mxu0
    %v2009 = vadd.f32 %v1718, %v2008
    %v2010 = vpop.f32.mrf.mxu0
    %v2011 = vadd.f32 %v1718, %v2010
    %2012 = vmatmul.bf16.gmra.mxu0 %v1781
    %v2013 = vpop.f32.mrf.mxu0
    %v2014 = vadd.f32 %v1718, %v2013
    %v2015 = vpop.f32.mrf.mxu0
    %v2016 = vadd.f32 %v1718, %v2015
    %2017 = vmatmul.bf16.gmra.mxu0 %v1784
    %v2018 = vpop.f32.mrf.mxu0
    %v2019 = vadd.f32 %v1718, %v2018
    %v2020 = vpop.f32.mrf.mxu0
    %v2021 = vadd.f32 %v1718, %v2020
    %2022 = vmatmul.bf16.gmra.mxu0 %v1787
    %v2023 = vpop.f32.mrf.mxu0
    %v2024 = vadd.f32 %v1718, %v2023
    %v2025 = vpop.f32.mrf.mxu0
    %v2026 = vadd.f32 %v1718, %v2025
    %2027 = vmatmul.bf16.gmra.mxu0 %v1790
    %v2028 = vpop.f32.mrf.mxu0
    %v2029 = vadd.f32 %v1718, %v2028
    %v2030 = vpop.f32.mrf.mxu0
    %v2031 = vadd.f32 %v1718, %v2030
    %2032 = vmatmul.bf16.gmra.mxu0 %v1793
    %v2033 = vpop.f32.mrf.mxu0
    %v2034 = vadd.f32 %v1718, %v2033
    %v2035 = vpop.f32.mrf.mxu0
    %v2036 = vadd.f32 %v1718, %v2035
    %2037 = vmatmul.bf16.gmra.mxu0 %v1796
    %v2038 = vpop.f32.mrf.mxu0
    %v2039 = vadd.f32 %v1718, %v2038
    %v2040 = vpop.f32.mrf.mxu0
    %v2041 = vadd.f32 %v1718, %v2040
    %2042 = vmatmul.bf16.gmra.mxu0 %v1799
    %v2043 = vpop.f32.mrf.mxu0
    %v2044 = vadd.f32 %v1718, %v2043
    %v2045 = vpop.f32.mrf.mxu0
    %v2046 = vadd.f32 %v1718, %v2045
    %2047 = vmatmul.bf16.gmra.mxu0 %v1802
    %v2048 = vpop.f32.mrf.mxu0
    %v2049 = vadd.f32 %v1718, %v2048
    %v2050 = vpop.f32.mrf.mxu0
    %v2051 = vadd.f32 %v1718, %v2050
    %2052 = vmatmul.bf16.gmra.mxu0 %v1805
    %v2053 = vpop.f32.mrf.mxu0
    %v2054 = vadd.f32 %v1718, %v2053
    %v2055 = vpop.f32.mrf.mxu0
    %v2056 = vadd.f32 %v1718, %v2055
    %2057 = vmatmul.bf16.gmra.mxu0 %v1808
    %v2058 = vpop.f32.mrf.mxu0
    %v2059 = vadd.f32 %v1718, %v2058
    %v2060 = vpop.f32.mrf.mxu0
    %v2061 = vadd.f32 %v1718, %v2060
    %2062 = vmatmul.bf16.gmra.mxu0 %v1811
    %v2063 = vpop.f32.mrf.mxu0
    %v2064 = vadd.f32 %v1718, %v2063
    %v2065 = vpop.f32.mrf.mxu0
    %v2066 = vadd.f32 %v1718, %v2065
    %2067 = vmatmul.bf16.gmra.mxu0 %v1814
    %v2068 = vpop.f32.mrf.mxu0
    %v2069 = vadd.f32 %v1718, %v2068
    %v2070 = vpop.f32.mrf.mxu0
    %v2071 = vadd.f32 %v1718, %v2070
    %2072 = vmatmul.bf16.gmra.mxu0 %v1817
    %v2073 = vpop.f32.mrf.mxu0
    %v2074 = vadd.f32 %v1718, %v2073
    %v2075 = vpop.f32.mrf.mxu0
    %v2076 = vadd.f32 %v1718, %v2075
    %2077 = vmatmul.bf16.gmra.mxu0 %v1820
    %v2078 = vpop.f32.mrf.mxu0
    %v2079 = vadd.f32 %v1718, %v2078
    %v2080 = vpop.f32.mrf.mxu0
    %v2081 = vadd.f32 %v1718, %v2080
    %2082 = vmatmul.bf16.gmra.mxu0 %v1823
    %v2083 = vpop.f32.mrf.mxu0
    %v2084 = vadd.f32 %v1718, %v2083
    %v2085 = vpop.f32.mrf.mxu0
    %v2086 = vadd.f32 %v1718, %v2085
    %2087 = vmatmul.bf16.gmra.mxu0 %v1826
    %v2088 = vpop.f32.mrf.mxu0
    %v2089 = vadd.f32 %v1718, %v2088
    %v2090 = vpop.f32.mrf.mxu0
    %v2091 = vadd.f32 %v1718, %v2090
    %2092 = vmatmul.bf16.gmra.mxu0 %v1829
    %v2093 = vpop.f32.mrf.mxu0
    %v2094 = vadd.f32 %v1718, %v2093
    %v2095 = vpop.f32.mrf.mxu0
    %v2096 = vadd.f32 %v1718, %v2095
    %2097 = vmatmul.bf16.gmra.mxu0 %v1832
    %v2098 = vpop.f32.mrf.mxu0
    %v2099 = vadd.f32 %v1718, %v2098
    %v2100 = vpop.f32.mrf.mxu0
    %v2101 = vadd.f32 %v1718, %v2100
    %2102 = vmatmul.bf16.gmra.mxu0 %v1835
    %v2103 = vpop.f32.mrf.mxu0
    %v2104 = vadd.f32 %v1718, %v2103
    %v2105 = vpop.f32.mrf.mxu0
    %v2106 = vadd.f32 %v1718, %v2105
    %2107 = vmatmul.bf16.gmra.mxu0 %v1838
    %v2108 = vpop.f32.mrf.mxu0
    %v2109 = vadd.f32 %v1718, %v2108
    %v2110 = vpop.f32.mrf.mxu0
    %v2111 = vadd.f32 %v1718, %v2110
    %2112 = vmatmul.bf16.gmra.mxu0 %v1841
    %v2113 = vpop.f32.mrf.mxu0
    %v2114 = vadd.f32 %v1718, %v2113
    %v2115 = vpop.f32.mrf.mxu0
    %v2116 = vadd.f32 %v1718, %v2115
    %2117 = vmatmul.bf16.gmra.mxu0 %v1844
    %v2118 = vpop.f32.mrf.mxu0
    %v2119 = vadd.f32 %v1718, %v2118
    %v2120 = vpop.f32.mrf.mxu0
    %v2121 = vadd.f32 %v1718, %v2120
    %2122 = vmatmul.bf16.gmra.mxu0 %v1847
    %v2123 = vpop.f32.mrf.mxu0
    %v2124 = vadd.f32 %v1718, %v2123
    %v2125 = vpop.f32.mrf.mxu0
    %v2126 = vadd.f32 %v1718, %v2125
    %2127 = vmatmul.bf16.gmra.mxu0 %v1850
    %v2128 = vpop.f32.mrf.mxu0
    %v2129 = vadd.f32 %v1718, %v2128
    %v2130 = vpop.f32.mrf.mxu0
    %v2131 = vadd.f32 %v1718, %v2130
    %2132 = vmatmul.bf16.gmra.mxu0 %v1853
    %v2133 = vpop.f32.mrf.mxu0
    %v2134 = vadd.f32 %v1718, %v2133
    %v2135 = vpop.f32.mrf.mxu0
    %v2136 = vadd.f32 %v1718, %v2135
    %2137 = vmatmul.bf16.gmra.mxu0 %v1856
    %v2138 = vpop.f32.mrf.mxu0
    %v2139 = vadd.f32 %v1718, %v2138
    %v2140 = vpop.f32.mrf.mxu0
    %v2141 = vadd.f32 %v1718, %v2140
    %2142 = vmatmul.bf16.gmra.mxu0 %v1859
    %v2143 = vpop.f32.mrf.mxu0
    %v2144 = vadd.f32 %v1718, %v2143
    %v2145 = vpop.f32.mrf.mxu0
    %v2146 = vadd.f32 %v1718, %v2145
    %2147 = vmatmul.bf16.gmra.mxu0 %v1862
    %v2148 = vpop.f32.mrf.mxu0
    %v2149 = vadd.f32 %v1718, %v2148
    %v2150 = vpop.f32.mrf.mxu0
    %v2151 = vadd.f32 %v1718, %v2150
    %2152 = vmatmul.bf16.gmra.mxu0 %v1865
    %v2153 = vpop.f32.mrf.mxu0
    %v2154 = vadd.f32 %v1718, %v2153
    %v2155 = vpop.f32.mrf.mxu0
    %v2156 = vadd.f32 %v1718, %v2155
    %2157 = vmatmul.bf16.gmra.mxu0 %v1868
    %v2158 = vpop.f32.mrf.mxu0
    %v2159 = vadd.f32 %v1718, %v2158
    %v2160 = vpop.f32.mrf.mxu0
    %v2161 = vadd.f32 %v1718, %v2160
    %2162 = vmatmul.bf16.gmra.mxu0 %v1871
    %v2163 = vpop.f32.mrf.mxu0
    %v2164 = vadd.f32 %v1718, %v2163
    %v2165 = vpop.f32.mrf.mxu0
    %v2166 = vadd.f32 %v1718, %v2165
    %2167 = vmatmul.bf16.gmra.mxu0 %v1874
    %v2168 = vpop.f32.mrf.mxu0
    %v2169 = vadd.f32 %v1718, %v2168
    %v2170 = vpop.f32.mrf.mxu0
    %v2171 = vadd.f32 %v1718, %v2170
    %2172 = vmatmul.bf16.gmra.mxu0 %v1877
    %v2173 = vpop.f32.mrf.mxu0
    %v2174 = vadd.f32 %v1718, %v2173
    %v2175 = vpop.f32.mrf.mxu0
    %v2176 = vadd.f32 %v1718, %v2175
    %2177 = vmatmul.bf16.gmra.mxu0 %v1880
    %v2178 = vpop.f32.mrf.mxu0
    %v2179 = vadd.f32 %v1718, %v2178
    %v2180 = vpop.f32.mrf.mxu0
    %v2181 = vadd.f32 %v1718, %v2180
    %2182 = vmatmul.bf16.gmra.mxu0 %v1883
    %v2183 = vpop.f32.mrf.mxu0
    %v2184 = vadd.f32 %v1718, %v2183
    %v2185 = vpop.f32.mrf.mxu0
    %v2186 = vadd.f32 %v1718, %v2185
    %2187 = vmatmul.bf16.gmra.mxu0 %v1886
    %v2188 = vpop.f32.mrf.mxu0
    %v2189 = vadd.f32 %v1718, %v2188
    %v2190 = vpop.f32.mrf.mxu0
    %v2191 = vadd.f32 %v1718, %v2190
    %2192 = vmatmul.bf16.gmra.mxu0 %v1889
    %v2193 = vpop.f32.mrf.mxu0
    %v2194 = vadd.f32 %v1718, %v2193
    %v2195 = vpop.f32.mrf.mxu0
    %v2196 = vadd.f32 %v1718, %v2195
    %2197 = vmatmul.bf16.gmra.mxu0 %v1892
    %v2198 = vpop.f32.mrf.mxu0
    %v2199 = vadd.f32 %v1718, %v2198
    %v2200 = vpop.f32.mrf.mxu0
    %v2201 = vadd.f32 %v1718, %v2200
    %2202 = vmatmul.bf16.gmra.mxu0 %v1895
    %v2203 = vpop.f32.mrf.mxu0
    %v2204 = vadd.f32 %v1718, %v2203
    %v2205 = vpop.f32.mrf.mxu0
    %v2206 = vadd.f32 %v1718, %v2205
    %2207 = vmatmul.bf16.gmra.mxu0 %v1898
    %v2208 = vpop.f32.mrf.mxu0
    %v2209 = vadd.f32 %v1718, %v2208
    %v2210 = vpop.f32.mrf.mxu0
    %v2211 = vadd.f32 %v1718, %v2210
    %2212 = vmatmul.bf16.gmra.mxu0 %v1901
    %v2213 = vpop.f32.mrf.mxu0
    %v2214 = vadd.f32 %v1718, %v2213
    %v2215 = vpop.f32.mrf.mxu0
    %v2216 = vadd.f32 %v1718, %v2215
    %2217 = vmatmul.bf16.gmra.mxu0 %v1904
    %v2218 = vpop.f32.mrf.mxu0
    %v2219 = vadd.f32 %v1718, %v2218
    %v2220 = vpop.f32.mrf.mxu0
    %v2221 = vadd.f32 %v1718, %v2220
    %2222 = vmatmul.bf16.gmra.mxu0 %v1907
    %v2223 = vpop.f32.mrf.mxu0
    %v2224 = vadd.f32 %v1718, %v2223
    %v2225 = vpop.f32.mrf.mxu0
    %v2226 = vadd.f32 %v1718, %v2225
    %2227 = vmatmul.bf16.gmra.mxu0 %v1910
    %v2228 = vpop.f32.mrf.mxu0
    %v2229 = vadd.f32 %v1718, %v2228
    %v2230 = vpop.f32.mrf.mxu0
    %v2231 = vadd.f32 %v1718, %v2230
    %2232 = vmatmul.bf16.gmra.mxu0 %v1913
    %v2233 = vpop.f32.mrf.mxu0
    %v2234 = vadd.f32 %v1718, %v2233
    %v2235 = vpop.f32.mrf.mxu0
    %v2236 = vadd.f32 %v1718, %v2235
    %2237 = vmatmul.bf16.gmra.mxu0 %v1916
    %v2238 = vpop.f32.mrf.mxu0
    %v2239 = vadd.f32 %v1718, %v2238
    %v2240 = vpop.f32.mrf.mxu0
    %v2241 = vadd.f32 %v1718, %v2240
    %2242 = vmatmul.bf16.gmra.mxu0 %v1919
    %v2243 = vpop.f32.mrf.mxu0
    %v2244 = vadd.f32 %v1718, %v2243
    %v2245 = vpop.f32.mrf.mxu0
    %v2246 = vadd.f32 %v1718, %v2245
    %2247 = vmatmul.bf16.gmra.mxu0 %v1922
    %v2248 = vpop.f32.mrf.mxu0
    %v2249 = vadd.f32 %v1718, %v2248
    %v2250 = vpop.f32.mrf.mxu0
    %v2251 = vadd.f32 %v1718, %v2250
    %2252 = vdwg.mxu0
    %v2253 = vld [vmem:[%s7] sm:$0x1]
    %v2255 = vperm.slane %v2253, 0
    %v2257 = vmul.f32 %v1934, %v2255
    %v2258 = vmul.f32 %v1936, %v2255
    %v2259 = vmul.f32 %v1939, %v2255
    %v2260 = vmul.f32 %v1941, %v2255
    %v2261 = vmul.f32 %v1944, %v2255
    %v2262 = vmul.f32 %v1946, %v2255
    %v2263 = vmul.f32 %v1949, %v2255
    %v2264 = vmul.f32 %v1951, %v2255
    %v2265 = vmul.f32 %v1954, %v2255
    %v2266 = vmul.f32 %v1956, %v2255
    %v2267 = vmul.f32 %v1959, %v2255
    %v2268 = vmul.f32 %v1961, %v2255
    %v2269 = vmul.f32 %v1964, %v2255
    %v2270 = vmul.f32 %v1966, %v2255
    %v2271 = vmul.f32 %v1969, %v2255
    %v2272 = vmul.f32 %v1971, %v2255
    %v2273 = vmul.f32 %v1974, %v2255
    %v2274 = vmul.f32 %v1976, %v2255
    %v2275 = vmul.f32 %v1979, %v2255
    %v2276 = vmul.f32 %v1981, %v2255
    %v2277 = vmul.f32 %v1984, %v2255
    %v2278 = vmul.f32 %v1986, %v2255
    %v2279 = vmul.f32 %v1989, %v2255
    %v2280 = vmul.f32 %v1991, %v2255
    %v2281 = vmul.f32 %v1994, %v2255
    %v2282 = vmul.f32 %v1996, %v2255
    %v2283 = vmul.f32 %v1999, %v2255
    %v2284 = vmul.f32 %v2001, %v2255
    %v2285 = vmul.f32 %v2004, %v2255
    %v2286 = vmul.f32 %v2006, %v2255
    %v2287 = vmul.f32 %v2009, %v2255
    %v2288 = vmul.f32 %v2011, %v2255
    %v2289 = vmul.f32 %v2014, %v2255
    %v2290 = vmul.f32 %v2016, %v2255
    %v2291 = vmul.f32 %v2019, %v2255
    %v2292 = vmul.f32 %v2021, %v2255
    %v2293 = vmul.f32 %v2024, %v2255
    %v2294 = vmul.f32 %v2026, %v2255
    %v2295 = vmul.f32 %v2029, %v2255
    %v2296 = vmul.f32 %v2031, %v2255
    %v2297 = vmul.f32 %v2034, %v2255
    %v2298 = vmul.f32 %v2036, %v2255
    %v2299 = vmul.f32 %v2039, %v2255
    %v2300 = vmul.f32 %v2041, %v2255
    %v2301 = vmul.f32 %v2044, %v2255
    %v2302 = vmul.f32 %v2046, %v2255
    %v2303 = vmul.f32 %v2049, %v2255
    %v2304 = vmul.f32 %v2051, %v2255
    %v2305 = vmul.f32 %v2054, %v2255
    %v2306 = vmul.f32 %v2056, %v2255
    %v2307 = vmul.f32 %v2059, %v2255
    %v2308 = vmul.f32 %v2061, %v2255
    %v2309 = vmul.f32 %v2064, %v2255
    %v2310 = vmul.f32 %v2066, %v2255
    %v2311 = vmul.f32 %v2069, %v2255
    %v2312 = vmul.f32 %v2071, %v2255
    %v2313 = vmul.f32 %v2074, %v2255
    %v2314 = vmul.f32 %v2076, %v2255
    %v2315 = vmul.f32 %v2079, %v2255
    %v2316 = vmul.f32 %v2081, %v2255
    %v2317 = vmul.f32 %v2084, %v2255
    %v2318 = vmul.f32 %v2086, %v2255
    %v2319 = vmul.f32 %v2089, %v2255
    %v2320 = vmul.f32 %v2091, %v2255
    %v2321 = vmul.f32 %v2094, %v2255
    %v2322 = vmul.f32 %v2096, %v2255
    %v2323 = vmul.f32 %v2099, %v2255
    %v2324 = vmul.f32 %v2101, %v2255
    %v2325 = vmul.f32 %v2104, %v2255
    %v2326 = vmul.f32 %v2106, %v2255
    %v2327 = vmul.f32 %v2109, %v2255
    %v2328 = vmul.f32 %v2111, %v2255
    %v2329 = vmul.f32 %v2114, %v2255
    %v2330 = vmul.f32 %v2116, %v2255
    %v2331 = vmul.f32 %v2119, %v2255
    %v2332 = vmul.f32 %v2121, %v2255
    %v2333 = vmul.f32 %v2124, %v2255
    %v2334 = vmul.f32 %v2126, %v2255
    %v2335 = vmul.f32 %v2129, %v2255
    %v2336 = vmul.f32 %v2131, %v2255
    %v2337 = vmul.f32 %v2134, %v2255
    %v2338 = vmul.f32 %v2136, %v2255
    %v2339 = vmul.f32 %v2139, %v2255
    %v2340 = vmul.f32 %v2141, %v2255
    %v2341 = vmul.f32 %v2144, %v2255
    %v2342 = vmul.f32 %v2146, %v2255
    %v2343 = vmul.f32 %v2149, %v2255
    %v2344 = vmul.f32 %v2151, %v2255
    %v2345 = vmul.f32 %v2154, %v2255
    %v2346 = vmul.f32 %v2156, %v2255
    %v2347 = vmul.f32 %v2159, %v2255
    %v2348 = vmul.f32 %v2161, %v2255
    %v2349 = vmul.f32 %v2164, %v2255
    %v2350 = vmul.f32 %v2166, %v2255
    %v2351 = vmul.f32 %v2169, %v2255
    %v2352 = vmul.f32 %v2171, %v2255
    %v2353 = vmul.f32 %v2174, %v2255
    %v2354 = vmul.f32 %v2176, %v2255
    %v2355 = vmul.f32 %v2179, %v2255
    %v2356 = vmul.f32 %v2181, %v2255
    %v2357 = vmul.f32 %v2184, %v2255
    %v2358 = vmul.f32 %v2186, %v2255
    %v2359 = vmul.f32 %v2189, %v2255
    %v2360 = vmul.f32 %v2191, %v2255
    %v2361 = vmul.f32 %v2194, %v2255
    %v2362 = vmul.f32 %v2196, %v2255
    %v2363 = vmul.f32 %v2199, %v2255
    %v2364 = vmul.f32 %v2201, %v2255
    %v2365 = vmul.f32 %v2204, %v2255
    %v2366 = vmul.f32 %v2206, %v2255
    %v2367 = vmul.f32 %v2209, %v2255
    %v2368 = vmul.f32 %v2211, %v2255
    %v2369 = vmul.f32 %v2214, %v2255
    %v2370 = vmul.f32 %v2216, %v2255
    %v2371 = vmul.f32 %v2219, %v2255
    %v2372 = vmul.f32 %v2221, %v2255
    %v2373 = vmul.f32 %v2224, %v2255
    %v2374 = vmul.f32 %v2226, %v2255
    %v2375 = vmul.f32 %v2229, %v2255
    %v2376 = vmul.f32 %v2231, %v2255
    %v2377 = vmul.f32 %v2234, %v2255
    %v2378 = vmul.f32 %v2236, %v2255
    %v2379 = vmul.f32 %v2239, %v2255
    %v2380 = vmul.f32 %v2241, %v2255
    %v2381 = vmul.f32 %v2244, %v2255
    %v2382 = vmul.f32 %v2246, %v2255
    %v2383 = vmul.f32 %v2249, %v2255
    %v2384 = vmul.f32 %v2251, %v2255
    %vm2385 = vcmask 130048
    %v2386 = vsel %vm2385, %v2257, 0.0
    %2387 = vadd.xlane.f32.xlu0 %v2386
    %v2388 = vpop.xlane.xlu0 %2387
    %v2389 = vsel %vm2385, %v2258, 0.0
    %2390 = vadd.xlane.f32.xlu0 %v2389
    %v2391 = vpop.xlane.xlu0 %2390
    %v2392 = vsel %vm2385, %v2259, 0.0
    %2393 = vadd.xlane.f32.xlu0 %v2392
    %v2394 = vpop.xlane.xlu0 %2393
    %v2395 = vsel %vm2385, %v2260, 0.0
    %2396 = vadd.xlane.f32.xlu0 %v2395
    %v2397 = vpop.xlane.xlu0 %2396
    %v2398 = vsel %vm2385, %v2261, 0.0
    %2399 = vadd.xlane.f32.xlu0 %v2398
    %v2400 = vpop.xlane.xlu0 %2399
    %v2401 = vsel %vm2385, %v2262, 0.0
    %2402 = vadd.xlane.f32.xlu0 %v2401
    %v2403 = vpop.xlane.xlu0 %2402
    %v2404 = vsel %vm2385, %v2263, 0.0
    %2405 = vadd.xlane.f32.xlu0 %v2404
    %v2406 = vpop.xlane.xlu0 %2405
    %v2407 = vsel %vm2385, %v2264, 0.0
    %2408 = vadd.xlane.f32.xlu0 %v2407
    %v2409 = vpop.xlane.xlu0 %2408
    %v2410 = vsel %vm2385, %v2265, 0.0
    %2411 = vadd.xlane.f32.xlu0 %v2410
    %v2412 = vpop.xlane.xlu0 %2411
    %v2413 = vsel %vm2385, %v2266, 0.0
    %2414 = vadd.xlane.f32.xlu0 %v2413
    %v2415 = vpop.xlane.xlu0 %2414
    %v2416 = vsel %vm2385, %v2267, 0.0
    %2417 = vadd.xlane.f32.xlu0 %v2416
    %v2418 = vpop.xlane.xlu0 %2417
    %v2419 = vsel %vm2385, %v2268, 0.0
    %2420 = vadd.xlane.f32.xlu0 %v2419
    %v2421 = vpop.xlane.xlu0 %2420
    %v2422 = vsel %vm2385, %v2269, 0.0
    %2423 = vadd.xlane.f32.xlu0 %v2422
    %v2424 = vpop.xlane.xlu0 %2423
    %v2425 = vsel %vm2385, %v2270, 0.0
    %2426 = vadd.xlane.f32.xlu0 %v2425
    %v2427 = vpop.xlane.xlu0 %2426
    %v2428 = vsel %vm2385, %v2271, 0.0
    %2429 = vadd.xlane.f32.xlu0 %v2428
    %v2430 = vpop.xlane.xlu0 %2429
    %v2431 = vsel %vm2385, %v2272, 0.0
    %2432 = vadd.xlane.f32.xlu0 %v2431
    %v2433 = vpop.xlane.xlu0 %2432
    %v2434 = vsel %vm2385, %v2273, 0.0
    %2435 = vadd.xlane.f32.xlu0 %v2434
    %v2436 = vpop.xlane.xlu0 %2435
    %v2437 = vsel %vm2385, %v2274, 0.0
    %2438 = vadd.xlane.f32.xlu0 %v2437
    %v2439 = vpop.xlane.xlu0 %2438
    %v2440 = vsel %vm2385, %v2275, 0.0
    %2441 = vadd.xlane.f32.xlu0 %v2440
    %v2442 = vpop.xlane.xlu0 %2441
    %v2443 = vsel %vm2385, %v2276, 0.0
    %2444 = vadd.xlane.f32.xlu0 %v2443
    %v2445 = vpop.xlane.xlu0 %2444
    %v2446 = vsel %vm2385, %v2277, 0.0
    %2447 = vadd.xlane.f32.xlu0 %v2446
    %v2448 = vpop.xlane.xlu0 %2447
    %v2449 = vsel %vm2385, %v2278, 0.0
    %2450 = vadd.xlane.f32.xlu0 %v2449
    %v2451 = vpop.xlane.xlu0 %2450
    %v2452 = vsel %vm2385, %v2279, 0.0
    %2453 = vadd.xlane.f32.xlu0 %v2452
    %v2454 = vpop.xlane.xlu0 %2453
    %v2455 = vsel %vm2385, %v2280, 0.0
    %2456 = vadd.xlane.f32.xlu0 %v2455
    %v2457 = vpop.xlane.xlu0 %2456
    %v2458 = vsel %vm2385, %v2281, 0.0
    %2459 = vadd.xlane.f32.xlu0 %v2458
    %v2460 = vpop.xlane.xlu0 %2459
    %v2461 = vsel %vm2385, %v2282, 0.0
    %2462 = vadd.xlane.f32.xlu0 %v2461
    %v2463 = vpop.xlane.xlu0 %2462
    %v2464 = vsel %vm2385, %v2283, 0.0
    %2465 = vadd.xlane.f32.xlu0 %v2464
    %v2466 = vpop.xlane.xlu0 %2465
    %v2467 = vsel %vm2385, %v2284, 0.0
    %2468 = vadd.xlane.f32.xlu0 %v2467
    %v2469 = vpop.xlane.xlu0 %2468
    %v2470 = vsel %vm2385, %v2285, 0.0
    %2471 = vadd.xlane.f32.xlu0 %v2470
    %v2472 = vpop.xlane.xlu0 %2471
    %v2473 = vsel %vm2385, %v2286, 0.0
    %2474 = vadd.xlane.f32.xlu0 %v2473
    %v2475 = vpop.xlane.xlu0 %2474
    %v2476 = vsel %vm2385, %v2287, 0.0
    %2477 = vadd.xlane.f32.xlu0 %v2476
    %v2478 = vpop.xlane.xlu0 %2477
    %v2479 = vsel %vm2385, %v2288, 0.0
    %2480 = vadd.xlane.f32.xlu0 %v2479
    %v2481 = vpop.xlane.xlu0 %2480
    %v2482 = vsel %vm2385, %v2289, 0.0
    %2483 = vadd.xlane.f32.xlu0 %v2482
    %v2484 = vpop.xlane.xlu0 %2483
    %v2485 = vsel %vm2385, %v2290, 0.0
    %2486 = vadd.xlane.f32.xlu0 %v2485
    %v2487 = vpop.xlane.xlu0 %2486
    %v2488 = vsel %vm2385, %v2291, 0.0
    %2489 = vadd.xlane.f32.xlu0 %v2488
    %v2490 = vpop.xlane.xlu0 %2489
    %v2491 = vsel %vm2385, %v2292, 0.0
    %2492 = vadd.xlane.f32.xlu0 %v2491
    %v2493 = vpop.xlane.xlu0 %2492
    %v2494 = vsel %vm2385, %v2293, 0.0
    %2495 = vadd.xlane.f32.xlu0 %v2494
    %v2496 = vpop.xlane.xlu0 %2495
    %v2497 = vsel %vm2385, %v2294, 0.0
    %2498 = vadd.xlane.f32.xlu0 %v2497
    %v2499 = vpop.xlane.xlu0 %2498
    %v2500 = vsel %vm2385, %v2295, 0.0
    %2501 = vadd.xlane.f32.xlu0 %v2500
    %v2502 = vpop.xlane.xlu0 %2501
    %v2503 = vsel %vm2385, %v2296, 0.0
    %2504 = vadd.xlane.f32.xlu0 %v2503
    %v2505 = vpop.xlane.xlu0 %2504
    %v2506 = vsel %vm2385, %v2297, 0.0
    %2507 = vadd.xlane.f32.xlu0 %v2506
    %v2508 = vpop.xlane.xlu0 %2507
    %v2509 = vsel %vm2385, %v2298, 0.0
    %2510 = vadd.xlane.f32.xlu0 %v2509
    %v2511 = vpop.xlane.xlu0 %2510
    %v2512 = vsel %vm2385, %v2299, 0.0
    %2513 = vadd.xlane.f32.xlu0 %v2512
    %v2514 = vpop.xlane.xlu0 %2513
    %v2515 = vsel %vm2385, %v2300, 0.0
    %2516 = vadd.xlane.f32.xlu0 %v2515
    %v2517 = vpop.xlane.xlu0 %2516
    %v2518 = vsel %vm2385, %v2301, 0.0
    %2519 = vadd.xlane.f32.xlu0 %v2518
    %v2520 = vpop.xlane.xlu0 %2519
    %v2521 = vsel %vm2385, %v2302, 0.0
    %2522 = vadd.xlane.f32.xlu0 %v2521
    %v2523 = vpop.xlane.xlu0 %2522
    %v2524 = vsel %vm2385, %v2303, 0.0
    %2525 = vadd.xlane.f32.xlu0 %v2524
    %v2526 = vpop.xlane.xlu0 %2525
    %v2527 = vsel %vm2385, %v2304, 0.0
    %2528 = vadd.xlane.f32.xlu0 %v2527
    %v2529 = vpop.xlane.xlu0 %2528
    %v2530 = vsel %vm2385, %v2305, 0.0
    %2531 = vadd.xlane.f32.xlu0 %v2530
    %v2532 = vpop.xlane.xlu0 %2531
    %v2533 = vsel %vm2385, %v2306, 0.0
    %2534 = vadd.xlane.f32.xlu0 %v2533
    %v2535 = vpop.xlane.xlu0 %2534
    %v2536 = vsel %vm2385, %v2307, 0.0
    %2537 = vadd.xlane.f32.xlu0 %v2536
    %v2538 = vpop.xlane.xlu0 %2537
    %v2539 = vsel %vm2385, %v2308, 0.0
    %2540 = vadd.xlane.f32.xlu0 %v2539
    %v2541 = vpop.xlane.xlu0 %2540
    %v2542 = vsel %vm2385, %v2309, 0.0
    %2543 = vadd.xlane.f32.xlu0 %v2542
    %v2544 = vpop.xlane.xlu0 %2543
    %v2545 = vsel %vm2385, %v2310, 0.0
    %2546 = vadd.xlane.f32.xlu0 %v2545
    %v2547 = vpop.xlane.xlu0 %2546
    %v2548 = vsel %vm2385, %v2311, 0.0
    %2549 = vadd.xlane.f32.xlu0 %v2548
    %v2550 = vpop.xlane.xlu0 %2549
    %v2551 = vsel %vm2385, %v2312, 0.0
    %2552 = vadd.xlane.f32.xlu0 %v2551
    %v2553 = vpop.xlane.xlu0 %2552
    %v2554 = vsel %vm2385, %v2313, 0.0
    %2555 = vadd.xlane.f32.xlu0 %v2554
    %v2556 = vpop.xlane.xlu0 %2555
    %v2557 = vsel %vm2385, %v2314, 0.0
    %2558 = vadd.xlane.f32.xlu0 %v2557
    %v2559 = vpop.xlane.xlu0 %2558
    %v2560 = vsel %vm2385, %v2315, 0.0
    %2561 = vadd.xlane.f32.xlu0 %v2560
    %v2562 = vpop.xlane.xlu0 %2561
    %v2563 = vsel %vm2385, %v2316, 0.0
    %2564 = vadd.xlane.f32.xlu0 %v2563
    %v2565 = vpop.xlane.xlu0 %2564
    %v2566 = vsel %vm2385, %v2317, 0.0
    %2567 = vadd.xlane.f32.xlu0 %v2566
    %v2568 = vpop.xlane.xlu0 %2567
    %v2569 = vsel %vm2385, %v2318, 0.0
    %2570 = vadd.xlane.f32.xlu0 %v2569
    %v2571 = vpop.xlane.xlu0 %2570
    %v2572 = vsel %vm2385, %v2319, 0.0
    %2573 = vadd.xlane.f32.xlu0 %v2572
    %v2574 = vpop.xlane.xlu0 %2573
    %v2575 = vsel %vm2385, %v2320, 0.0
    %2576 = vadd.xlane.f32.xlu0 %v2575
    %v2577 = vpop.xlane.xlu0 %2576
    %v2578 = vsel %vm2385, %v2321, 0.0
    %2579 = vadd.xlane.f32.xlu0 %v2578
    %v2580 = vpop.xlane.xlu0 %2579
    %v2581 = vsel %vm2385, %v2322, 0.0
    %2582 = vadd.xlane.f32.xlu0 %v2581
    %v2583 = vpop.xlane.xlu0 %2582
    %v2584 = vsel %vm2385, %v2323, 0.0
    %2585 = vadd.xlane.f32.xlu0 %v2584
    %v2586 = vpop.xlane.xlu0 %2585
    %v2587 = vsel %vm2385, %v2324, 0.0
    %2588 = vadd.xlane.f32.xlu0 %v2587
    %v2589 = vpop.xlane.xlu0 %2588
    %v2590 = vsel %vm2385, %v2325, 0.0
    %2591 = vadd.xlane.f32.xlu0 %v2590
    %v2592 = vpop.xlane.xlu0 %2591
    %v2593 = vsel %vm2385, %v2326, 0.0
    %2594 = vadd.xlane.f32.xlu0 %v2593
    %v2595 = vpop.xlane.xlu0 %2594
    %v2596 = vsel %vm2385, %v2327, 0.0
    %2597 = vadd.xlane.f32.xlu0 %v2596
    %v2598 = vpop.xlane.xlu0 %2597
    %v2599 = vsel %vm2385, %v2328, 0.0
    %2600 = vadd.xlane.f32.xlu0 %v2599
    %v2601 = vpop.xlane.xlu0 %2600
    %v2602 = vsel %vm2385, %v2329, 0.0
    %2603 = vadd.xlane.f32.xlu0 %v2602
    %v2604 = vpop.xlane.xlu0 %2603
    %v2605 = vsel %vm2385, %v2330, 0.0
    %2606 = vadd.xlane.f32.xlu0 %v2605
    %v2607 = vpop.xlane.xlu0 %2606
    %v2608 = vsel %vm2385, %v2331, 0.0
    %2609 = vadd.xlane.f32.xlu0 %v2608
    %v2610 = vpop.xlane.xlu0 %2609
    %v2611 = vsel %vm2385, %v2332, 0.0
    %2612 = vadd.xlane.f32.xlu0 %v2611
    %v2613 = vpop.xlane.xlu0 %2612
    %v2614 = vsel %vm2385, %v2333, 0.0
    %2615 = vadd.xlane.f32.xlu0 %v2614
    %v2616 = vpop.xlane.xlu0 %2615
    %v2617 = vsel %vm2385, %v2334, 0.0
    %2618 = vadd.xlane.f32.xlu0 %v2617
    %v2619 = vpop.xlane.xlu0 %2618
    %v2620 = vsel %vm2385, %v2335, 0.0
    %2621 = vadd.xlane.f32.xlu0 %v2620
    %v2622 = vpop.xlane.xlu0 %2621
    %v2623 = vsel %vm2385, %v2336, 0.0
    %2624 = vadd.xlane.f32.xlu0 %v2623
    %v2625 = vpop.xlane.xlu0 %2624
    %v2626 = vsel %vm2385, %v2337, 0.0
    %2627 = vadd.xlane.f32.xlu0 %v2626
    %v2628 = vpop.xlane.xlu0 %2627
    %v2629 = vsel %vm2385, %v2338, 0.0
    %2630 = vadd.xlane.f32.xlu0 %v2629
    %v2631 = vpop.xlane.xlu0 %2630
    %v2632 = vsel %vm2385, %v2339, 0.0
    %2633 = vadd.xlane.f32.xlu0 %v2632
    %v2634 = vpop.xlane.xlu0 %2633
    %v2635 = vsel %vm2385, %v2340, 0.0
    %2636 = vadd.xlane.f32.xlu0 %v2635
    %v2637 = vpop.xlane.xlu0 %2636
    %v2638 = vsel %vm2385, %v2341, 0.0
    %2639 = vadd.xlane.f32.xlu0 %v2638
    %v2640 = vpop.xlane.xlu0 %2639
    %v2641 = vsel %vm2385, %v2342, 0.0
    %2642 = vadd.xlane.f32.xlu0 %v2641
    %v2643 = vpop.xlane.xlu0 %2642
    %v2644 = vsel %vm2385, %v2343, 0.0
    %2645 = vadd.xlane.f32.xlu0 %v2644
    %v2646 = vpop.xlane.xlu0 %2645
    %v2647 = vsel %vm2385, %v2344, 0.0
    %2648 = vadd.xlane.f32.xlu0 %v2647
    %v2649 = vpop.xlane.xlu0 %2648
    %v2650 = vsel %vm2385, %v2345, 0.0
    %2651 = vadd.xlane.f32.xlu0 %v2650
    %v2652 = vpop.xlane.xlu0 %2651
    %v2653 = vsel %vm2385, %v2346, 0.0
    %2654 = vadd.xlane.f32.xlu0 %v2653
    %v2655 = vpop.xlane.xlu0 %2654
    %v2656 = vsel %vm2385, %v2347, 0.0
    %2657 = vadd.xlane.f32.xlu0 %v2656
    %v2658 = vpop.xlane.xlu0 %2657
    %v2659 = vsel %vm2385, %v2348, 0.0
    %2660 = vadd.xlane.f32.xlu0 %v2659
    %v2661 = vpop.xlane.xlu0 %2660
    %v2662 = vsel %vm2385, %v2349, 0.0
    %2663 = vadd.xlane.f32.xlu0 %v2662
    %v2664 = vpop.xlane.xlu0 %2663
    %v2665 = vsel %vm2385, %v2350, 0.0
    %2666 = vadd.xlane.f32.xlu0 %v2665
    %v2667 = vpop.xlane.xlu0 %2666
    %v2668 = vsel %vm2385, %v2351, 0.0
    %2669 = vadd.xlane.f32.xlu0 %v2668
    %v2670 = vpop.xlane.xlu0 %2669
    %v2671 = vsel %vm2385, %v2352, 0.0
    %2672 = vadd.xlane.f32.xlu0 %v2671
    %v2673 = vpop.xlane.xlu0 %2672
    %v2674 = vsel %vm2385, %v2353, 0.0
    %2675 = vadd.xlane.f32.xlu0 %v2674
    %v2676 = vpop.xlane.xlu0 %2675
    %v2677 = vsel %vm2385, %v2354, 0.0
    %2678 = vadd.xlane.f32.xlu0 %v2677
    %v2679 = vpop.xlane.xlu0 %2678
    %v2680 = vsel %vm2385, %v2355, 0.0
    %2681 = vadd.xlane.f32.xlu0 %v2680
    %v2682 = vpop.xlane.xlu0 %2681
    %v2683 = vsel %vm2385, %v2356, 0.0
    %2684 = vadd.xlane.f32.xlu0 %v2683
    %v2685 = vpop.xlane.xlu0 %2684
    %v2686 = vsel %vm2385, %v2357, 0.0
    %2687 = vadd.xlane.f32.xlu0 %v2686
    %v2688 = vpop.xlane.xlu0 %2687
    %v2689 = vsel %vm2385, %v2358, 0.0
    %2690 = vadd.xlane.f32.xlu0 %v2689
    %v2691 = vpop.xlane.xlu0 %2690
    %v2692 = vsel %vm2385, %v2359, 0.0
    %2693 = vadd.xlane.f32.xlu0 %v2692
    %v2694 = vpop.xlane.xlu0 %2693
    %v2695 = vsel %vm2385, %v2360, 0.0
    %2696 = vadd.xlane.f32.xlu0 %v2695
    %v2697 = vpop.xlane.xlu0 %2696
    %v2698 = vsel %vm2385, %v2361, 0.0
    %2699 = vadd.xlane.f32.xlu0 %v2698
    %v2700 = vpop.xlane.xlu0 %2699
    %v2701 = vsel %vm2385, %v2362, 0.0
    %2702 = vadd.xlane.f32.xlu0 %v2701
    %v2703 = vpop.xlane.xlu0 %2702
    %v2704 = vsel %vm2385, %v2363, 0.0
    %2705 = vadd.xlane.f32.xlu0 %v2704
    %v2706 = vpop.xlane.xlu0 %2705
    %v2707 = vsel %vm2385, %v2364, 0.0
    %2708 = vadd.xlane.f32.xlu0 %v2707
    %v2709 = vpop.xlane.xlu0 %2708
    %v2710 = vsel %vm2385, %v2365, 0.0
    %2711 = vadd.xlane.f32.xlu0 %v2710
    %v2712 = vpop.xlane.xlu0 %2711
    %v2713 = vsel %vm2385, %v2366, 0.0
    %2714 = vadd.xlane.f32.xlu0 %v2713
    %v2715 = vpop.xlane.xlu0 %2714
    %v2716 = vsel %vm2385, %v2367, 0.0
    %2717 = vadd.xlane.f32.xlu0 %v2716
    %v2718 = vpop.xlane.xlu0 %2717
    %v2719 = vsel %vm2385, %v2368, 0.0
    %2720 = vadd.xlane.f32.xlu0 %v2719
    %v2721 = vpop.xlane.xlu0 %2720
    %v2722 = vsel %vm2385, %v2369, 0.0
    %2723 = vadd.xlane.f32.xlu0 %v2722
    %v2724 = vpop.xlane.xlu0 %2723
    %v2725 = vsel %vm2385, %v2370, 0.0
    %2726 = vadd.xlane.f32.xlu0 %v2725
    %v2727 = vpop.xlane.xlu0 %2726
    %v2728 = vsel %vm2385, %v2371, 0.0
    %2729 = vadd.xlane.f32.xlu0 %v2728
    %v2730 = vpop.xlane.xlu0 %2729
    %v2731 = vsel %vm2385, %v2372, 0.0
    %2732 = vadd.xlane.f32.xlu0 %v2731
    %v2733 = vpop.xlane.xlu0 %2732
    %v2734 = vsel %vm2385, %v2373, 0.0
    %2735 = vadd.xlane.f32.xlu0 %v2734
    %v2736 = vpop.xlane.xlu0 %2735
    %v2737 = vsel %vm2385, %v2374, 0.0
    %2738 = vadd.xlane.f32.xlu0 %v2737
    %v2739 = vpop.xlane.xlu0 %2738
    %v2740 = vsel %vm2385, %v2375, 0.0
    %2741 = vadd.xlane.f32.xlu0 %v2740
    %v2742 = vpop.xlane.xlu0 %2741
    %v2743 = vsel %vm2385, %v2376, 0.0
    %2744 = vadd.xlane.f32.xlu0 %v2743
    %v2745 = vpop.xlane.xlu0 %2744
    %v2746 = vsel %vm2385, %v2377, 0.0
    %2747 = vadd.xlane.f32.xlu0 %v2746
    %v2748 = vpop.xlane.xlu0 %2747
    %v2749 = vsel %vm2385, %v2378, 0.0
    %2750 = vadd.xlane.f32.xlu0 %v2749
    %v2751 = vpop.xlane.xlu0 %2750
    %v2752 = vsel %vm2385, %v2379, 0.0
    %2753 = vadd.xlane.f32.xlu0 %v2752
    %v2754 = vpop.xlane.xlu0 %2753
    %v2755 = vsel %vm2385, %v2380, 0.0
    %2756 = vadd.xlane.f32.xlu0 %v2755
    %v2757 = vpop.xlane.xlu0 %2756
    %v2758 = vsel %vm2385, %v2381, 0.0
    %2759 = vadd.xlane.f32.xlu0 %v2758
    %v2760 = vpop.xlane.xlu0 %2759
    %v2761 = vsel %vm2385, %v2382, 0.0
    %2762 = vadd.xlane.f32.xlu0 %v2761
    %v2763 = vpop.xlane.xlu0 %2762
    %v2764 = vsel %vm2385, %v2383, 0.0
    %2765 = vadd.xlane.f32.xlu0 %v2764
    %v2766 = vpop.xlane.xlu0 %2765
    %v2767 = vsel %vm2385, %v2384, 0.0
    %2768 = vadd.xlane.f32.xlu0 %v2767
    %v2769 = vpop.xlane.xlu0 %2768
    %v2770 = vld [vmem:[#allocation2] sm:$0x1]
    %v2772 = vperm.slane %v2770, 0
    %v2774 = vadd.f32 %v2388, %v2772
    %v2775 = vadd.f32 %v2391, %v2772
    %v2776 = vadd.f32 %v2394, %v2772
    %v2777 = vadd.f32 %v2397, %v2772
    %v2778 = vadd.f32 %v2400, %v2772
    %v2779 = vadd.f32 %v2403, %v2772
    %v2780 = vadd.f32 %v2406, %v2772
    %v2781 = vadd.f32 %v2409, %v2772
    %v2782 = vadd.f32 %v2412, %v2772
    %v2783 = vadd.f32 %v2415, %v2772
    %v2784 = vadd.f32 %v2418, %v2772
    %v2785 = vadd.f32 %v2421, %v2772
    %v2786 = vadd.f32 %v2424, %v2772
    %v2787 = vadd.f32 %v2427, %v2772
    %v2788 = vadd.f32 %v2430, %v2772
    %v2789 = vadd.f32 %v2433, %v2772
    %v2790 = vadd.f32 %v2436, %v2772
    %v2791 = vadd.f32 %v2439, %v2772
    %v2792 = vadd.f32 %v2442, %v2772
    %v2793 = vadd.f32 %v2445, %v2772
    %v2794 = vadd.f32 %v2448, %v2772
    %v2795 = vadd.f32 %v2451, %v2772
    %v2796 = vadd.f32 %v2454, %v2772
    %v2797 = vadd.f32 %v2457, %v2772
    %v2798 = vadd.f32 %v2460, %v2772
    %v2799 = vadd.f32 %v2463, %v2772
    %v2800 = vadd.f32 %v2466, %v2772
    %v2801 = vadd.f32 %v2469, %v2772
    %v2802 = vadd.f32 %v2472, %v2772
    %v2803 = vadd.f32 %v2475, %v2772
    %v2804 = vadd.f32 %v2478, %v2772
    %v2805 = vadd.f32 %v2481, %v2772
    %v2806 = vadd.f32 %v2484, %v2772
    %v2807 = vadd.f32 %v2487, %v2772
    %v2808 = vadd.f32 %v2490, %v2772
    %v2809 = vadd.f32 %v2493, %v2772
    %v2810 = vadd.f32 %v2496, %v2772
    %v2811 = vadd.f32 %v2499, %v2772
    %v2812 = vadd.f32 %v2502, %v2772
    %v2813 = vadd.f32 %v2505, %v2772
    %v2814 = vadd.f32 %v2508, %v2772
    %v2815 = vadd.f32 %v2511, %v2772
    %v2816 = vadd.f32 %v2514, %v2772
    %v2817 = vadd.f32 %v2517, %v2772
    %v2818 = vadd.f32 %v2520, %v2772
    %v2819 = vadd.f32 %v2523, %v2772
    %v2820 = vadd.f32 %v2526, %v2772
    %v2821 = vadd.f32 %v2529, %v2772
    %v2822 = vadd.f32 %v2532, %v2772
    %v2823 = vadd.f32 %v2535, %v2772
    %v2824 = vadd.f32 %v2538, %v2772
    %v2825 = vadd.f32 %v2541, %v2772
    %v2826 = vadd.f32 %v2544, %v2772
    %v2827 = vadd.f32 %v2547, %v2772
    %v2828 = vadd.f32 %v2550, %v2772
    %v2829 = vadd.f32 %v2553, %v2772
    %v2830 = vadd.f32 %v2556, %v2772
    %v2831 = vadd.f32 %v2559, %v2772
    %v2832 = vadd.f32 %v2562, %v2772
    %v2833 = vadd.f32 %v2565, %v2772
    %v2834 = vadd.f32 %v2568, %v2772
    %v2835 = vadd.f32 %v2571, %v2772
    %v2836 = vadd.f32 %v2574, %v2772
    %v2837 = vadd.f32 %v2577, %v2772
    %v2838 = vadd.f32 %v2580, %v2772
    %v2839 = vadd.f32 %v2583, %v2772
    %v2840 = vadd.f32 %v2586, %v2772
    %v2841 = vadd.f32 %v2589, %v2772
    %v2842 = vadd.f32 %v2592, %v2772
    %v2843 = vadd.f32 %v2595, %v2772
    %v2844 = vadd.f32 %v2598, %v2772
    %v2845 = vadd.f32 %v2601, %v2772
    %v2846 = vadd.f32 %v2604, %v2772
    %v2847 = vadd.f32 %v2607, %v2772
    %v2848 = vadd.f32 %v2610, %v2772
    %v2849 = vadd.f32 %v2613, %v2772
    %v2850 = vadd.f32 %v2616, %v2772
    %v2851 = vadd.f32 %v2619, %v2772
    %v2852 = vadd.f32 %v2622, %v2772
    %v2853 = vadd.f32 %v2625, %v2772
    %v2854 = vadd.f32 %v2628, %v2772
    %v2855 = vadd.f32 %v2631, %v2772
    %v2856 = vadd.f32 %v2634, %v2772
    %v2857 = vadd.f32 %v2637, %v2772
    %v2858 = vadd.f32 %v2640, %v2772
    %v2859 = vadd.f32 %v2643, %v2772
    %v2860 = vadd.f32 %v2646, %v2772
    %v2861 = vadd.f32 %v2649, %v2772
    %v2862 = vadd.f32 %v2652, %v2772
    %v2863 = vadd.f32 %v2655, %v2772
    %v2864 = vadd.f32 %v2658, %v2772
    %v2865 = vadd.f32 %v2661, %v2772
    %v2866 = vadd.f32 %v2664, %v2772
    %v2867 = vadd.f32 %v2667, %v2772
    %v2868 = vadd.f32 %v2670, %v2772
    %v2869 = vadd.f32 %v2673, %v2772
    %v2870 = vadd.f32 %v2676, %v2772
    %v2871 = vadd.f32 %v2679, %v2772
    %v2872 = vadd.f32 %v2682, %v2772
    %v2873 = vadd.f32 %v2685, %v2772
    %v2874 = vadd.f32 %v2688, %v2772
    %v2875 = vadd.f32 %v2691, %v2772
    %v2876 = vadd.f32 %v2694, %v2772
    %v2877 = vadd.f32 %v2697, %v2772
    %v2878 = vadd.f32 %v2700, %v2772
    %v2879 = vadd.f32 %v2703, %v2772
    %v2880 = vadd.f32 %v2706, %v2772
    %v2881 = vadd.f32 %v2709, %v2772
    %v2882 = vadd.f32 %v2712, %v2772
    %v2883 = vadd.f32 %v2715, %v2772
    %v2884 = vadd.f32 %v2718, %v2772
    %v2885 = vadd.f32 %v2721, %v2772
    %v2886 = vadd.f32 %v2724, %v2772
    %v2887 = vadd.f32 %v2727, %v2772
    %v2888 = vadd.f32 %v2730, %v2772
    %v2889 = vadd.f32 %v2733, %v2772
    %v2890 = vadd.f32 %v2736, %v2772
    %v2891 = vadd.f32 %v2739, %v2772
    %v2892 = vadd.f32 %v2742, %v2772
    %v2893 = vadd.f32 %v2745, %v2772
    %v2894 = vadd.f32 %v2748, %v2772
    %v2895 = vadd.f32 %v2751, %v2772
    %v2896 = vadd.f32 %v2754, %v2772
    %v2897 = vadd.f32 %v2757, %v2772
    %v2898 = vadd.f32 %v2760, %v2772
    %v2899 = vadd.f32 %v2763, %v2772
    %v2900 = vadd.f32 %v2766, %v2772
    %v2901 = vadd.f32 %v2769, %v2772
    %3030 = vset.pattern.permute.xlu0 0
    %3031 = vperm.xlu0 %3030, %v2774
    %v3032 = vpop.permute.xlu0 %3031
    %3033 = vset.pattern.permute.xlu0 0
    %3034 = vperm.xlu0 %3033, %v2775
    %v3035 = vpop.permute.xlu0 %3034
    %3036 = vset.pattern.permute.xlu0 0
    %3037 = vperm.xlu0 %3036, %v2776
    %v3038 = vpop.permute.xlu0 %3037
    %3039 = vset.pattern.permute.xlu0 0
    %3040 = vperm.xlu0 %3039, %v2777
    %v3041 = vpop.permute.xlu0 %3040
    %3042 = vset.pattern.permute.xlu0 0
    %3043 = vperm.xlu0 %3042, %v2778
    %v3044 = vpop.permute.xlu0 %3043
    %3045 = vset.pattern.permute.xlu0 0
    %3046 = vperm.xlu0 %3045, %v2779
    %v3047 = vpop.permute.xlu0 %3046
    %3048 = vset.pattern.permute.xlu0 0
    %3049 = vperm.xlu0 %3048, %v2780
    %v3050 = vpop.permute.xlu0 %3049
    %3051 = vset.pattern.permute.xlu0 0
    %3052 = vperm.xlu0 %3051, %v2781
    %v3053 = vpop.permute.xlu0 %3052
    %3054 = vset.pattern.permute.xlu0 0
    %3055 = vperm.xlu0 %3054, %v2782
    %v3056 = vpop.permute.xlu0 %3055
    %3057 = vset.pattern.permute.xlu0 0
    %3058 = vperm.xlu0 %3057, %v2783
    %v3059 = vpop.permute.xlu0 %3058
    %3060 = vset.pattern.permute.xlu0 0
    %3061 = vperm.xlu0 %3060, %v2784
    %v3062 = vpop.permute.xlu0 %3061
    %3063 = vset.pattern.permute.xlu0 0
    %3064 = vperm.xlu0 %3063, %v2785
    %v3065 = vpop.permute.xlu0 %3064
    %3066 = vset.pattern.permute.xlu0 0
    %3067 = vperm.xlu0 %3066, %v2786
    %v3068 = vpop.permute.xlu0 %3067
    %3069 = vset.pattern.permute.xlu0 0
    %3070 = vperm.xlu0 %3069, %v2787
    %v3071 = vpop.permute.xlu0 %3070
    %3072 = vset.pattern.permute.xlu0 0
    %3073 = vperm.xlu0 %3072, %v2788
    %v3074 = vpop.permute.xlu0 %3073
    %3075 = vset.pattern.permute.xlu0 0
    %3076 = vperm.xlu0 %3075, %v2789
    %v3077 = vpop.permute.xlu0 %3076
    %3078 = vset.pattern.permute.xlu0 0
    %3079 = vperm.xlu0 %3078, %v2790
    %v3080 = vpop.permute.xlu0 %3079
    %3081 = vset.pattern.permute.xlu0 0
    %3082 = vperm.xlu0 %3081, %v2791
    %v3083 = vpop.permute.xlu0 %3082
    %3084 = vset.pattern.permute.xlu0 0
    %3085 = vperm.xlu0 %3084, %v2792
    %v3086 = vpop.permute.xlu0 %3085
    %3087 = vset.pattern.permute.xlu0 0
    %3088 = vperm.xlu0 %3087, %v2793
    %v3089 = vpop.permute.xlu0 %3088
    %3090 = vset.pattern.permute.xlu0 0
    %3091 = vperm.xlu0 %3090, %v2794
    %v3092 = vpop.permute.xlu0 %3091
    %3093 = vset.pattern.permute.xlu0 0
    %3094 = vperm.xlu0 %3093, %v2795
    %v3095 = vpop.permute.xlu0 %3094
    %3096 = vset.pattern.permute.xlu0 0
    %3097 = vperm.xlu0 %3096, %v2796
    %v3098 = vpop.permute.xlu0 %3097
    %3099 = vset.pattern.permute.xlu0 0
    %3100 = vperm.xlu0 %3099, %v2797
    %v3101 = vpop.permute.xlu0 %3100
    %3102 = vset.pattern.permute.xlu0 0
    %3103 = vperm.xlu0 %3102, %v2798
    %v3104 = vpop.permute.xlu0 %3103
    %3105 = vset.pattern.permute.xlu0 0
    %3106 = vperm.xlu0 %3105, %v2799
    %v3107 = vpop.permute.xlu0 %3106
    %3108 = vset.pattern.permute.xlu0 0
    %3109 = vperm.xlu0 %3108, %v2800
    %v3110 = vpop.permute.xlu0 %3109
    %3111 = vset.pattern.permute.xlu0 0
    %3112 = vperm.xlu0 %3111, %v2801
    %v3113 = vpop.permute.xlu0 %3112
    %3114 = vset.pattern.permute.xlu0 0
    %3115 = vperm.xlu0 %3114, %v2802
    %v3116 = vpop.permute.xlu0 %3115
    %3117 = vset.pattern.permute.xlu0 0
    %3118 = vperm.xlu0 %3117, %v2803
    %v3119 = vpop.permute.xlu0 %3118
    %3120 = vset.pattern.permute.xlu0 0
    %3121 = vperm.xlu0 %3120, %v2804
    %v3122 = vpop.permute.xlu0 %3121
    %3123 = vset.pattern.permute.xlu0 0
    %3124 = vperm.xlu0 %3123, %v2805
    %v3125 = vpop.permute.xlu0 %3124
    %3126 = vset.pattern.permute.xlu0 0
    %3127 = vperm.xlu0 %3126, %v2806
    %v3128 = vpop.permute.xlu0 %3127
    %3129 = vset.pattern.permute.xlu0 0
    %3130 = vperm.xlu0 %3129, %v2807
    %v3131 = vpop.permute.xlu0 %3130
    %3132 = vset.pattern.permute.xlu0 0
    %3133 = vperm.xlu0 %3132, %v2808
    %v3134 = vpop.permute.xlu0 %3133
    %3135 = vset.pattern.permute.xlu0 0
    %3136 = vperm.xlu0 %3135, %v2809
    %v3137 = vpop.permute.xlu0 %3136
    %3138 = vset.pattern.permute.xlu0 0
    %3139 = vperm.xlu0 %3138, %v2810
    %v3140 = vpop.permute.xlu0 %3139
    %3141 = vset.pattern.permute.xlu0 0
    %3142 = vperm.xlu0 %3141, %v2811
    %v3143 = vpop.permute.xlu0 %3142
    %3144 = vset.pattern.permute.xlu0 0
    %3145 = vperm.xlu0 %3144, %v2812
    %v3146 = vpop.permute.xlu0 %3145
    %3147 = vset.pattern.permute.xlu0 0
    %3148 = vperm.xlu0 %3147, %v2813
    %v3149 = vpop.permute.xlu0 %3148
    %3150 = vset.pattern.permute.xlu0 0
    %3151 = vperm.xlu0 %3150, %v2814
    %v3152 = vpop.permute.xlu0 %3151
    %3153 = vset.pattern.permute.xlu0 0
    %3154 = vperm.xlu0 %3153, %v2815
    %v3155 = vpop.permute.xlu0 %3154
    %3156 = vset.pattern.permute.xlu0 0
    %3157 = vperm.xlu0 %3156, %v2816
    %v3158 = vpop.permute.xlu0 %3157
    %3159 = vset.pattern.permute.xlu0 0
    %3160 = vperm.xlu0 %3159, %v2817
    %v3161 = vpop.permute.xlu0 %3160
    %3162 = vset.pattern.permute.xlu0 0
    %3163 = vperm.xlu0 %3162, %v2818
    %v3164 = vpop.permute.xlu0 %3163
    %3165 = vset.pattern.permute.xlu0 0
    %3166 = vperm.xlu0 %3165, %v2819
    %v3167 = vpop.permute.xlu0 %3166
    %3168 = vset.pattern.permute.xlu0 0
    %3169 = vperm.xlu0 %3168, %v2820
    %v3170 = vpop.permute.xlu0 %3169
    %3171 = vset.pattern.permute.xlu0 0
    %3172 = vperm.xlu0 %3171, %v2821
    %v3173 = vpop.permute.xlu0 %3172
    %3174 = vset.pattern.permute.xlu0 0
    %3175 = vperm.xlu0 %3174, %v2822
    %v3176 = vpop.permute.xlu0 %3175
    %3177 = vset.pattern.permute.xlu0 0
    %3178 = vperm.xlu0 %3177, %v2823
    %v3179 = vpop.permute.xlu0 %3178
    %3180 = vset.pattern.permute.xlu0 0
    %3181 = vperm.xlu0 %3180, %v2824
    %v3182 = vpop.permute.xlu0 %3181
    %3183 = vset.pattern.permute.xlu0 0
    %3184 = vperm.xlu0 %3183, %v2825
    %v3185 = vpop.permute.xlu0 %3184
    %3186 = vset.pattern.permute.xlu0 0
    %3187 = vperm.xlu0 %3186, %v2826
    %v3188 = vpop.permute.xlu0 %3187
    %3189 = vset.pattern.permute.xlu0 0
    %3190 = vperm.xlu0 %3189, %v2827
    %v3191 = vpop.permute.xlu0 %3190
    %3192 = vset.pattern.permute.xlu0 0
    %3193 = vperm.xlu0 %3192, %v2828
    %v3194 = vpop.permute.xlu0 %3193
    %3195 = vset.pattern.permute.xlu0 0
    %3196 = vperm.xlu0 %3195, %v2829
    %v3197 = vpop.permute.xlu0 %3196
    %3198 = vset.pattern.permute.xlu0 0
    %3199 = vperm.xlu0 %3198, %v2830
    %v3200 = vpop.permute.xlu0 %3199
    %3201 = vset.pattern.permute.xlu0 0
    %3202 = vperm.xlu0 %3201, %v2831
    %v3203 = vpop.permute.xlu0 %3202
    %3204 = vset.pattern.permute.xlu0 0
    %3205 = vperm.xlu0 %3204, %v2832
    %v3206 = vpop.permute.xlu0 %3205
    %3207 = vset.pattern.permute.xlu0 0
    %3208 = vperm.xlu0 %3207, %v2833
    %v3209 = vpop.permute.xlu0 %3208
    %3210 = vset.pattern.permute.xlu0 0
    %3211 = vperm.xlu0 %3210, %v2834
    %v3212 = vpop.permute.xlu0 %3211
    %3213 = vset.pattern.permute.xlu0 0
    %3214 = vperm.xlu0 %3213, %v2835
    %v3215 = vpop.permute.xlu0 %3214
    %3216 = vset.pattern.permute.xlu0 0
    %3217 = vperm.xlu0 %3216, %v2836
    %v3218 = vpop.permute.xlu0 %3217
    %3219 = vset.pattern.permute.xlu0 0
    %3220 = vperm.xlu0 %3219, %v2837
    %v3221 = vpop.permute.xlu0 %3220
    %3222 = vset.pattern.permute.xlu0 0
    %3223 = vperm.xlu0 %3222, %v2838
    %v3224 = vpop.permute.xlu0 %3223
    %3225 = vset.pattern.permute.xlu0 0
    %3226 = vperm.xlu0 %3225, %v2839
    %v3227 = vpop.permute.xlu0 %3226
    %3228 = vset.pattern.permute.xlu0 0
    %3229 = vperm.xlu0 %3228, %v2840
    %v3230 = vpop.permute.xlu0 %3229
    %3231 = vset.pattern.permute.xlu0 0
    %3232 = vperm.xlu0 %3231, %v2841
    %v3233 = vpop.permute.xlu0 %3232
    %3234 = vset.pattern.permute.xlu0 0
    %3235 = vperm.xlu0 %3234, %v2842
    %v3236 = vpop.permute.xlu0 %3235
    %3237 = vset.pattern.permute.xlu0 0
    %3238 = vperm.xlu0 %3237, %v2843
    %v3239 = vpop.permute.xlu0 %3238
    %3240 = vset.pattern.permute.xlu0 0
    %3241 = vperm.xlu0 %3240, %v2844
    %v3242 = vpop.permute.xlu0 %3241
    %3243 = vset.pattern.permute.xlu0 0
    %3244 = vperm.xlu0 %3243, %v2845
    %v3245 = vpop.permute.xlu0 %3244
    %3246 = vset.pattern.permute.xlu0 0
    %3247 = vperm.xlu0 %3246, %v2846
    %v3248 = vpop.permute.xlu0 %3247
    %3249 = vset.pattern.permute.xlu0 0
    %3250 = vperm.xlu0 %3249, %v2847
    %v3251 = vpop.permute.xlu0 %3250
    %3252 = vset.pattern.permute.xlu0 0
    %3253 = vperm.xlu0 %3252, %v2848
    %v3254 = vpop.permute.xlu0 %3253
    %3255 = vset.pattern.permute.xlu0 0
    %3256 = vperm.xlu0 %3255, %v2849
    %v3257 = vpop.permute.xlu0 %3256
    %3258 = vset.pattern.permute.xlu0 0
    %3259 = vperm.xlu0 %3258, %v2850
    %v3260 = vpop.permute.xlu0 %3259
    %3261 = vset.pattern.permute.xlu0 0
    %3262 = vperm.xlu0 %3261, %v2851
    %v3263 = vpop.permute.xlu0 %3262
    %3264 = vset.pattern.permute.xlu0 0
    %3265 = vperm.xlu0 %3264, %v2852
    %v3266 = vpop.permute.xlu0 %3265
    %3267 = vset.pattern.permute.xlu0 0
    %3268 = vperm.xlu0 %3267, %v2853
    %v3269 = vpop.permute.xlu0 %3268
    %3270 = vset.pattern.permute.xlu0 0
    %3271 = vperm.xlu0 %3270, %v2854
    %v3272 = vpop.permute.xlu0 %3271
    %3273 = vset.pattern.permute.xlu0 0
    %3274 = vperm.xlu0 %3273, %v2855
    %v3275 = vpop.permute.xlu0 %3274
    %3276 = vset.pattern.permute.xlu0 0
    %3277 = vperm.xlu0 %3276, %v2856
    %v3278 = vpop.permute.xlu0 %3277
    %3279 = vset.pattern.permute.xlu0 0
    %3280 = vperm.xlu0 %3279, %v2857
    %v3281 = vpop.permute.xlu0 %3280
    %3282 = vset.pattern.permute.xlu0 0
    %3283 = vperm.xlu0 %3282, %v2858
    %v3284 = vpop.permute.xlu0 %3283
    %3285 = vset.pattern.permute.xlu0 0
    %3286 = vperm.xlu0 %3285, %v2859
    %v3287 = vpop.permute.xlu0 %3286
    %3288 = vset.pattern.permute.xlu0 0
    %3289 = vperm.xlu0 %3288, %v2860
    %v3290 = vpop.permute.xlu0 %3289
    %3291 = vset.pattern.permute.xlu0 0
    %3292 = vperm.xlu0 %3291, %v2861
    %v3293 = vpop.permute.xlu0 %3292
    %3294 = vset.pattern.permute.xlu0 0
    %3295 = vperm.xlu0 %3294, %v2862
    %v3296 = vpop.permute.xlu0 %3295
    %3297 = vset.pattern.permute.xlu0 0
    %3298 = vperm.xlu0 %3297, %v2863
    %v3299 = vpop.permute.xlu0 %3298
    %3300 = vset.pattern.permute.xlu0 0
    %3301 = vperm.xlu0 %3300, %v2864
    %v3302 = vpop.permute.xlu0 %3301
    %3303 = vset.pattern.permute.xlu0 0
    %3304 = vperm.xlu0 %3303, %v2865
    %v3305 = vpop.permute.xlu0 %3304
    %3306 = vset.pattern.permute.xlu0 0
    %3307 = vperm.xlu0 %3306, %v2866
    %v3308 = vpop.permute.xlu0 %3307
    %3309 = vset.pattern.permute.xlu0 0
    %3310 = vperm.xlu0 %3309, %v2867
    %v3311 = vpop.permute.xlu0 %3310
    %3312 = vset.pattern.permute.xlu0 0
    %3313 = vperm.xlu0 %3312, %v2868
    %v3314 = vpop.permute.xlu0 %3313
    %3315 = vset.pattern.permute.xlu0 0
    %3316 = vperm.xlu0 %3315, %v2869
    %v3317 = vpop.permute.xlu0 %3316
    %3318 = vset.pattern.permute.xlu0 0
    %3319 = vperm.xlu0 %3318, %v2870
    %v3320 = vpop.permute.xlu0 %3319
    %3321 = vset.pattern.permute.xlu0 0
    %3322 = vperm.xlu0 %3321, %v2871
    %v3323 = vpop.permute.xlu0 %3322
    %3324 = vset.pattern.permute.xlu0 0
    %3325 = vperm.xlu0 %3324, %v2872
    %v3326 = vpop.permute.xlu0 %3325
    %3327 = vset.pattern.permute.xlu0 0
    %3328 = vperm.xlu0 %3327, %v2873
    %v3329 = vpop.permute.xlu0 %3328
    %3330 = vset.pattern.permute.xlu0 0
    %3331 = vperm.xlu0 %3330, %v2874
    %v3332 = vpop.permute.xlu0 %3331
    %3333 = vset.pattern.permute.xlu0 0
    %3334 = vperm.xlu0 %3333, %v2875
    %v3335 = vpop.permute.xlu0 %3334
    %3336 = vset.pattern.permute.xlu0 0
    %3337 = vperm.xlu0 %3336, %v2876
    %v3338 = vpop.permute.xlu0 %3337
    %3339 = vset.pattern.permute.xlu0 0
    %3340 = vperm.xlu0 %3339, %v2877
    %v3341 = vpop.permute.xlu0 %3340
    %3342 = vset.pattern.permute.xlu0 0
    %3343 = vperm.xlu0 %3342, %v2878
    %v3344 = vpop.permute.xlu0 %3343
    %3345 = vset.pattern.permute.xlu0 0
    %3346 = vperm.xlu0 %3345, %v2879
    %v3347 = vpop.permute.xlu0 %3346
    %3348 = vset.pattern.permute.xlu0 0
    %3349 = vperm.xlu0 %3348, %v2880
    %v3350 = vpop.permute.xlu0 %3349
    %3351 = vset.pattern.permute.xlu0 0
    %3352 = vperm.xlu0 %3351, %v2881
    %v3353 = vpop.permute.xlu0 %3352
    %3354 = vset.pattern.permute.xlu0 0
    %3355 = vperm.xlu0 %3354, %v2882
    %v3356 = vpop.permute.xlu0 %3355
    %3357 = vset.pattern.permute.xlu0 0
    %3358 = vperm.xlu0 %3357, %v2883
    %v3359 = vpop.permute.xlu0 %3358
    %3360 = vset.pattern.permute.xlu0 0
    %3361 = vperm.xlu0 %3360, %v2884
    %v3362 = vpop.permute.xlu0 %3361
    %3363 = vset.pattern.permute.xlu0 0
    %3364 = vperm.xlu0 %3363, %v2885
    %v3365 = vpop.permute.xlu0 %3364
    %3366 = vset.pattern.permute.xlu0 0
    %3367 = vperm.xlu0 %3366, %v2886
    %v3368 = vpop.permute.xlu0 %3367
    %3369 = vset.pattern.permute.xlu0 0
    %3370 = vperm.xlu0 %3369, %v2887
    %v3371 = vpop.permute.xlu0 %3370
    %3372 = vset.pattern.permute.xlu0 0
    %3373 = vperm.xlu0 %3372, %v2888
    %v3374 = vpop.permute.xlu0 %3373
    %3375 = vset.pattern.permute.xlu0 0
    %3376 = vperm.xlu0 %3375, %v2889
    %v3377 = vpop.permute.xlu0 %3376
    %3378 = vset.pattern.permute.xlu0 0
    %3379 = vperm.xlu0 %3378, %v2890
    %v3380 = vpop.permute.xlu0 %3379
    %3381 = vset.pattern.permute.xlu0 0
    %3382 = vperm.xlu0 %3381, %v2891
    %v3383 = vpop.permute.xlu0 %3382
    %3384 = vset.pattern.permute.xlu0 0
    %3385 = vperm.xlu0 %3384, %v2892
    %v3386 = vpop.permute.xlu0 %3385
    %3387 = vset.pattern.permute.xlu0 0
    %3388 = vperm.xlu0 %3387, %v2893
    %v3389 = vpop.permute.xlu0 %3388
    %3390 = vset.pattern.permute.xlu0 0
    %3391 = vperm.xlu0 %3390, %v2894
    %v3392 = vpop.permute.xlu0 %3391
    %3393 = vset.pattern.permute.xlu0 0
    %3394 = vperm.xlu0 %3393, %v2895
    %v3395 = vpop.permute.xlu0 %3394
    %3396 = vset.pattern.permute.xlu0 0
    %3397 = vperm.xlu0 %3396, %v2896
    %v3398 = vpop.permute.xlu0 %3397
    %3399 = vset.pattern.permute.xlu0 0
    %3400 = vperm.xlu0 %3399, %v2897
    %v3401 = vpop.permute.xlu0 %3400
    %3402 = vset.pattern.permute.xlu0 0
    %3403 = vperm.xlu0 %3402, %v2898
    %v3404 = vpop.permute.xlu0 %3403
    %3405 = vset.pattern.permute.xlu0 0
    %3406 = vperm.xlu0 %3405, %v2899
    %v3407 = vpop.permute.xlu0 %3406
    %3408 = vset.pattern.permute.xlu0 0
    %3409 = vperm.xlu0 %3408, %v2900
    %v3410 = vpop.permute.xlu0 %3409
    %3411 = vset.pattern.permute.xlu0 0
    %3412 = vperm.xlu0 %3411, %v2901
    %v3413 = vpop.permute.xlu0 %3412
    %v3414 = vlaneseq
    %v3415 = vand.u32 %v3414, 127
    %v3416 = vperm.slane %v3032, %v3415
    %v3417 = vadd.s32 %v3415, 4294967288
    %v3418 = vperm.slane %v3035, %v3417
    %vm3419 = vcmask 130112
    %v3420 = vsel %vm3419, %v3418, %v3416
    %v3421 = vadd.s32 %v3415, 4294967280
    %v3422 = vperm.slane %v3038, %v3421
    %vm3423 = vcmask 195712
    %v3424 = vsel %vm3423, %v3422, %v3420
    %v3425 = vadd.s32 %v3415, 4294967272
    %v3426 = vperm.slane %v3041, %v3425
    %vm3427 = vcmask 261312
    %v3428 = vsel %vm3427, %v3426, %v3424
    %v3429 = vadd.s32 %v3415, 4294967264
    %v3430 = vperm.slane %v3044, %v3429
    %vm3431 = vcmask 326912
    %v3432 = vsel %vm3431, %v3430, %v3428
    %v3433 = vadd.s32 %v3415, 4294967256
    %v3434 = vperm.slane %v3047, %v3433
    %vm3435 = vcmask 392512
    %v3436 = vsel %vm3435, %v3434, %v3432
    %v3437 = vadd.s32 %v3415, 4294967248
    %v3438 = vperm.slane %v3050, %v3437
    %vm3439 = vcmask 458112
    %v3440 = vsel %vm3439, %v3438, %v3436
    %v3441 = vadd.s32 %v3415, 4294967240
    %v3442 = vperm.slane %v3053, %v3441
    %vm3443 = vcmask 523712
    %v3444 = vsel %vm3443, %v3442, %v3440
    %v3445 = vadd.s32 %v3415, 4294967232
    %v3446 = vperm.slane %v3056, %v3445
    %vm3447 = vcmask 589312
    %v3448 = vsel %vm3447, %v3446, %v3444
    %v3449 = vadd.s32 %v3415, 4294967224
    %v3450 = vperm.slane %v3059, %v3449
    %vm3451 = vcmask 654912
    %v3452 = vsel %vm3451, %v3450, %v3448
    %v3453 = vadd.s32 %v3415, 4294967216
    %v3454 = vperm.slane %v3062, %v3453
    %vm3455 = vcmask 720512
    %v3456 = vsel %vm3455, %v3454, %v3452
    %v3457 = vadd.s32 %v3415, 4294967208
    %v3458 = vperm.slane %v3065, %v3457
    %vm3459 = vcmask 786112
    %v3460 = vsel %vm3459, %v3458, %v3456
    %v3461 = vadd.s32 %v3415, 4294967200
    %v3462 = vperm.slane %v3068, %v3461
    %vm3463 = vcmask 851712
    %v3464 = vsel %vm3463, %v3462, %v3460
    %v3465 = vadd.s32 %v3415, 4294967192
    %v3466 = vperm.slane %v3071, %v3465
    %vm3467 = vcmask 917312
    %v3468 = vsel %vm3467, %v3466, %v3464
    %v3469 = vadd.s32 %v3415, 4294967184
    %v3470 = vperm.slane %v3074, %v3469
    %vm3471 = vcmask 982912
    %v3472 = vsel %vm3471, %v3470, %v3468
    %v3473 = vadd.s32 %v3415, 4294967176
    %v3474 = vperm.slane %v3077, %v3473
    %vm3475 = vcmask 1048512
    %v3476 = vsel %vm3475, %v3474, %v3472
    %v3477 = vperm.slane %v3080, %v3415
    %v3478 = vperm.slane %v3083, %v3417
    %v3479 = vsel %vm3419, %v3478, %v3477
    %v3480 = vperm.slane %v3086, %v3421
    %v3481 = vsel %vm3423, %v3480, %v3479
    %v3482 = vperm.slane %v3089, %v3425
    %v3483 = vsel %vm3427, %v3482, %v3481
    %v3484 = vperm.slane %v3092, %v3429
    %v3485 = vsel %vm3431, %v3484, %v3483
    %v3486 = vperm.slane %v3095, %v3433
    %v3487 = vsel %vm3435, %v3486, %v3485
    %v3488 = vperm.slane %v3098, %v3437
    %v3489 = vsel %vm3439, %v3488, %v3487
    %v3490 = vperm.slane %v3101, %v3441
    %v3491 = vsel %vm3443, %v3490, %v3489
    %v3492 = vperm.slane %v3104, %v3445
    %v3493 = vsel %vm3447, %v3492, %v3491
    %v3494 = vperm.slane %v3107, %v3449
    %v3495 = vsel %vm3451, %v3494, %v3493
    %v3496 = vperm.slane %v3110, %v3453
    %v3497 = vsel %vm3455, %v3496, %v3495
    %v3498 = vperm.slane %v3113, %v3457
    %v3499 = vsel %vm3459, %v3498, %v3497
    %v3500 = vperm.slane %v3116, %v3461
    %v3501 = vsel %vm3463, %v3500, %v3499
    %v3502 = vperm.slane %v3119, %v3465
    %v3503 = vsel %vm3467, %v3502, %v3501
    %v3504 = vperm.slane %v3122, %v3469
    %v3505 = vsel %vm3471, %v3504, %v3503
    %v3506 = vperm.slane %v3125, %v3473
    %v3507 = vsel %vm3475, %v3506, %v3505
    %v3508 = vperm.slane %v3128, %v3415
    %v3509 = vperm.slane %v3131, %v3417
    %v3510 = vsel %vm3419, %v3509, %v3508
    %v3511 = vperm.slane %v3134, %v3421
    %v3512 = vsel %vm3423, %v3511, %v3510
    %v3513 = vperm.slane %v3137, %v3425
    %v3514 = vsel %vm3427, %v3513, %v3512
    %v3515 = vperm.slane %v3140, %v3429
    %v3516 = vsel %vm3431, %v3515, %v3514
    %v3517 = vperm.slane %v3143, %v3433
    %v3518 = vsel %vm3435, %v3517, %v3516
    %v3519 = vperm.slane %v3146, %v3437
    %v3520 = vsel %vm3439, %v3519, %v3518
    %v3521 = vperm.slane %v3149, %v3441
    %v3522 = vsel %vm3443, %v3521, %v3520
    %v3523 = vperm.slane %v3152, %v3445
    %v3524 = vsel %vm3447, %v3523, %v3522
    %v3525 = vperm.slane %v3155, %v3449
    %v3526 = vsel %vm3451, %v3525, %v3524
    %v3527 = vperm.slane %v3158, %v3453
    %v3528 = vsel %vm3455, %v3527, %v3526
    %v3529 = vperm.slane %v3161, %v3457
    %v3530 = vsel %vm3459, %v3529, %v3528
    %v3531 = vperm.slane %v3164, %v3461
    %v3532 = vsel %vm3463, %v3531, %v3530
    %v3533 = vperm.slane %v3167, %v3465
    %v3534 = vsel %vm3467, %v3533, %v3532
    %v3535 = vperm.slane %v3170, %v3469
    %v3536 = vsel %vm3471, %v3535, %v3534
    %v3537 = vperm.slane %v3173, %v3473
    %v3538 = vsel %vm3475, %v3537, %v3536
    %v3539 = vperm.slane %v3176, %v3415
    %v3540 = vperm.slane %v3179, %v3417
    %v3541 = vsel %vm3419, %v3540, %v3539
    %v3542 = vperm.slane %v3182, %v3421
    %v3543 = vsel %vm3423, %v3542, %v3541
    %v3544 = vperm.slane %v3185, %v3425
    %v3545 = vsel %vm3427, %v3544, %v3543
    %v3546 = vperm.slane %v3188, %v3429
    %v3547 = vsel %vm3431, %v3546, %v3545
    %v3548 = vperm.slane %v3191, %v3433
    %v3549 = vsel %vm3435, %v3548, %v3547
    %v3550 = vperm.slane %v3194, %v3437
    %v3551 = vsel %vm3439, %v3550, %v3549
    %v3552 = vperm.slane %v3197, %v3441
    %v3553 = vsel %vm3443, %v3552, %v3551
    %v3554 = vperm.slane %v3200, %v3445
    %v3555 = vsel %vm3447, %v3554, %v3553
    %v3556 = vperm.slane %v3203, %v3449
    %v3557 = vsel %vm3451, %v3556, %v3555
    %v3558 = vperm.slane %v3206, %v3453
    %v3559 = vsel %vm3455, %v3558, %v3557
    %v3560 = vperm.slane %v3209, %v3457
    %v3561 = vsel %vm3459, %v3560, %v3559
    %v3562 = vperm.slane %v3212, %v3461
    %v3563 = vsel %vm3463, %v3562, %v3561
    %v3564 = vperm.slane %v3215, %v3465
    %v3565 = vsel %vm3467, %v3564, %v3563
    %v3566 = vperm.slane %v3218, %v3469
    %v3567 = vsel %vm3471, %v3566, %v3565
    %v3568 = vperm.slane %v3221, %v3473
    %v3569 = vsel %vm3475, %v3568, %v3567
    %v3570 = vperm.slane %v3224, %v3415
    %v3571 = vperm.slane %v3227, %v3417
    %v3572 = vsel %vm3419, %v3571, %v3570
    %v3573 = vperm.slane %v3230, %v3421
    %v3574 = vsel %vm3423, %v3573, %v3572
    %v3575 = vperm.slane %v3233, %v3425
    %v3576 = vsel %vm3427, %v3575, %v3574
    %v3577 = vperm.slane %v3236, %v3429
    %v3578 = vsel %vm3431, %v3577, %v3576
    %v3579 = vperm.slane %v3239, %v3433
    %v3580 = vsel %vm3435, %v3579, %v3578
    %v3581 = vperm.slane %v3242, %v3437
    %v3582 = vsel %vm3439, %v3581, %v3580
    %v3583 = vperm.slane %v3245, %v3441
    %v3584 = vsel %vm3443, %v3583, %v3582
    %v3585 = vperm.slane %v3248, %v3445
    %v3586 = vsel %vm3447, %v3585, %v3584
    %v3587 = vperm.slane %v3251, %v3449
    %v3588 = vsel %vm3451, %v3587, %v3586
    %v3589 = vperm.slane %v3254, %v3453
    %v3590 = vsel %vm3455, %v3589, %v3588
    %v3591 = vperm.slane %v3257, %v3457
    %v3592 = vsel %vm3459, %v3591, %v3590
    %v3593 = vperm.slane %v3260, %v3461
    %v3594 = vsel %vm3463, %v3593, %v3592
    %v3595 = vperm.slane %v3263, %v3465
    %v3596 = vsel %vm3467, %v3595, %v3594
    %v3597 = vperm.slane %v3266, %v3469
    %v3598 = vsel %vm3471, %v3597, %v3596
    %v3599 = vperm.slane %v3269, %v3473
    %v3600 = vsel %vm3475, %v3599, %v3598
    %v3601 = vperm.slane %v3272, %v3415
    %v3602 = vperm.slane %v3275, %v3417
    %v3603 = vsel %vm3419, %v3602, %v3601
    %v3604 = vperm.slane %v3278, %v3421
    %v3605 = vsel %vm3423, %v3604, %v3603
    %v3606 = vperm.slane %v3281, %v3425
    %v3607 = vsel %vm3427, %v3606, %v3605
    %v3608 = vperm.slane %v3284, %v3429
    %v3609 = vsel %vm3431, %v3608, %v3607
    %v3610 = vperm.slane %v3287, %v3433
    %v3611 = vsel %vm3435, %v3610, %v3609
    %v3612 = vperm.slane %v3290, %v3437
    %v3613 = vsel %vm3439, %v3612, %v3611
    %v3614 = vperm.slane %v3293, %v3441
    %v3615 = vsel %vm3443, %v3614, %v3613
    %v3616 = vperm.slane %v3296, %v3445
    %v3617 = vsel %vm3447, %v3616, %v3615
    %v3618 = vperm.slane %v3299, %v3449
    %v3619 = vsel %vm3451, %v3618, %v3617
    %v3620 = vperm.slane %v3302, %v3453
    %v3621 = vsel %vm3455, %v3620, %v3619
    %v3622 = vperm.slane %v3305, %v3457
    %v3623 = vsel %vm3459, %v3622, %v3621
    %v3624 = vperm.slane %v3308, %v3461
    %v3625 = vsel %vm3463, %v3624, %v3623
    %v3626 = vperm.slane %v3311, %v3465
    %v3627 = vsel %vm3467, %v3626, %v3625
    %v3628 = vperm.slane %v3314, %v3469
    %v3629 = vsel %vm3471, %v3628, %v3627
    %v3630 = vperm.slane %v3317, %v3473
    %v3631 = vsel %vm3475, %v3630, %v3629
    %v3632 = vperm.slane %v3320, %v3415
    %v3633 = vperm.slane %v3323, %v3417
    %v3634 = vsel %vm3419, %v3633, %v3632
    %v3635 = vperm.slane %v3326, %v3421
    %v3636 = vsel %vm3423, %v3635, %v3634
    %v3637 = vperm.slane %v3329, %v3425
    %v3638 = vsel %vm3427, %v3637, %v3636
    %v3639 = vperm.slane %v3332, %v3429
    %v3640 = vsel %vm3431, %v3639, %v3638
    %v3641 = vperm.slane %v3335, %v3433
    %v3642 = vsel %vm3435, %v3641, %v3640
    %v3643 = vperm.slane %v3338, %v3437
    %v3644 = vsel %vm3439, %v3643, %v3642
    %v3645 = vperm.slane %v3341, %v3441
    %v3646 = vsel %vm3443, %v3645, %v3644
    %v3647 = vperm.slane %v3344, %v3445
    %v3648 = vsel %vm3447, %v3647, %v3646
    %v3649 = vperm.slane %v3347, %v3449
    %v3650 = vsel %vm3451, %v3649, %v3648
    %v3651 = vperm.slane %v3350, %v3453
    %v3652 = vsel %vm3455, %v3651, %v3650
    %v3653 = vperm.slane %v3353, %v3457
    %v3654 = vsel %vm3459, %v3653, %v3652
    %v3655 = vperm.slane %v3356, %v3461
    %v3656 = vsel %vm3463, %v3655, %v3654
    %v3657 = vperm.slane %v3359, %v3465
    %v3658 = vsel %vm3467, %v3657, %v3656
    %v3659 = vperm.slane %v3362, %v3469
    %v3660 = vsel %vm3471, %v3659, %v3658
    %v3661 = vperm.slane %v3365, %v3473
    %v3662 = vsel %vm3475, %v3661, %v3660
    %v3663 = vperm.slane %v3368, %v3415
    %v3664 = vperm.slane %v3371, %v3417
    %v3665 = vsel %vm3419, %v3664, %v3663
    %v3666 = vperm.slane %v3374, %v3421
    %v3667 = vsel %vm3423, %v3666, %v3665
    %v3668 = vperm.slane %v3377, %v3425
    %v3669 = vsel %vm3427, %v3668, %v3667
    %v3670 = vperm.slane %v3380, %v3429
    %v3671 = vsel %vm3431, %v3670, %v3669
    %v3672 = vperm.slane %v3383, %v3433
    %v3673 = vsel %vm3435, %v3672, %v3671
    %v3674 = vperm.slane %v3386, %v3437
    %v3675 = vsel %vm3439, %v3674, %v3673
    %v3676 = vperm.slane %v3389, %v3441
    %v3677 = vsel %vm3443, %v3676, %v3675
    %v3678 = vperm.slane %v3392, %v3445
    %v3679 = vsel %vm3447, %v3678, %v3677
    %v3680 = vperm.slane %v3395, %v3449
    %v3681 = vsel %vm3451, %v3680, %v3679
    %v3682 = vperm.slane %v3398, %v3453
    %v3683 = vsel %vm3455, %v3682, %v3681
    %v3684 = vperm.slane %v3401, %v3457
    %v3685 = vsel %vm3459, %v3684, %v3683
    %v3686 = vperm.slane %v3404, %v3461
    %v3687 = vsel %vm3463, %v3686, %v3685
    %v3688 = vperm.slane %v3407, %v3465
    %v3689 = vsel %vm3467, %v3688, %v3687
    %v3690 = vperm.slane %v3410, %v3469
    %v3691 = vsel %vm3471, %v3690, %v3689
    %v3692 = vperm.slane %v3413, %v3473
    %v3693 = vsel %vm3475, %v3692, %v3691
    %vm3694 = vcmask 1041409
    %v3695 = vsel %vm3694, %v3507, %v3476
    %vm3696 = vcmask 1042434
    %v3697 = vsel %vm3696, %v3538, %v3695
    %vm3698 = vcmask 1043459
    %v3699 = vsel %vm3698, %v3569, %v3697
    %vm3700 = vcmask 1044484
    %v3701 = vsel %vm3700, %v3600, %v3699
    %vm3702 = vcmask 1045509
    %v3703 = vsel %vm3702, %v3631, %v3701
    %vm3704 = vcmask 1046534
    %v3705 = vsel %vm3704, %v3662, %v3703
    %vm3706 = vcmask 1047559
    %v3707 = vsel %vm3706, %v3693, %v3705
    %3709 = vst [vmem:[#allocation3] sm:$0xff] %v3707
    // Predicated region
    $region38: #{tpu_custom_call.1} parent=1 // pred_check
      _
    $region39: #{tpu_custom_call.1} parent=1 // pred_check_branch
      %3711 = sbr.rel (0) target = $region41
    $region40: #{tpu_custom_call.1} parent=1 // pred_region
      %3713 = vsyncadd [#allocation4], 0
      %s3715 = sshll.u32 [#allocation3], 4
      %s3716 = int_to_ptr.vmem [resolvable:$true] %s3715
      %s3717 = sshll.u32 %s9, 4
      %s3718 = int_to_ptr.hbm [resolvable:$true] %s3717
      %3720 = dma.vmem_to_hbm [thread:$0]  %s3716, 128, %s3718, [#allocation4]
    $region41: #{tpu_custom_call.1} parent=1 // pred_fallthru
      _
    // Predicated region
    $region42: #{tpu_custom_call.1} parent=1 // pred_check
      _
    $region43: #{tpu_custom_call.1} parent=1 // pred_check_branch
      %3722 = sbr.rel (0) target = $region45
    $region44: #{tpu_custom_call.1} parent=1 // pred_region
      %3724 = dma.done [#allocation4], 128
    $region45: #{tpu_custom_call.1} parent=1 // pred_fallthru
      _
    %3725 = vsyncpa [#allocation4], 1

</llo_original>
